<compile_context>
chip_gen: v7x
topology: tpu7x:2x2x1
jax: 0.10.0
libtpu: 0.0.40
codegen_flags: <defaults>
</compile_context>

<pallas_src>
import math
import functools

import jax
import jax.numpy as jnp
from jax.experimental import pallas as pl
from jax.experimental.pallas import tpu as pltpu

# ---------------- problem sizes (consistent with the module: n = 179) -------------
BATCH = 2
SEQ = 179            # spec_attn_wghts is hard-coded to 179x179 in the module
EMB = 32
NUM_HEADS = 4
HEAD_DIM = EMB // NUM_HEADS
SCALE = EMB ** (-0.5)            # module scales by emb_size^-0.5, not head_dim^-0.5
LN_EPS = 1e-5


def attention_kernel(x_ref, m_ref, wvb_ref, gamma_ref, beta_ref, o_ref, spec_ref):
    # x_ref:      (1, S, E) f32   activations for this batch element
    # m_ref:      (H, E, E) bf16  per-head SCALE * Wq_h^T @ Wk_h (score fold)
    # wvb_ref:    (H, E, E) bf16  per-head Wv_h^T zero-placed into its output columns
    # gamma/beta: (1, E)    f32   LayerNorm affine params
    # o_ref:      (1, S, E) f32   output
    # spec_ref:   (S, S)    f32   VMEM scratch for the spectral weights

    nt = (((1,), (1,)), ((), ()))     # contract last dim of both operands (A @ B^T)

    # Spectral weights |j - i| / S, built directly in VMEM (no HBM input).
    j_idx = jax.lax.broadcasted_iota(jnp.int32, (SEQ, SEQ), 1)
    i_idx = jax.lax.broadcasted_iota(jnp.int32, (SEQ, SEQ), 0)
    spec_ref[...] = jnp.abs(j_idx - i_idx).astype(jnp.float32) * (1.0 / SEQ)

    x_bf = x_ref[0].astype(jnp.bfloat16)                      # (S, E) bf16 MXU operand

    out = None
    for h in range(NUM_HEADS):                                # static unroll, H is tiny
        # Scores: s = (x @ M_h) @ x^T   (SCALE already folded into M_h; K=32 matmuls).
        t = jnp.dot(x_bf, m_ref[h], preferred_element_type=jnp.float32)       # (S, E)
        s = jax.lax.dot_general(t.astype(jnp.bfloat16), x_bf, nt,
                                preferred_element_type=jnp.float32)           # (S, S)
        s = s * spec_ref[...]

        # Softmax along the key axis.  Normalization is deferred to the small
        # (S, E) z tile below (exact division, no approx reciprocal).
        s = s - jnp.max(s, axis=-1, keepdims=True)
        p = jnp.exp(s)                                                        # (S, S)
        denom = jnp.sum(p, axis=-1, keepdims=True)                            # (S, 1)

        # attn @ V  ==  (p @ x) @ Wv_blk_h ; head output lands in its own columns,
        # so accumulation is a full-width add (no lane-offset masked stores).
        z = jnp.dot(p.astype(jnp.bfloat16), x_bf,
                    preferred_element_type=jnp.float32)                       # (S, E)
        z = z / denom                                                         # exact
        contrib = jnp.dot(z.astype(jnp.bfloat16), wvb_ref[h],
                          preferred_element_type=jnp.float32)                 # (S, E)
        out = contrib if out is None else out + contrib

    # LayerNorm over the embedding dim (biased variance, eps=1e-5, affine).
    mean = jnp.mean(out, axis=-1, keepdims=True)
    centered = out - mean
    var = jnp.mean(centered * centered, axis=-1, keepdims=True)
    normed = centered * jax.lax.rsqrt(var + LN_EPS)
    o_ref[0] = normed * gamma_ref[...] + beta_ref[...]


@functools.partial(jax.jit, static_argnames=())
def attention_pallas(x, wq, wk, wv, gamma, beta):
    B, S, E = x.shape
    H, Dh = NUM_HEADS, HEAD_DIM
    P = jax.lax.Precision.HIGHEST

    # PyTorch Linear weights are (out_features, in_features); split the out axis
    # into heads: rows h*Dh:(h+1)*Dh belong to head h.
    wq3 = wq.reshape(H, Dh, E)
    wk3 = wk.reshape(H, Dh, E)
    wv3 = wv.reshape(H, Dh, E)

    # Per-head folded score matrix: M_h = SCALE * Wq_h^T @ Wk_h   (E, E).
    m = SCALE * jnp.einsum('hda,hdb->hab', wq3, wk3, precision=P)

    # Per-head block-placed value matrix: Wv_blk_h[:, h*Dh:(h+1)*Dh] = Wv_h^T.
    wvb = jnp.zeros((H, E, E), jnp.float32)
    for h in range(H):
        wvb = wvb.at[h, :, h * Dh:(h + 1) * Dh].set(wv3[h].T)

    m = m.astype(jnp.bfloat16)        # bf16 MXU operands (f32 accumulation in-kernel)
    wvb = wvb.astype(jnp.bfloat16)

    full3 = lambda b: (0, 0, 0)
    return pl.pallas_call(
        attention_kernel,
        out_shape=jax.ShapeDtypeStruct((B, S, E), jnp.float32),
        grid_spec=pltpu.PrefetchScalarGridSpec(
            num_scalar_prefetch=0,
            grid=(B,),
            in_specs=[
                pl.BlockSpec((1, S, E), lambda b: (b, 0, 0)),   # x
                pl.BlockSpec((H, E, E), full3),                 # M_h stack
                pl.BlockSpec((H, E, E), full3),                 # Wv block stack
                pl.BlockSpec((1, E), lambda b: (0, 0)),         # LN gamma
                pl.BlockSpec((1, E), lambda b: (0, 0)),         # LN beta
            ],
            out_specs=pl.BlockSpec((1, S, E), lambda b: (b, 0, 0)),
            scratch_shapes=[
                pltpu.VMEM((S, S), jnp.float32),                # spectral weights
            ],
        ),
        compiler_params=pltpu.CompilerParams(
            dimension_semantics=("parallel",)),
    )(x, m, wvb, gamma, beta)


def attention_reference(x, wq, wk, wv, spec, gamma, beta):
    """Pure-JAX reference mirroring the PyTorch forward exactly (full f32 precision)."""
    P = jax.lax.Precision.HIGHEST
    B, S, E = x.shape
    H, Dh = NUM_HEADS, HEAD_DIM
    q = jnp.einsum('bse,fe->bsf', x, wq, precision=P).reshape(B, S, H, Dh).transpose(0, 2, 1, 3)
    k = jnp.einsum('bse,fe->bsf', x, wk, precision=P).reshape(B, S, H, Dh).transpose(0, 2, 1, 3)
    v = jnp.einsum('bse,fe->bsf', x, wv, precision=P).reshape(B, S, H, Dh).transpose(0, 2, 1, 3)
    attn = jnp.einsum('bhsd,bhtd->bhst', q, k, precision=P) * SCALE
    attn = attn * spec
    attn = jax.nn.softmax(attn, axis=-1)
    out = jnp.einsum('bhst,bhtd->bhsd', attn, v, precision=P)
    out = out.transpose(0, 2, 1, 3).reshape(B, S, E)
    mean = jnp.mean(out, axis=-1, keepdims=True)
    var = jnp.mean((out - mean) ** 2, axis=-1, keepdims=True)
    return (out - mean) / jnp.sqrt(var + LN_EPS) * gamma.reshape(E) + beta.reshape(E)


if __name__ == "__main__":
    key = jax.random.PRNGKey(0)
    kx, kq, kk, kv = jax.random.split(key, 4)

    x = jax.random.normal(kx, (BATCH, SEQ, EMB), dtype=jnp.float32)

    # Deterministic parameter init (PyTorch Linear-style uniform bound 1/sqrt(in)).
    bound = 1.0 / math.sqrt(EMB)
    wq = jax.random.uniform(kq, (EMB, EMB), jnp.float32, -bound, bound)
    wk = jax.random.uniform(kk, (EMB, EMB), jnp.float32, -bound, bound)
    wv = jax.random.uniform(kv, (EMB, EMB), jnp.float32, -bound, bound)

    # LayerNorm affine params (PyTorch default init: ones / zeros), kept 2D for VMEM.
    gamma = jnp.ones((1, EMB), dtype=jnp.float32)
    beta = jnp.zeros((1, EMB), dtype=jnp.float32)

    out = attention_pallas(x, wq, wk, wv, gamma, beta)
    out = jax.block_until_ready(out)
    assert out.shape == (BATCH, SEQ, EMB)

    # Reference needs the spectral weights explicitly (kernel builds them on-chip).
    idx = jnp.arange(SEQ, dtype=jnp.float32)
    spec = jnp.abs(idx[None, :] - idx[:, None]) / SEQ              # (S, S)
    ref = attention_reference(x, wq, wk, wv, spec, gamma, beta)

    # Validation budget: bf16 MXU operands give ~0.5-1% relative error on the
    # attention output, which LayerNorm maps to ~1e-2-scale absolute error on the
    # (unit-variance) output.  Structural bugs produce O(1) errors, so these bounds
    # still discriminate sharply.
    diff = out - ref
    rel_l2 = float(jnp.linalg.norm(diff) / jnp.linalg.norm(ref))
    max_abs = float(jnp.max(jnp.abs(diff)))
    assert rel_l2 < 3e-2, f"relative L2 error too large: {rel_l2}"
    assert max_abs < 1e-1, f"max abs error too large: {max_abs}"

    print("KERNEL_OK")
</pallas_src>

<mosaic_0001>
module attributes {stable_mosaic.version = 11 : i64} {
  func.func @attention_kernel(%arg0: i32, %arg1: memref<1x179x32xf32, #tpu.memory_space<vmem>>, %arg2: memref<4x32x32xbf16, #tpu.memory_space<vmem>>, %arg3: memref<4x32x32xbf16, #tpu.memory_space<vmem>>, %arg4: memref<1x32xf32, #tpu.memory_space<vmem>>, %arg5: memref<1x32xf32, #tpu.memory_space<vmem>>, %arg6: memref<1x179x32xf32, #tpu.memory_space<vmem>>, %arg7: memref<179x179xf32, #tpu.memory_space<vmem>>) attributes {dimension_semantics = [#tpu.dimension_semantics<parallel>], iteration_bounds = array<i64: 2>, scalar_prefetch = 0 : i64, scratch_operands = 1 : i64, tpu.core_type = #tpu.core_type<tc>, window_params = [{transform_indices = @transform_0, window_bounds = array<i64: 1, 179, 32>}, {pipeline_mode = #tpu.pipeline_mode<synchronous>, transform_indices = @transform_1, window_bounds = array<i64: 4, 32, 32>}, {pipeline_mode = #tpu.pipeline_mode<synchronous>, transform_indices = @transform_2, window_bounds = array<i64: 4, 32, 32>}, {pipeline_mode = #tpu.pipeline_mode<synchronous>, transform_indices = @transform_3, window_bounds = array<i64: 1, 32>}, {pipeline_mode = #tpu.pipeline_mode<synchronous>, transform_indices = @transform_4, window_bounds = array<i64: 1, 32>}, {transform_indices = @transform_5, window_bounds = array<i64: 1, 179, 32>}]} {
    %0 = tpu.iota {dimensions = array<i32: 1>} : vector<179x179xi32>
    %1 = tpu.iota {dimensions = array<i32: 0>} : vector<179x179xi32>
    %2 = arith.subi %0, %1 : vector<179x179xi32>
    %3 = math.absi %2 : vector<179x179xi32>
    %4 = arith.sitofp %3 : vector<179x179xi32> to vector<179x179xf32>
    %cst = arith.constant 0.00558659201 : f32
    %5 = vector.broadcast %cst : f32 to vector<179x179xf32>
    %6 = arith.mulf %4, %5 : vector<179x179xf32>
    %c0 = arith.constant 0 : index
    %c0_0 = arith.constant 0 : index
    %7 = vector.load %arg7[%c0, %c0_0] : memref<179x179xf32, #tpu.memory_space<vmem>>, vector<179x179xf32>
    tpu.vector_store %arg7[%c0, %c0_0], %6 {strides = array<i32>} : memref<179x179xf32, #tpu.memory_space<vmem>>, vector<179x179xf32>,
    %c0_1 = arith.constant 0 : index
    %c0_2 = arith.constant 0 : index
    %c0_3 = arith.constant 0 : index
    %8 = vector.load %arg1[%c0_1, %c0_2, %c0_3] : memref<1x179x32xf32, #tpu.memory_space<vmem>>, vector<1x179x32xf32>
    %9 = vector.shape_cast %8 : vector<1x179x32xf32> to vector<179x32xf32>
    %10 = arith.truncf %9 : vector<179x32xf32> to vector<179x32xbf16>
    %c0_4 = arith.constant 0 : index
    %c0_5 = arith.constant 0 : index
    %c0_6 = arith.constant 0 : index
    %11 = vector.load %arg2[%c0_4, %c0_5, %c0_6] : memref<4x32x32xbf16, #tpu.memory_space<vmem>>, vector<1x32x32xbf16>
    %12 = vector.shape_cast %11 : vector<1x32x32xbf16> to vector<32x32xbf16>
    %cst_7 = arith.constant dense<0.000000e+00> : vector<179x32xf32>
    %13 = tpu.matmul %10, %12, %cst_7 {dimension_numbers = #tpu.dot_dimension_numbers<[1], [0], [0], [1], [0, 0, 1, 1], [], []>} : vector<179x32xbf16>, vector<32x32xbf16>, vector<179x32xf32> -> vector<179x32xf32>
    %14 = arith.truncf %13 : vector<179x32xf32> to vector<179x32xbf16>
    %cst_8 = arith.constant dense<0.000000e+00> : vector<179x179xf32>
    %15 = tpu.matmul %14, %10, %cst_8 {dimension_numbers = #tpu.dot_dimension_numbers<[1], [1], [0], [0], [0, 0, 1, 0], [], []>} : vector<179x32xbf16>, vector<179x32xbf16>, vector<179x179xf32> -> vector<179x179xf32>
    %c0_9 = arith.constant 0 : index
    %c0_10 = arith.constant 0 : index
    %16 = vector.load %arg7[%c0_9, %c0_10] : memref<179x179xf32, #tpu.memory_space<vmem>>, vector<179x179xf32>
    %17 = arith.mulf %15, %16 : vector<179x179xf32>
    %cst_11 = arith.constant dense<0xFF800000> : vector<179xf32>
    %18 = vector.multi_reduction <maximumf>, %17, %cst_11 [1] : vector<179x179xf32> to vector<179xf32>
    %19 = vector.shape_cast %18 : vector<179xf32> to vector<179x1xf32>
    %20 = vector.broadcast %19 : vector<179x1xf32> to vector<179x179xf32>
    %21 = arith.subf %17, %20 : vector<179x179xf32>
    %22 = math.exp %21 : vector<179x179xf32>
    %cst_12 = arith.constant dense<0.000000e+00> : vector<179xf32>
    %23 = vector.multi_reduction <add>, %22, %cst_12 [1] : vector<179x179xf32> to vector<179xf32>
    %24 = vector.shape_cast %23 : vector<179xf32> to vector<179x1xf32>
    %25 = arith.truncf %22 : vector<179x179xf32> to vector<179x179xbf16>
    %cst_13 = arith.constant dense<0.000000e+00> : vector<179x32xf32>
    %26 = tpu.matmul %25, %10, %cst_13 {dimension_numbers = #tpu.dot_dimension_numbers<[1], [0], [0], [1], [0, 0, 1, 1], [], []>} : vector<179x179xbf16>, vector<179x32xbf16>, vector<179x32xf32> -> vector<179x32xf32>
    %27 = vector.broadcast %24 : vector<179x1xf32> to vector<179x32xf32>
    %28 = arith.divf %26, %27 : vector<179x32xf32>
    %29 = arith.truncf %28 : vector<179x32xf32> to vector<179x32xbf16>
    %c0_14 = arith.constant 0 : index
    %c0_15 = arith.constant 0 : index
    %c0_16 = arith.constant 0 : index
    %30 = vector.load %arg3[%c0_14, %c0_15, %c0_16] : memref<4x32x32xbf16, #tpu.memory_space<vmem>>, vector<1x32x32xbf16>
    %31 = vector.shape_cast %30 : vector<1x32x32xbf16> to vector<32x32xbf16>
    %cst_17 = arith.constant dense<0.000000e+00> : vector<179x32xf32>
    %32 = tpu.matmul %29, %31, %cst_17 {dimension_numbers = #tpu.dot_dimension_numbers<[1], [0], [0], [1], [0, 0, 1, 1], [], []>} : vector<179x32xbf16>, vector<32x32xbf16>, vector<179x32xf32> -> vector<179x32xf32>
    %c1 = arith.constant 1 : index
    %c0_18 = arith.constant 0 : index
    %c0_19 = arith.constant 0 : index
    %33 = vector.load %arg2[%c1, %c0_18, %c0_19] : memref<4x32x32xbf16, #tpu.memory_space<vmem>>, vector<1x32x32xbf16>
    %34 = vector.shape_cast %33 : vector<1x32x32xbf16> to vector<32x32xbf16>
    %cst_20 = arith.constant dense<0.000000e+00> : vector<179x32xf32>
    %35 = tpu.matmul %10, %34, %cst_20 {dimension_numbers = #tpu.dot_dimension_numbers<[1], [0], [0], [1], [0, 0, 1, 1], [], []>} : vector<179x32xbf16>, vector<32x32xbf16>, vector<179x32xf32> -> vector<179x32xf32>
    %36 = arith.truncf %35 : vector<179x32xf32> to vector<179x32xbf16>
    %cst_21 = arith.constant dense<0.000000e+00> : vector<179x179xf32>
    %37 = tpu.matmul %36, %10, %cst_21 {dimension_numbers = #tpu.dot_dimension_numbers<[1], [1], [0], [0], [0, 0, 1, 0], [], []>} : vector<179x32xbf16>, vector<179x32xbf16>, vector<179x179xf32> -> vector<179x179xf32>
    %c0_22 = arith.constant 0 : index
    %c0_23 = arith.constant 0 : index
    %38 = vector.load %arg7[%c0_22, %c0_23] : memref<179x179xf32, #tpu.memory_space<vmem>>, vector<179x179xf32>
    %39 = arith.mulf %37, %38 : vector<179x179xf32>
    %cst_24 = arith.constant dense<0xFF800000> : vector<179xf32>
    %40 = vector.multi_reduction <maximumf>, %39, %cst_24 [1] : vector<179x179xf32> to vector<179xf32>
    %41 = vector.shape_cast %40 : vector<179xf32> to vector<179x1xf32>
    %42 = vector.broadcast %41 : vector<179x1xf32> to vector<179x179xf32>
    %43 = arith.subf %39, %42 : vector<179x179xf32>
    %44 = math.exp %43 : vector<179x179xf32>
    %cst_25 = arith.constant dense<0.000000e+00> : vector<179xf32>
    %45 = vector.multi_reduction <add>, %44, %cst_25 [1] : vector<179x179xf32> to vector<179xf32>
    %46 = vector.shape_cast %45 : vector<179xf32> to vector<179x1xf32>
    %47 = arith.truncf %44 : vector<179x179xf32> to vector<179x179xbf16>
    %cst_26 = arith.constant dense<0.000000e+00> : vector<179x32xf32>
    %48 = tpu.matmul %47, %10, %cst_26 {dimension_numbers = #tpu.dot_dimension_numbers<[1], [0], [0], [1], [0, 0, 1, 1], [], []>} : vector<179x179xbf16>, vector<179x32xbf16>, vector<179x32xf32> -> vector<179x32xf32>
    %49 = vector.broadcast %46 : vector<179x1xf32> to vector<179x32xf32>
    %50 = arith.divf %48, %49 : vector<179x32xf32>
    %51 = arith.truncf %50 : vector<179x32xf32> to vector<179x32xbf16>
    %c1_27 = arith.constant 1 : index
    %c0_28 = arith.constant 0 : index
    %c0_29 = arith.constant 0 : index
    %52 = vector.load %arg3[%c1_27, %c0_28, %c0_29] : memref<4x32x32xbf16, #tpu.memory_space<vmem>>, vector<1x32x32xbf16>
    %53 = vector.shape_cast %52 : vector<1x32x32xbf16> to vector<32x32xbf16>
    %cst_30 = arith.constant dense<0.000000e+00> : vector<179x32xf32>
    %54 = tpu.matmul %51, %53, %cst_30 {dimension_numbers = #tpu.dot_dimension_numbers<[1], [0], [0], [1], [0, 0, 1, 1], [], []>} : vector<179x32xbf16>, vector<32x32xbf16>, vector<179x32xf32> -> vector<179x32xf32>
    %55 = arith.addf %32, %54 : vector<179x32xf32>
    %c2 = arith.constant 2 : index
    %c0_31 = arith.constant 0 : index
    %c0_32 = arith.constant 0 : index
    %56 = vector.load %arg2[%c2, %c0_31, %c0_32] : memref<4x32x32xbf16, #tpu.memory_space<vmem>>, vector<1x32x32xbf16>
    %57 = vector.shape_cast %56 : vector<1x32x32xbf16> to vector<32x32xbf16>
    %cst_33 = arith.constant dense<0.000000e+00> : vector<179x32xf32>
    %58 = tpu.matmul %10, %57, %cst_33 {dimension_numbers = #tpu.dot_dimension_numbers<[1], [0], [0], [1], [0, 0, 1, 1], [], []>} : vector<179x32xbf16>, vector<32x32xbf16>, vector<179x32xf32> -> vector<179x32xf32>
    %59 = arith.truncf %58 : vector<179x32xf32> to vector<179x32xbf16>
    %cst_34 = arith.constant dense<0.000000e+00> : vector<179x179xf32>
    %60 = tpu.matmul %59, %10, %cst_34 {dimension_numbers = #tpu.dot_dimension_numbers<[1], [1], [0], [0], [0, 0, 1, 0], [], []>} : vector<179x32xbf16>, vector<179x32xbf16>, vector<179x179xf32> -> vector<179x179xf32>
    %c0_35 = arith.constant 0 : index
    %c0_36 = arith.constant 0 : index
    %61 = vector.load %arg7[%c0_35, %c0_36] : memref<179x179xf32, #tpu.memory_space<vmem>>, vector<179x179xf32>
    %62 = arith.mulf %60, %61 : vector<179x179xf32>
    %cst_37 = arith.constant dense<0xFF800000> : vector<179xf32>
    %63 = vector.multi_reduction <maximumf>, %62, %cst_37 [1] : vector<179x179xf32> to vector<179xf32>
    %64 = vector.shape_cast %63 : vector<179xf32> to vector<179x1xf32>
    %65 = vector.broadcast %64 : vector<179x1xf32> to vector<179x179xf32>
    %66 = arith.subf %62, %65 : vector<179x179xf32>
    %67 = math.exp %66 : vector<179x179xf32>
    %cst_38 = arith.constant dense<0.000000e+00> : vector<179xf32>
    %68 = vector.multi_reduction <add>, %67, %cst_38 [1] : vector<179x179xf32> to vector<179xf32>
    %69 = vector.shape_cast %68 : vector<179xf32> to vector<179x1xf32>
    %70 = arith.truncf %67 : vector<179x179xf32> to vector<179x179xbf16>
    %cst_39 = arith.constant dense<0.000000e+00> : vector<179x32xf32>
    %71 = tpu.matmul %70, %10, %cst_39 {dimension_numbers = #tpu.dot_dimension_numbers<[1], [0], [0], [1], [0, 0, 1, 1], [], []>} : vector<179x179xbf16>, vector<179x32xbf16>, vector<179x32xf32> -> vector<179x32xf32>
    %72 = vector.broadcast %69 : vector<179x1xf32> to vector<179x32xf32>
    %73 = arith.divf %71, %72 : vector<179x32xf32>
    %74 = arith.truncf %73 : vector<179x32xf32> to vector<179x32xbf16>
    %c2_40 = arith.constant 2 : index
    %c0_41 = arith.constant 0 : index
    %c0_42 = arith.constant 0 : index
    %75 = vector.load %arg3[%c2_40, %c0_41, %c0_42] : memref<4x32x32xbf16, #tpu.memory_space<vmem>>, vector<1x32x32xbf16>
    %76 = vector.shape_cast %75 : vector<1x32x32xbf16> to vector<32x32xbf16>
    %cst_43 = arith.constant dense<0.000000e+00> : vector<179x32xf32>
    %77 = tpu.matmul %74, %76, %cst_43 {dimension_numbers = #tpu.dot_dimension_numbers<[1], [0], [0], [1], [0, 0, 1, 1], [], []>} : vector<179x32xbf16>, vector<32x32xbf16>, vector<179x32xf32> -> vector<179x32xf32>
    %78 = arith.addf %55, %77 : vector<179x32xf32>
    %c3 = arith.constant 3 : index
    %c0_44 = arith.constant 0 : index
    %c0_45 = arith.constant 0 : index
    %79 = vector.load %arg2[%c3, %c0_44, %c0_45] : memref<4x32x32xbf16, #tpu.memory_space<vmem>>, vector<1x32x32xbf16>
    %80 = vector.shape_cast %79 : vector<1x32x32xbf16> to vector<32x32xbf16>
    %cst_46 = arith.constant dense<0.000000e+00> : vector<179x32xf32>
    %81 = tpu.matmul %10, %80, %cst_46 {dimension_numbers = #tpu.dot_dimension_numbers<[1], [0], [0], [1], [0, 0, 1, 1], [], []>} : vector<179x32xbf16>, vector<32x32xbf16>, vector<179x32xf32> -> vector<179x32xf32>
    %82 = arith.truncf %81 : vector<179x32xf32> to vector<179x32xbf16>
    %cst_47 = arith.constant dense<0.000000e+00> : vector<179x179xf32>
    %83 = tpu.matmul %82, %10, %cst_47 {dimension_numbers = #tpu.dot_dimension_numbers<[1], [1], [0], [0], [0, 0, 1, 0], [], []>} : vector<179x32xbf16>, vector<179x32xbf16>, vector<179x179xf32> -> vector<179x179xf32>
    %c0_48 = arith.constant 0 : index
    %c0_49 = arith.constant 0 : index
    %84 = vector.load %arg7[%c0_48, %c0_49] : memref<179x179xf32, #tpu.memory_space<vmem>>, vector<179x179xf32>
    %85 = arith.mulf %83, %84 : vector<179x179xf32>
    %cst_50 = arith.constant dense<0xFF800000> : vector<179xf32>
    %86 = vector.multi_reduction <maximumf>, %85, %cst_50 [1] : vector<179x179xf32> to vector<179xf32>
    %87 = vector.shape_cast %86 : vector<179xf32> to vector<179x1xf32>
    %88 = vector.broadcast %87 : vector<179x1xf32> to vector<179x179xf32>
    %89 = arith.subf %85, %88 : vector<179x179xf32>
    %90 = math.exp %89 : vector<179x179xf32>
    %cst_51 = arith.constant dense<0.000000e+00> : vector<179xf32>
    %91 = vector.multi_reduction <add>, %90, %cst_51 [1] : vector<179x179xf32> to vector<179xf32>
    %92 = vector.shape_cast %91 : vector<179xf32> to vector<179x1xf32>
    %93 = arith.truncf %90 : vector<179x179xf32> to vector<179x179xbf16>
    %cst_52 = arith.constant dense<0.000000e+00> : vector<179x32xf32>
    %94 = tpu.matmul %93, %10, %cst_52 {dimension_numbers = #tpu.dot_dimension_numbers<[1], [0], [0], [1], [0, 0, 1, 1], [], []>} : vector<179x179xbf16>, vector<179x32xbf16>, vector<179x32xf32> -> vector<179x32xf32>
    %95 = vector.broadcast %92 : vector<179x1xf32> to vector<179x32xf32>
    %96 = arith.divf %94, %95 : vector<179x32xf32>
    %97 = arith.truncf %96 : vector<179x32xf32> to vector<179x32xbf16>
    %c3_53 = arith.constant 3 : index
    %c0_54 = arith.constant 0 : index
    %c0_55 = arith.constant 0 : index
    %98 = vector.load %arg3[%c3_53, %c0_54, %c0_55] : memref<4x32x32xbf16, #tpu.memory_space<vmem>>, vector<1x32x32xbf16>
    %99 = vector.shape_cast %98 : vector<1x32x32xbf16> to vector<32x32xbf16>
    %cst_56 = arith.constant dense<0.000000e+00> : vector<179x32xf32>
    %100 = tpu.matmul %97, %99, %cst_56 {dimension_numbers = #tpu.dot_dimension_numbers<[1], [0], [0], [1], [0, 0, 1, 1], [], []>} : vector<179x32xbf16>, vector<32x32xbf16>, vector<179x32xf32> -> vector<179x32xf32>
    %101 = arith.addf %78, %100 : vector<179x32xf32>
    %cst_57 = arith.constant dense<0.000000e+00> : vector<179xf32>
    %102 = vector.multi_reduction <add>, %101, %cst_57 [1] : vector<179x32xf32> to vector<179xf32>
    %103 = vector.shape_cast %102 : vector<179xf32> to vector<179x1xf32>
    %cst_58 = arith.constant 3.200000e+01 : f32
    %104 = vector.broadcast %cst_58 : f32 to vector<179x1xf32>
    %105 = arith.divf %103, %104 : vector<179x1xf32>
    %106 = vector.broadcast %105 : vector<179x1xf32> to vector<179x32xf32>
    %107 = arith.subf %101, %106 : vector<179x32xf32>
    %108 = arith.mulf %107, %107 : vector<179x32xf32>
    %cst_59 = arith.constant dense<0.000000e+00> : vector<179xf32>
    %109 = vector.multi_reduction <add>, %108, %cst_59 [1] : vector<179x32xf32> to vector<179xf32>
    %110 = vector.shape_cast %109 : vector<179xf32> to vector<179x1xf32>
    %cst_60 = arith.constant 3.200000e+01 : f32
    %111 = vector.broadcast %cst_60 : f32 to vector<179x1xf32>
    %112 = arith.divf %110, %111 : vector<179x1xf32>
    %cst_61 = arith.constant 9.99999974E-6 : f32
    %113 = vector.broadcast %cst_61 : f32 to vector<179x1xf32>
    %114 = arith.addf %112, %113 : vector<179x1xf32>
    %115 = math.rsqrt %114 : vector<179x1xf32>
    %116 = vector.broadcast %115 : vector<179x1xf32> to vector<179x32xf32>
    %117 = arith.mulf %107, %116 : vector<179x32xf32>
    %c0_62 = arith.constant 0 : index
    %c0_63 = arith.constant 0 : index
    %118 = vector.load %arg4[%c0_62, %c0_63] : memref<1x32xf32, #tpu.memory_space<vmem>>, vector<1x32xf32>
    %119 = vector.broadcast %118 : vector<1x32xf32> to vector<179x32xf32>
    %120 = arith.mulf %117, %119 : vector<179x32xf32>
    %c0_64 = arith.constant 0 : index
    %c0_65 = arith.constant 0 : index
    %121 = vector.load %arg5[%c0_64, %c0_65] : memref<1x32xf32, #tpu.memory_space<vmem>>, vector<1x32xf32>
    %122 = vector.broadcast %121 : vector<1x32xf32> to vector<179x32xf32>
    %123 = arith.addf %120, %122 : vector<179x32xf32>
    %c0_66 = arith.constant 0 : index
    %c0_67 = arith.constant 0 : index
    %c0_68 = arith.constant 0 : index
    %124 = vector.load %arg6[%c0_66, %c0_67, %c0_68] : memref<1x179x32xf32, #tpu.memory_space<vmem>>, vector<1x179x32xf32>
    %125 = vector.shape_cast %124 : vector<1x179x32xf32> to vector<179x32xf32>
    %126 = vector.shape_cast %123 : vector<179x32xf32> to vector<1x179x32xf32>
    tpu.vector_store %arg6[%c0_66, %c0_67, %c0_68], %126 {strides = array<i32>} : memref<1x179x32xf32, #tpu.memory_space<vmem>>, vector<1x179x32xf32>,
    return
  }
  func.func @transform_0(%arg0: i32) -> (i32, i32, i32) {
    %c0_i32 = arith.constant 0 : i32
    %c0_i32_0 = arith.constant 0 : i32
    %c0_i32_1 = arith.constant 0 : i32
    return %arg0, %c0_i32, %c0_i32_0 : i32, i32, i32
  }
  func.func @transform_1(%arg0: i32) -> (i32, i32, i32) {
    %c0_i32 = arith.constant 0 : i32
    %c0_i32_0 = arith.constant 0 : i32
    %c0_i32_1 = arith.constant 0 : i32
    %c0_i32_2 = arith.constant 0 : i32
    return %c0_i32, %c0_i32_0, %c0_i32_1 : i32, i32, i32
  }
  func.func @transform_2(%arg0: i32) -> (i32, i32, i32) {
    %c0_i32 = arith.constant 0 : i32
    %c0_i32_0 = arith.constant 0 : i32
    %c0_i32_1 = arith.constant 0 : i32
    %c0_i32_2 = arith.constant 0 : i32
    return %c0_i32, %c0_i32_0, %c0_i32_1 : i32, i32, i32
  }
  func.func @transform_3(%arg0: i32) -> (i32, i32) {
    %c0_i32 = arith.constant 0 : i32
    %c0_i32_0 = arith.constant 0 : i32
    %c0_i32_1 = arith.constant 0 : i32
    return %c0_i32, %c0_i32_0 : i32, i32
  }
  func.func @transform_4(%arg0: i32) -> (i32, i32) {
    %c0_i32 = arith.constant 0 : i32
    %c0_i32_0 = arith.constant 0 : i32
    %c0_i32_1 = arith.constant 0 : i32
    return %c0_i32, %c0_i32_0 : i32, i32
  }
  func.func @transform_5(%arg0: i32) -> (i32, i32, i32) {
    %c0_i32 = arith.constant 0 : i32
    %c0_i32_0 = arith.constant 0 : i32
    %c0_i32_1 = arith.constant 0 : i32
    return %arg0, %c0_i32, %c0_i32_0 : i32, i32, i32
  }
}

</mosaic_0001>

<llo_original>
// kernel: attention_pallas.1
$region0: #{attention_pallas.1}
  #allocation0 [shape = 'u32[]', space=smem, size = 0x4, offset = 0x4, fixed_abs, tag = 'smem constant byte address 0x4 - core index']
  #allocation1 [shape = 'u32[144,128]{1,0:T(1,128)}', space=vmem, size = 0x12000, scoped, tag = 'internal scratch']
  #allocation2 [shape = 'f32[179,179]{1,0:T(8,128)}', space=vmem, size = 0x2e000, scoped, tag = 'scratch operand']
  %s0 = inlined_call_operand.vmem [shape: f32[2,179,32], index: 0, kind: input, shape index: {}]
  %s1 = inlined_call_operand.vmem [shape: bf16[4,32,32], index: 1, kind: input, shape index: {}]
  %s2 = inlined_call_operand.vmem [shape: bf16[4,32,32], index: 2, kind: input, shape index: {}]
  %s3 = inlined_call_operand.vmem [shape: f32[1,32], index: 3, kind: input, shape index: {}]
  %s4 = inlined_call_operand.vmem [shape: f32[1,32], index: 4, kind: input, shape index: {}]
  %s5 = inlined_call_operand.vmem [shape: f32[2,179,32], index: 5, kind: output, shape index: {}]
  %s6 = sld [smem:[#allocation0]]
  $region53: #{attention_pallas.1} parent=0
    _
  %s8 = ssub.s32 1, %s6
  %s9 = scalar_select 0, %s8, %s6
  loop: start=0, step=1, limit=4
  $region2: #{attention_pallas.1} parent=0 // loop_pre_header
    _
  $region3: #{attention_pallas.1} parent=0 // loop_header
    %s11 = sphi 0, %s15
    %p12 = scmp.ge.s32.totalorder %s11, 4
    %s21 = sphi 0, %s23
    %s24 = sphi 0, %s21
    %s25 = sphi 0, %s24
    %s41 = sphi 0, %s25
    %s45 = sphi 0, %s45
    %s47 = sphi 0, %s45
    %s48 = sphi 0, %s47
    %s62 = sphi 0, %s48
    %s66 = sphi 0, %s66
    %s68 = sphi 0, %s66
    %s69 = sphi 0, %s68
    %s83 = sphi 0, %s69
    %s87 = sphi 0, %s87
    %s89 = sphi 0, %s87
    %s90 = sphi 0, %s89
    %s104 = sphi 0, %s90
    %s108 = sphi 0, %s108
    %s110 = sphi 0, %s108
    %s111 = sphi 0, %s110
    %s125 = sphi 0, %s111
    %s131 = sphi 0, %s133
    %s134 = sphi 0, %s131
    %s135 = sphi 0, %s134
    %s151 = sphi 0, %s135
  $region4: #{attention_pallas.1} parent=0 // loop_header_branch
    %14 = sbr.rel (%p12) target = $region8
  $region5: #{attention_pallas.1} parent=0 // loop_body
    %s16 = ssub.s32 %s11, 1
    %s17 = ssub.s32 %s11, 2
    %s18 = sadd.s32 %s11, 1
    %s19 = ssub.s32 %s11, %s18
    %p20 = scmp.eq.s32.totalorder %s19, 0
    %s22 = sadd.s32 %s21, 1
    %s23 = scalar_select %p20, %s21, %s22
    %p26 = pneg %p20
    %p27 = scmp.eq.s32.totalorder %s11, 1
    %p28 = por %p26, %p27
    %p29 = scmp.ne.s32.totalorder %s21, %s24
    %p30 = scmp.eq.s32.totalorder %s11, 0
    %p31 = por %p29, %p30
    %p32 = scmp.ne.s32.totalorder %s21, %s24
    %p33 = scmp.eq.s32.totalorder %s16, 1
    %p34 = por %p32, %p33
    %p35 = scmp.ne.s32.totalorder %s24, %s25
    %p36 = scmp.eq.s32.totalorder %s16, 0
    %p37 = por %p35, %p36
    %p38 = scmp.ne.s32.totalorder %s24, %s25
    %p39 = scmp.eq.s32.totalorder %s17, 1
    %p40 = por %p38, %p39
    %p42 = scmp.ne.s32.totalorder %s25, %s41
    %p43 = scmp.eq.s32.totalorder %s17, 0
    %p44 = por %p42, %p43
    %s46 = sadd.s32 %s45, 1
    %p49 = scmp.eq.s32.totalorder %s11, 1
    %p50 = scmp.ne.s32.totalorder %s45, %s47
    %p51 = scmp.eq.s32.totalorder %s11, 0
    %p52 = por %p50, %p51
    %p53 = scmp.ne.s32.totalorder %s45, %s47
    %p54 = scmp.eq.s32.totalorder %s16, 1
    %p55 = por %p53, %p54
    %p56 = scmp.ne.s32.totalorder %s47, %s48
    %p57 = scmp.eq.s32.totalorder %s16, 0
    %p58 = por %p56, %p57
    %p59 = scmp.ne.s32.totalorder %s47, %s48
    %p60 = scmp.eq.s32.totalorder %s17, 1
    %p61 = por %p59, %p60
    %p63 = scmp.ne.s32.totalorder %s48, %s62
    %p64 = scmp.eq.s32.totalorder %s17, 0
    %p65 = por %p63, %p64
    %s67 = sadd.s32 %s66, 1
    %p70 = scmp.eq.s32.totalorder %s11, 1
    %p71 = scmp.ne.s32.totalorder %s66, %s68
    %p72 = scmp.eq.s32.totalorder %s11, 0
    %p73 = por %p71, %p72
    %p74 = scmp.ne.s32.totalorder %s66, %s68
    %p75 = scmp.eq.s32.totalorder %s16, 1
    %p76 = por %p74, %p75
    %p77 = scmp.ne.s32.totalorder %s68, %s69
    %p78 = scmp.eq.s32.totalorder %s16, 0
    %p79 = por %p77, %p78
    %p80 = scmp.ne.s32.totalorder %s68, %s69
    %p81 = scmp.eq.s32.totalorder %s17, 1
    %p82 = por %p80, %p81
    %p84 = scmp.ne.s32.totalorder %s69, %s83
    %p85 = scmp.eq.s32.totalorder %s17, 0
    %p86 = por %p84, %p85
    %s88 = sadd.s32 %s87, 1
    %p91 = scmp.eq.s32.totalorder %s11, 1
    %p92 = scmp.ne.s32.totalorder %s87, %s89
    %p93 = scmp.eq.s32.totalorder %s11, 0
    %p94 = por %p92, %p93
    %p95 = scmp.ne.s32.totalorder %s87, %s89
    %p96 = scmp.eq.s32.totalorder %s16, 1
    %p97 = por %p95, %p96
    %p98 = scmp.ne.s32.totalorder %s89, %s90
    %p99 = scmp.eq.s32.totalorder %s16, 0
    %p100 = por %p98, %p99
    %p101 = scmp.ne.s32.totalorder %s89, %s90
    %p102 = scmp.eq.s32.totalorder %s17, 1
    %p103 = por %p101, %p102
    %p105 = scmp.ne.s32.totalorder %s90, %s104
    %p106 = scmp.eq.s32.totalorder %s17, 0
    %p107 = por %p105, %p106
    %s109 = sadd.s32 %s108, 1
    %p112 = scmp.eq.s32.totalorder %s11, 1
    %p113 = scmp.ne.s32.totalorder %s108, %s110
    %p114 = scmp.eq.s32.totalorder %s11, 0
    %p115 = por %p113, %p114
    %p116 = scmp.ne.s32.totalorder %s108, %s110
    %p117 = scmp.eq.s32.totalorder %s16, 1
    %p118 = por %p116, %p117
    %p119 = scmp.ne.s32.totalorder %s110, %s111
    %p120 = scmp.eq.s32.totalorder %s16, 0
    %p121 = por %p119, %p120
    %p122 = scmp.ne.s32.totalorder %s110, %s111
    %p123 = scmp.eq.s32.totalorder %s17, 1
    %p124 = por %p122, %p123
    %p126 = scmp.ne.s32.totalorder %s111, %s125
    %p127 = scmp.eq.s32.totalorder %s17, 0
    %p128 = por %p126, %p127
    %s129 = ssub.s32 %s11, %s18
    %p130 = scmp.eq.s32.totalorder %s129, 0
    %s132 = sadd.s32 %s131, 1
    %s133 = scalar_select %p130, %s131, %s132
    %p136 = pneg %p130
    %p137 = scmp.eq.s32.totalorder %s11, 1
    %p138 = por %p136, %p137
    %p139 = scmp.ne.s32.totalorder %s131, %s134
    %p140 = scmp.eq.s32.totalorder %s11, 0
    %p141 = por %p139, %p140
    %p142 = scmp.ne.s32.totalorder %s131, %s134
    %p143 = scmp.eq.s32.totalorder %s16, 1
    %p144 = por %p142, %p143
    %p145 = scmp.ne.s32.totalorder %s134, %s135
    %p146 = scmp.eq.s32.totalorder %s16, 0
    %p147 = por %p145, %p146
    %p148 = scmp.ne.s32.totalorder %s134, %s135
    %p149 = scmp.eq.s32.totalorder %s17, 1
    %p150 = por %p148, %p149
    %p152 = scmp.ne.s32.totalorder %s135, %s151
    %p153 = scmp.eq.s32.totalorder %s17, 0
    %p154 = por %p152, %p153
    %p155 = scmp.le.s32.totalorder 1, %s11
    %p156 = scmp.lt.s32.totalorder %s11, 3
    %p157 = pnand %p155, %p156
    %p158 = pneg %p157
    // Predicated region
    $region9: #{attention_pallas.1} parent=5 // pred_check
      _
    $region10: #{attention_pallas.1} parent=5 // pred_check_branch
      %160 = sbr.rel (%p157) target = $region12
    $region11: #{attention_pallas.1} parent=5 // pred_region
      %s161 = ssub.s32 %s11, 1
      // Predicated region
      $region13: #{attention_pallas.1} parent=11 // pred_check
        %p162 = pneg %p58
      $region14: #{attention_pallas.1} parent=11 // pred_check_branch
        %164 = sbr.rel (%p162) target = $region16
      $region15: #{attention_pallas.1} parent=11 // pred_region
        _
      $region16: #{attention_pallas.1} parent=11 // pred_fallthru
        _
      // Predicated region
      $region17: #{attention_pallas.1} parent=11 // pred_check
        %p165 = pneg %p79
      $region18: #{attention_pallas.1} parent=11 // pred_check_branch
        %167 = sbr.rel (%p165) target = $region20
      $region19: #{attention_pallas.1} parent=11 // pred_region
        _
      $region20: #{attention_pallas.1} parent=11 // pred_fallthru
        _
      // Predicated region
      $region21: #{attention_pallas.1} parent=11 // pred_check
        %p168 = pneg %p100
      $region22: #{attention_pallas.1} parent=11 // pred_check_branch
        %170 = sbr.rel (%p168) target = $region24
      $region23: #{attention_pallas.1} parent=11 // pred_region
        _
      $region24: #{attention_pallas.1} parent=11 // pred_fallthru
        _
      // Predicated region
      $region25: #{attention_pallas.1} parent=11 // pred_check
        %p171 = pneg %p121
      $region26: #{attention_pallas.1} parent=11 // pred_check_branch
        %173 = sbr.rel (%p171) target = $region28
      $region27: #{attention_pallas.1} parent=11 // pred_region
        _
      $region28: #{attention_pallas.1} parent=11 // pred_fallthru
        _
    $region12: #{attention_pallas.1} parent=5 // pred_fallthru
      _
    %p174 = scmp.lt.s32.totalorder %s11, 2
    // Predicated region
    $region29: #{attention_pallas.1} parent=5 // pred_check
      %p175 = pneg %p174
    $region30: #{attention_pallas.1} parent=5 // pred_check_branch
      %177 = sbr.rel (%p175) target = $region32
    $region31: #{attention_pallas.1} parent=5 // pred_region
      // Predicated region
      $region33: #{attention_pallas.1} parent=31 // pred_check
        %p178 = pneg %p31
      $region34: #{attention_pallas.1} parent=31 // pred_check_branch
        %180 = sbr.rel (%p178) target = $region36
      $region35: #{attention_pallas.1} parent=31 // pred_region
        %p181 = scmp.lt.s32.totalorder %s11, 1
        %s182 = scalar_select %p181, %s11, 1
        %s183 = smul.addr %s182, 23
        %s184 = smul.addr %s183, 8
        %s185 = scalar_lea.vmem %s0, %s184
      $region36: #{attention_pallas.1} parent=31 // pred_fallthru
        _
    $region32: #{attention_pallas.1} parent=5 // pred_fallthru
      _
    %p186 = scmp.le.s32.totalorder 1, %s11
    %p187 = scmp.lt.s32.totalorder %s11, 3
    %p188 = pnand %p186, %p187
    %p189 = pneg %p188
    // Predicated region
    $region37: #{attention_pallas.1} parent=5 // pred_check
      _
    $region38: #{attention_pallas.1} parent=5 // pred_check_branch
      %191 = sbr.rel (%p188) target = $region40
    $region39: #{attention_pallas.1} parent=5 // pred_region
      %s192 = ssub.s32 %s11, 1
      %p193 = scmp.lt.s32.totalorder %s16, 1
      %s194 = scalar_select %p193, %s16, 1
      %s195 = smul.addr %s194, 23
      %s196 = smul.addr %s195, 8
      %s197 = scalar_lea.vmem %s0, %s196
      %p198 = pneg %p37
      %p199 = pneg %p34
      %p200 = pneg %p58
      %p201 = pneg %p55
      %p202 = pneg %p79
      %p203 = pneg %p76
      %p204 = pneg %p100
      %p205 = pneg %p97
      %p206 = pneg %p121
      %p207 = pneg %p118
      %p208 = pneg %p147
      %p209 = pneg %p144
      %p210 = scmp.lt.s32.totalorder %s16, 1
      %s211 = scalar_select %p210, %s16, 1
      %s212 = smul.addr %s211, 23
      %s213 = smul.addr %s212, 8
      %s214 = scalar_lea.vmem %s5, %s213
      %p215 = scmp.lt.s32.totalorder %s16, 1
      %s216 = scalar_select %p215, %s16, 1
      %s217 = smul.addr %s216, 23
      %s218 = smul.addr %s217, 8
      %s219 = scalar_lea.vmem %s0, %s218
      %p220 = scmp.lt.s32.totalorder %s16, 1
      %s221 = scalar_select %p220, %s16, 1
      %s222 = smul.addr %s221, 23
      %s223 = smul.addr %s222, 8
      %s224 = scalar_lea.vmem %s5, %s223
      %v226 = vlaneseq
      %v227 = vand.u32 %v226, 127
      %v228 = vadd.s32 %v227, 128
      %v229 = vlaneseq
      %v230 = vshrl.u32 %v229, 7
      %v231 = vadd.s32 %v230, 8
      %v232 = vadd.s32 %v230, 16
      %v233 = vadd.s32 %v230, 24
      %v234 = vadd.s32 %v230, 32
      %v235 = vadd.s32 %v230, 40
      %v236 = vadd.s32 %v230, 48
      %v237 = vadd.s32 %v230, 56
      %v238 = vadd.s32 %v230, 64
      %v239 = vadd.s32 %v230, 72
      %v240 = vadd.s32 %v230, 80
      %v241 = vadd.s32 %v230, 88
      %v242 = vadd.s32 %v230, 96
      %v243 = vadd.s32 %v230, 104
      %v244 = vadd.s32 %v230, 112
      %v245 = vadd.s32 %v230, 120
      %v246 = vadd.s32 %v230, 128
      %v247 = vadd.s32 %v230, 136
      %v248 = vadd.s32 %v230, 144
      %v249 = vadd.s32 %v230, 152
      %v250 = vadd.s32 %v230, 160
      %v251 = vadd.s32 %v230, 168
      %v252 = vadd.s32 %v230, 176
      %v253 = vsub.s32 %v227, %v230
      %v254 = vsub.s32 %v228, %v230
      %v255 = vsub.s32 %v227, %v231
      %v256 = vsub.s32 %v228, %v231
      %v257 = vsub.s32 %v227, %v232
      %v258 = vsub.s32 %v228, %v232
      %v259 = vsub.s32 %v227, %v233
      %v260 = vsub.s32 %v228, %v233
      %v261 = vsub.s32 %v227, %v234
      %v262 = vsub.s32 %v228, %v234
      %v263 = vsub.s32 %v227, %v235
      %v264 = vsub.s32 %v228, %v235
      %v265 = vsub.s32 %v227, %v236
      %v266 = vsub.s32 %v228, %v236
      %v267 = vsub.s32 %v227, %v237
      %v268 = vsub.s32 %v228, %v237
      %v269 = vsub.s32 %v227, %v238
      %v270 = vsub.s32 %v228, %v238
      %v271 = vsub.s32 %v227, %v239
      %v272 = vsub.s32 %v228, %v239
      %v273 = vsub.s32 %v227, %v240
      %v274 = vsub.s32 %v228, %v240
      %v275 = vsub.s32 %v227, %v241
      %v276 = vsub.s32 %v228, %v241
      %v277 = vsub.s32 %v227, %v242
      %v278 = vsub.s32 %v228, %v242
      %v279 = vsub.s32 %v227, %v243
      %v280 = vsub.s32 %v228, %v243
      %v281 = vsub.s32 %v227, %v244
      %v282 = vsub.s32 %v228, %v244
      %v283 = vsub.s32 %v227, %v245
      %v284 = vsub.s32 %v228, %v245
      %v285 = vsub.s32 %v227, %v246
      %v286 = vsub.s32 %v228, %v246
      %v287 = vsub.s32 %v227, %v247
      %v288 = vsub.s32 %v228, %v247
      %v289 = vsub.s32 %v227, %v248
      %v290 = vsub.s32 %v228, %v248
      %v291 = vsub.s32 %v227, %v249
      %v292 = vsub.s32 %v228, %v249
      %v293 = vsub.s32 %v227, %v250
      %v294 = vsub.s32 %v228, %v250
      %v295 = vsub.s32 %v227, %v251
      %v296 = vsub.s32 %v228, %v251
      %v297 = vsub.s32 %v227, %v252
      %v298 = vsub.s32 %v228, %v252
      %vm299 = vcmp.lt.s32.totalorder %v253, 0
      %v300 = vsub.s32 0, %v253
      %v301 = vsel %vm299, %v300, %v253
      %vm302 = vcmp.lt.s32.totalorder %v254, 0
      %v303 = vsub.s32 0, %v254
      %v304 = vsel %vm302, %v303, %v254
      %vm305 = vcmp.lt.s32.totalorder %v255, 0
      %v306 = vsub.s32 0, %v255
      %v307 = vsel %vm305, %v306, %v255
      %vm308 = vcmp.lt.s32.totalorder %v256, 0
      %v309 = vsub.s32 0, %v256
      %v310 = vsel %vm308, %v309, %v256
      %vm311 = vcmp.lt.s32.totalorder %v257, 0
      %v312 = vsub.s32 0, %v257
      %v313 = vsel %vm311, %v312, %v257
      %vm314 = vcmp.lt.s32.totalorder %v258, 0
      %v315 = vsub.s32 0, %v258
      %v316 = vsel %vm314, %v315, %v258
      %vm317 = vcmp.lt.s32.totalorder %v259, 0
      %v318 = vsub.s32 0, %v259
      %v319 = vsel %vm317, %v318, %v259
      %vm320 = vcmp.lt.s32.totalorder %v260, 0
      %v321 = vsub.s32 0, %v260
      %v322 = vsel %vm320, %v321, %v260
      %vm323 = vcmp.lt.s32.totalorder %v261, 0
      %v324 = vsub.s32 0, %v261
      %v325 = vsel %vm323, %v324, %v261
      %vm326 = vcmp.lt.s32.totalorder %v262, 0
      %v327 = vsub.s32 0, %v262
      %v328 = vsel %vm326, %v327, %v262
      %vm329 = vcmp.lt.s32.totalorder %v263, 0
      %v330 = vsub.s32 0, %v263
      %v331 = vsel %vm329, %v330, %v263
      %vm332 = vcmp.lt.s32.totalorder %v264, 0
      %v333 = vsub.s32 0, %v264
      %v334 = vsel %vm332, %v333, %v264
      %vm335 = vcmp.lt.s32.totalorder %v265, 0
      %v336 = vsub.s32 0, %v265
      %v337 = vsel %vm335, %v336, %v265
      %vm338 = vcmp.lt.s32.totalorder %v266, 0
      %v339 = vsub.s32 0, %v266
      %v340 = vsel %vm338, %v339, %v266
      %vm341 = vcmp.lt.s32.totalorder %v267, 0
      %v342 = vsub.s32 0, %v267
      %v343 = vsel %vm341, %v342, %v267
      %vm344 = vcmp.lt.s32.totalorder %v268, 0
      %v345 = vsub.s32 0, %v268
      %v346 = vsel %vm344, %v345, %v268
      %vm347 = vcmp.lt.s32.totalorder %v269, 0
      %v348 = vsub.s32 0, %v269
      %v349 = vsel %vm347, %v348, %v269
      %vm350 = vcmp.lt.s32.totalorder %v270, 0
      %v351 = vsub.s32 0, %v270
      %v352 = vsel %vm350, %v351, %v270
      %vm353 = vcmp.lt.s32.totalorder %v271, 0
      %v354 = vsub.s32 0, %v271
      %v355 = vsel %vm353, %v354, %v271
      %vm356 = vcmp.lt.s32.totalorder %v272, 0
      %v357 = vsub.s32 0, %v272
      %v358 = vsel %vm356, %v357, %v272
      %vm359 = vcmp.lt.s32.totalorder %v273, 0
      %v360 = vsub.s32 0, %v273
      %v361 = vsel %vm359, %v360, %v273
      %vm362 = vcmp.lt.s32.totalorder %v274, 0
      %v363 = vsub.s32 0, %v274
      %v364 = vsel %vm362, %v363, %v274
      %vm365 = vcmp.lt.s32.totalorder %v275, 0
      %v366 = vsub.s32 0, %v275
      %v367 = vsel %vm365, %v366, %v275
      %vm368 = vcmp.lt.s32.totalorder %v276, 0
      %v369 = vsub.s32 0, %v276
      %v370 = vsel %vm368, %v369, %v276
      %vm371 = vcmp.lt.s32.totalorder %v277, 0
      %v372 = vsub.s32 0, %v277
      %v373 = vsel %vm371, %v372, %v277
      %vm374 = vcmp.lt.s32.totalorder %v278, 0
      %v375 = vsub.s32 0, %v278
      %v376 = vsel %vm374, %v375, %v278
      %vm377 = vcmp.lt.s32.totalorder %v279, 0
      %v378 = vsub.s32 0, %v279
      %v379 = vsel %vm377, %v378, %v279
      %vm380 = vcmp.lt.s32.totalorder %v280, 0
      %v381 = vsub.s32 0, %v280
      %v382 = vsel %vm380, %v381, %v280
      %vm383 = vcmp.lt.s32.totalorder %v281, 0
      %v384 = vsub.s32 0, %v281
      %v385 = vsel %vm383, %v384, %v281
      %vm386 = vcmp.lt.s32.totalorder %v282, 0
      %v387 = vsub.s32 0, %v282
      %v388 = vsel %vm386, %v387, %v282
      %vm389 = vcmp.lt.s32.totalorder %v283, 0
      %v390 = vsub.s32 0, %v283
      %v391 = vsel %vm389, %v390, %v283
      %vm392 = vcmp.lt.s32.totalorder %v284, 0
      %v393 = vsub.s32 0, %v284
      %v394 = vsel %vm392, %v393, %v284
      %vm395 = vcmp.lt.s32.totalorder %v285, 0
      %v396 = vsub.s32 0, %v285
      %v397 = vsel %vm395, %v396, %v285
      %vm398 = vcmp.lt.s32.totalorder %v286, 0
      %v399 = vsub.s32 0, %v286
      %v400 = vsel %vm398, %v399, %v286
      %vm401 = vcmp.lt.s32.totalorder %v287, 0
      %v402 = vsub.s32 0, %v287
      %v403 = vsel %vm401, %v402, %v287
      %vm404 = vcmp.lt.s32.totalorder %v288, 0
      %v405 = vsub.s32 0, %v288
      %v406 = vsel %vm404, %v405, %v288
      %vm407 = vcmp.lt.s32.totalorder %v289, 0
      %v408 = vsub.s32 0, %v289
      %v409 = vsel %vm407, %v408, %v289
      %vm410 = vcmp.lt.s32.totalorder %v290, 0
      %v411 = vsub.s32 0, %v290
      %v412 = vsel %vm410, %v411, %v290
      %vm413 = vcmp.lt.s32.totalorder %v291, 0
      %v414 = vsub.s32 0, %v291
      %v415 = vsel %vm413, %v414, %v291
      %vm416 = vcmp.lt.s32.totalorder %v292, 0
      %v417 = vsub.s32 0, %v292
      %v418 = vsel %vm416, %v417, %v292
      %vm419 = vcmp.lt.s32.totalorder %v293, 0
      %v420 = vsub.s32 0, %v293
      %v421 = vsel %vm419, %v420, %v293
      %vm422 = vcmp.lt.s32.totalorder %v294, 0
      %v423 = vsub.s32 0, %v294
      %v424 = vsel %vm422, %v423, %v294
      %vm425 = vcmp.lt.s32.totalorder %v295, 0
      %v426 = vsub.s32 0, %v295
      %v427 = vsel %vm425, %v426, %v295
      %vm428 = vcmp.lt.s32.totalorder %v296, 0
      %v429 = vsub.s32 0, %v296
      %v430 = vsel %vm428, %v429, %v296
      %vm431 = vcmp.lt.s32.totalorder %v297, 0
      %v432 = vsub.s32 0, %v297
      %v433 = vsel %vm431, %v432, %v297
      %vm434 = vcmp.lt.s32.totalorder %v298, 0
      %v435 = vsub.s32 0, %v298
      %v436 = vsel %vm434, %v435, %v298
      %v437 = vcvt.s32.f32 %v301
      %v438 = vcvt.s32.f32 %v304
      %v439 = vcvt.s32.f32 %v307
      %v440 = vcvt.s32.f32 %v310
      %v441 = vcvt.s32.f32 %v313
      %v442 = vcvt.s32.f32 %v316
      %v443 = vcvt.s32.f32 %v319
      %v444 = vcvt.s32.f32 %v322
      %v445 = vcvt.s32.f32 %v325
      %v446 = vcvt.s32.f32 %v328
      %v447 = vcvt.s32.f32 %v331
      %v448 = vcvt.s32.f32 %v334
      %v449 = vcvt.s32.f32 %v337
      %v450 = vcvt.s32.f32 %v340
      %v451 = vcvt.s32.f32 %v343
      %v452 = vcvt.s32.f32 %v346
      %v453 = vcvt.s32.f32 %v349
      %v454 = vcvt.s32.f32 %v352
      %v455 = vcvt.s32.f32 %v355
      %v456 = vcvt.s32.f32 %v358
      %v457 = vcvt.s32.f32 %v361
      %v458 = vcvt.s32.f32 %v364
      %v459 = vcvt.s32.f32 %v367
      %v460 = vcvt.s32.f32 %v370
      %v461 = vcvt.s32.f32 %v373
      %v462 = vcvt.s32.f32 %v376
      %v463 = vcvt.s32.f32 %v379
      %v464 = vcvt.s32.f32 %v382
      %v465 = vcvt.s32.f32 %v385
      %v466 = vcvt.s32.f32 %v388
      %v467 = vcvt.s32.f32 %v391
      %v468 = vcvt.s32.f32 %v394
      %v469 = vcvt.s32.f32 %v397
      %v470 = vcvt.s32.f32 %v400
      %v471 = vcvt.s32.f32 %v403
      %v472 = vcvt.s32.f32 %v406
      %v473 = vcvt.s32.f32 %v409
      %v474 = vcvt.s32.f32 %v412
      %v475 = vcvt.s32.f32 %v415
      %v476 = vcvt.s32.f32 %v418
      %v477 = vcvt.s32.f32 %v421
      %v478 = vcvt.s32.f32 %v424
      %v479 = vcvt.s32.f32 %v427
      %v480 = vcvt.s32.f32 %v430
      %v481 = vcvt.s32.f32 %v433
      %v482 = vcvt.s32.f32 %v436
      %v483 = vmul.f32 %v437, 0.005586592
      %v484 = vmul.f32 %v438, 0.005586592
      %v485 = vmul.f32 %v439, 0.005586592
      %v486 = vmul.f32 %v440, 0.005586592
      %v487 = vmul.f32 %v441, 0.005586592
      %v488 = vmul.f32 %v442, 0.005586592
      %v489 = vmul.f32 %v443, 0.005586592
      %v490 = vmul.f32 %v444, 0.005586592
      %v491 = vmul.f32 %v445, 0.005586592
      %v492 = vmul.f32 %v446, 0.005586592
      %v493 = vmul.f32 %v447, 0.005586592
      %v494 = vmul.f32 %v448, 0.005586592
      %v495 = vmul.f32 %v449, 0.005586592
      %v496 = vmul.f32 %v450, 0.005586592
      %v497 = vmul.f32 %v451, 0.005586592
      %v498 = vmul.f32 %v452, 0.005586592
      %v499 = vmul.f32 %v453, 0.005586592
      %v500 = vmul.f32 %v454, 0.005586592
      %v501 = vmul.f32 %v455, 0.005586592
      %v502 = vmul.f32 %v456, 0.005586592
      %v503 = vmul.f32 %v457, 0.005586592
      %v504 = vmul.f32 %v458, 0.005586592
      %v505 = vmul.f32 %v459, 0.005586592
      %v506 = vmul.f32 %v460, 0.005586592
      %v507 = vmul.f32 %v461, 0.005586592
      %v508 = vmul.f32 %v462, 0.005586592
      %v509 = vmul.f32 %v463, 0.005586592
      %v510 = vmul.f32 %v464, 0.005586592
      %v511 = vmul.f32 %v465, 0.005586592
      %v512 = vmul.f32 %v466, 0.005586592
      %v513 = vmul.f32 %v467, 0.005586592
      %v514 = vmul.f32 %v468, 0.005586592
      %v515 = vmul.f32 %v469, 0.005586592
      %v516 = vmul.f32 %v470, 0.005586592
      %v517 = vmul.f32 %v471, 0.005586592
      %v518 = vmul.f32 %v472, 0.005586592
      %v519 = vmul.f32 %v473, 0.005586592
      %v520 = vmul.f32 %v474, 0.005586592
      %v521 = vmul.f32 %v475, 0.005586592
      %v522 = vmul.f32 %v476, 0.005586592
      %v523 = vmul.f32 %v477, 0.005586592
      %v524 = vmul.f32 %v478, 0.005586592
      %v525 = vmul.f32 %v479, 0.005586592
      %v526 = vmul.f32 %v480, 0.005586592
      %v527 = vmul.f32 %v481, 0.005586592
      %v528 = vmul.f32 %v482, 0.005586592
      %529 = vst [vmem:[#allocation2] sm:$0xff] %v483
      %vm530 = vcmask 416768
      %531 = vst.msk [vmem:[#allocation2 + $0x8] sm:$0xff] %vm530, %v484
      %532 = vst [vmem:[#allocation2 + $0x10] sm:$0xff] %v485
      %533 = vst.msk [vmem:[#allocation2 + $0x18] sm:$0xff] %vm530, %v486
      %534 = vst [vmem:[#allocation2 + $0x20] sm:$0xff] %v487
      %535 = vst.msk [vmem:[#allocation2 + $0x28] sm:$0xff] %vm530, %v488
      %536 = vst [vmem:[#allocation2 + $0x30] sm:$0xff] %v489
      %537 = vst.msk [vmem:[#allocation2 + $0x38] sm:$0xff] %vm530, %v490
      %538 = vst [vmem:[#allocation2 + $0x40] sm:$0xff] %v491
      %539 = vst.msk [vmem:[#allocation2 + $0x48] sm:$0xff] %vm530, %v492
      %540 = vst [vmem:[#allocation2 + $0x50] sm:$0xff] %v493
      %541 = vst.msk [vmem:[#allocation2 + $0x58] sm:$0xff] %vm530, %v494
      %542 = vst [vmem:[#allocation2 + $0x60] sm:$0xff] %v495
      %543 = vst.msk [vmem:[#allocation2 + $0x68] sm:$0xff] %vm530, %v496
      %544 = vst [vmem:[#allocation2 + $0x70] sm:$0xff] %v497
      %545 = vst.msk [vmem:[#allocation2 + $0x78] sm:$0xff] %vm530, %v498
      %546 = vst [vmem:[#allocation2 + $0x80] sm:$0xff] %v499
      %547 = vst.msk [vmem:[#allocation2 + $0x88] sm:$0xff] %vm530, %v500
      %548 = vst [vmem:[#allocation2 + $0x90] sm:$0xff] %v501
      %549 = vst.msk [vmem:[#allocation2 + $0x98] sm:$0xff] %vm530, %v502
      %550 = vst [vmem:[#allocation2 + $0xa0] sm:$0xff] %v503
      %551 = vst.msk [vmem:[#allocation2 + $0xa8] sm:$0xff] %vm530, %v504
      %552 = vst [vmem:[#allocation2 + $0xb0] sm:$0xff] %v505
      %553 = vst.msk [vmem:[#allocation2 + $0xb8] sm:$0xff] %vm530, %v506
      %554 = vst [vmem:[#allocation2 + $0xc0] sm:$0xff] %v507
      %555 = vst.msk [vmem:[#allocation2 + $0xc8] sm:$0xff] %vm530, %v508
      %556 = vst [vmem:[#allocation2 + $0xd0] sm:$0xff] %v509
      %557 = vst.msk [vmem:[#allocation2 + $0xd8] sm:$0xff] %vm530, %v510
      %558 = vst [vmem:[#allocation2 + $0xe0] sm:$0xff] %v511
      %559 = vst.msk [vmem:[#allocation2 + $0xe8] sm:$0xff] %vm530, %v512
      %560 = vst [vmem:[#allocation2 + $0xf0] sm:$0xff] %v513
      %561 = vst.msk [vmem:[#allocation2 + $0xf8] sm:$0xff] %vm530, %v514
      %562 = vst [vmem:[#allocation2 + $0x100] sm:$0xff] %v515
      %563 = vst.msk [vmem:[#allocation2 + $0x108] sm:$0xff] %vm530, %v516
      %564 = vst [vmem:[#allocation2 + $0x110] sm:$0xff] %v517
      %565 = vst.msk [vmem:[#allocation2 + $0x118] sm:$0xff] %vm530, %v518
      %566 = vst [vmem:[#allocation2 + $0x120] sm:$0xff] %v519
      %567 = vst.msk [vmem:[#allocation2 + $0x128] sm:$0xff] %vm530, %v520
      %568 = vst [vmem:[#allocation2 + $0x130] sm:$0xff] %v521
      %569 = vst.msk [vmem:[#allocation2 + $0x138] sm:$0xff] %vm530, %v522
      %570 = vst [vmem:[#allocation2 + $0x140] sm:$0xff] %v523
      %571 = vst.msk [vmem:[#allocation2 + $0x148] sm:$0xff] %vm530, %v524
      %572 = vst [vmem:[#allocation2 + $0x150] sm:$0xff] %v525
      %573 = vst.msk [vmem:[#allocation2 + $0x158] sm:$0xff] %vm530, %v526
      %574 = vst [vmem:[#allocation2 + $0x160] sm:$0x7] %v527
      %vm575 = vcmask 411648
      %576 = vst.msk [vmem:[#allocation2 + $0x168] sm:$0x7] %vm575, %v528
      %v577 = vld [vmem:[%s219] sm:$0xff]
      %v578 = vld [vmem:[%s219 + $0x8] sm:$0xff]
      %v579 = vld [vmem:[%s219 + $0x10] sm:$0xff]
      %v580 = vld [vmem:[%s219 + $0x18] sm:$0xff]
      %v581 = vld [vmem:[%s219 + $0x20] sm:$0xff]
      %v582 = vld [vmem:[%s219 + $0x28] sm:$0xff]
      %v583 = vld [vmem:[%s219 + $0x30] sm:$0xff]
      %v584 = vld [vmem:[%s219 + $0x38] sm:$0xff]
      %v585 = vld [vmem:[%s219 + $0x40] sm:$0xff]
      %v586 = vld [vmem:[%s219 + $0x48] sm:$0xff]
      %v587 = vld [vmem:[%s219 + $0x50] sm:$0xff]
      %v588 = vld [vmem:[%s219 + $0x58] sm:$0xff]
      %v589 = vld [vmem:[%s219 + $0x60] sm:$0xff]
      %v590 = vld [vmem:[%s219 + $0x68] sm:$0xff]
      %v591 = vld [vmem:[%s219 + $0x70] sm:$0xff]
      %v592 = vld [vmem:[%s219 + $0x78] sm:$0xff]
      %v593 = vld [vmem:[%s219 + $0x80] sm:$0xff]
      %v594 = vld [vmem:[%s219 + $0x88] sm:$0xff]
      %v595 = vld [vmem:[%s219 + $0x90] sm:$0xff]
      %v596 = vld [vmem:[%s219 + $0x98] sm:$0xff]
      %v597 = vld [vmem:[%s219 + $0xa0] sm:$0xff]
      %v598 = vld [vmem:[%s219 + $0xa8] sm:$0xff]
      %v599 = vld [vmem:[%s219 + $0xb0] sm:$0x7]
      %v600 = vpack.c.bf16 %v578, %v577
      %v601 = vpack.c.bf16 %v580, %v579
      %v602 = vpack.c.bf16 %v582, %v581
      %v603 = vpack.c.bf16 %v584, %v583
      %v604 = vpack.c.bf16 %v586, %v585
      %v605 = vpack.c.bf16 %v588, %v587
      %v606 = vpack.c.bf16 %v590, %v589
      %v607 = vpack.c.bf16 %v592, %v591
      %v608 = vpack.c.bf16 %v594, %v593
      %v609 = vpack.c.bf16 %v596, %v595
      %v610 = vpack.c.bf16 %v598, %v597
      %v611 = vpack.c.bf16 %v599, %v599
      %v612 = vld [vmem:[%s1] sm:$0xf]
      %v613 = vld [vmem:[%s1 + $0x4] sm:$0xf]
      %v614 = vld [vmem:[%s1 + $0x8] sm:$0xf]
      %v615 = vld [vmem:[%s1 + $0xc] sm:$0xf]
      %v620 = vunpack.c.l.b16 %v612
      %v621 = vunpack.c.l.b16 %v613
      %v622 = vunpack.c.l.b16 %v614
      %v623 = vunpack.c.l.b16 %v615
      %v624 = vpack.c.b16 %v621, %v620
      %v625 = vpack.c.b16 %v623, %v622
      %vm628 = vcmask 261120
      %v630 = vsel %vm628, %v600, 0
      %v633 = vsel %vm628, %v601, 0
      %v636 = vsel %vm628, %v602, 0
      %v639 = vsel %vm628, %v603, 0
      %v642 = vsel %vm628, %v604, 0
      %v645 = vsel %vm628, %v605, 0
      %v648 = vsel %vm628, %v606, 0
      %v651 = vsel %vm628, %v607, 0
      %v654 = vsel %vm628, %v608, 0
      %v657 = vsel %vm628, %v609, 0
      %v660 = vsel %vm628, %v610, 0
      %v663 = vsel %vm628, %v611, 0
      %665 = vmatprep.subr.bf16.mxu0 0
      %666 = vmatpush1.bf16.msra.mxu0 %v624
      %667 = vmatprep.subr.bf16.mxu0 0
      %668 = vmatpush1.bf16.msra.mxu0 %v625
      %669 = vmatprep.subr.bf16.mxu0 0
      %670 = vmatpush1.bf16.msra.mxu0 0
      %671 = vmatprep.subr.bf16.mxu0 0
      %672 = vmatpush1.bf16.msra.mxu0 0
      %673 = vmatprep.subr.bf16.mxu0 0
      %674 = vmatpush1.bf16.msra.mxu0 0
      %675 = vmatprep.subr.bf16.mxu0 0
      %676 = vmatpush1.bf16.msra.mxu0 0
      %677 = vmatprep.subr.bf16.mxu0 0
      %678 = vmatpush1.bf16.msra.mxu0 0
      %679 = vmatprep.subr.bf16.mxu0 0
      %680 = vmatpush1.bf16.msra.mxu0 0
      %681 = vmatprep.subr.bf16.mxu0 0
      %682 = vmatpush1.bf16.msra.mxu0 0
      %683 = vmatprep.subr.bf16.mxu0 0
      %684 = vmatpush1.bf16.msra.mxu0 0
      %685 = vmatprep.subr.bf16.mxu0 0
      %686 = vmatpush1.bf16.msra.mxu0 0
      %687 = vmatprep.subr.bf16.mxu0 0
      %688 = vmatpush1.bf16.msra.mxu0 0
      %689 = vmatprep.subr.bf16.mxu0 0
      %690 = vmatpush1.bf16.msra.mxu0 0
      %691 = vmatprep.subr.bf16.mxu0 0
      %692 = vmatpush1.bf16.msra.mxu0 0
      %693 = vmatprep.subr.bf16.mxu0 0
      %694 = vmatpush1.bf16.msra.mxu0 0
      %695 = vmatprep.subr.bf16.mxu0 0
      %696 = vmatpush1.bf16.msra.mxu0 0
      %697 = vmatprep.mubr.bf16.mxu0 0
      %698 = vmatmul.mubr.bf16.gmra.mrb[0].mxu0 %v630
      %v699 = vpop.f32.mrb[0].mxu0
      %v700 = vadd.f32 0.0, %v699
      %v701 = vpop.f32.mrb[0].mxu0
      %v702 = vpop.f32.mrb[0].mxu0
      %v703 = vadd.f32 0.0, %v702
      %v704 = vpop.f32.mrb[0].mxu0
      %705 = vmatprep.mubr.bf16.mxu0 0
      %706 = vmatmul.mubr.bf16.gmra.mrb[0].mxu0 %v633
      %v707 = vpop.f32.mrb[0].mxu0
      %v708 = vadd.f32 0.0, %v707
      %v709 = vpop.f32.mrb[0].mxu0
      %v710 = vpop.f32.mrb[0].mxu0
      %v711 = vadd.f32 0.0, %v710
      %v712 = vpop.f32.mrb[0].mxu0
      %713 = vmatprep.mubr.bf16.mxu0 0
      %714 = vmatmul.mubr.bf16.gmra.mrb[0].mxu0 %v636
      %v715 = vpop.f32.mrb[0].mxu0
      %v716 = vadd.f32 0.0, %v715
      %v717 = vpop.f32.mrb[0].mxu0
      %v718 = vpop.f32.mrb[0].mxu0
      %v719 = vadd.f32 0.0, %v718
      %v720 = vpop.f32.mrb[0].mxu0
      %721 = vmatprep.mubr.bf16.mxu0 0
      %722 = vmatmul.mubr.bf16.gmra.mrb[0].mxu0 %v639
      %v723 = vpop.f32.mrb[0].mxu0
      %v724 = vadd.f32 0.0, %v723
      %v725 = vpop.f32.mrb[0].mxu0
      %v726 = vpop.f32.mrb[0].mxu0
      %v727 = vadd.f32 0.0, %v726
      %v728 = vpop.f32.mrb[0].mxu0
      %729 = vmatprep.mubr.bf16.mxu0 0
      %730 = vmatmul.mubr.bf16.gmra.mrb[0].mxu0 %v642
      %v731 = vpop.f32.mrb[0].mxu0
      %v732 = vadd.f32 0.0, %v731
      %v733 = vpop.f32.mrb[0].mxu0
      %v734 = vpop.f32.mrb[0].mxu0
      %v735 = vadd.f32 0.0, %v734
      %v736 = vpop.f32.mrb[0].mxu0
      %737 = vmatprep.mubr.bf16.mxu0 0
      %738 = vmatmul.mubr.bf16.gmra.mrb[0].mxu0 %v645
      %v739 = vpop.f32.mrb[0].mxu0
      %v740 = vadd.f32 0.0, %v739
      %v741 = vpop.f32.mrb[0].mxu0
      %v742 = vpop.f32.mrb[0].mxu0
      %v743 = vadd.f32 0.0, %v742
      %v744 = vpop.f32.mrb[0].mxu0
      %745 = vmatprep.mubr.bf16.mxu0 0
      %746 = vmatmul.mubr.bf16.gmra.mrb[0].mxu0 %v648
      %v747 = vpop.f32.mrb[0].mxu0
      %v748 = vadd.f32 0.0, %v747
      %v749 = vpop.f32.mrb[0].mxu0
      %v750 = vpop.f32.mrb[0].mxu0
      %v751 = vadd.f32 0.0, %v750
      %v752 = vpop.f32.mrb[0].mxu0
      %753 = vmatprep.mubr.bf16.mxu0 0
      %754 = vmatmul.mubr.bf16.gmra.mrb[0].mxu0 %v651
      %v755 = vpop.f32.mrb[0].mxu0
      %v756 = vadd.f32 0.0, %v755
      %v757 = vpop.f32.mrb[0].mxu0
      %v758 = vpop.f32.mrb[0].mxu0
      %v759 = vadd.f32 0.0, %v758
      %v760 = vpop.f32.mrb[0].mxu0
      %761 = vmatprep.mubr.bf16.mxu0 0
      %762 = vmatmul.mubr.bf16.gmra.mrb[0].mxu0 %v654
      %v763 = vpop.f32.mrb[0].mxu0
      %v764 = vadd.f32 0.0, %v763
      %v765 = vpop.f32.mrb[0].mxu0
      %v766 = vpop.f32.mrb[0].mxu0
      %v767 = vadd.f32 0.0, %v766
      %v768 = vpop.f32.mrb[0].mxu0
      %769 = vmatprep.mubr.bf16.mxu0 0
      %770 = vmatmul.mubr.bf16.gmra.mrb[0].mxu0 %v657
      %v771 = vpop.f32.mrb[0].mxu0
      %v772 = vadd.f32 0.0, %v771
      %v773 = vpop.f32.mrb[0].mxu0
      %v774 = vpop.f32.mrb[0].mxu0
      %v775 = vadd.f32 0.0, %v774
      %v776 = vpop.f32.mrb[0].mxu0
      %777 = vmatprep.mubr.bf16.mxu0 0
      %778 = vmatmul.mubr.bf16.gmra.mrb[0].mxu0 %v660
      %v779 = vpop.f32.mrb[0].mxu0
      %v780 = vadd.f32 0.0, %v779
      %v781 = vpop.f32.mrb[0].mxu0
      %v782 = vpop.f32.mrb[0].mxu0
      %v783 = vadd.f32 0.0, %v782
      %v784 = vpop.f32.mrb[0].mxu0
      %785 = vmatprep.mubr.bf16.mxu0 0
      %786 = vmatmul.mubr.bf16.gmra.mrb[0].mxu0 %v663
      %v787 = vpop.f32.mrb[0].mxu0
      %v788 = vadd.f32 0.0, %v787
      %v789 = vpop.f32.mrb[0].mxu0
      %v790 = vpop.f32.mrb[0].mxu0
      %v791 = vpop.f32.mrb[0].mxu0
      %792 = vdwg.mxu0
      %v793 = vpack.c.bf16 %v703, %v700
      %v794 = vpack.c.bf16 %v711, %v708
      %v795 = vpack.c.bf16 %v719, %v716
      %v796 = vpack.c.bf16 %v727, %v724
      %v797 = vpack.c.bf16 %v735, %v732
      %v798 = vpack.c.bf16 %v743, %v740
      %v799 = vpack.c.bf16 %v751, %v748
      %v800 = vpack.c.bf16 %v759, %v756
      %v801 = vpack.c.bf16 %v767, %v764
      %v802 = vpack.c.bf16 %v775, %v772
      %v803 = vpack.c.bf16 %v783, %v780
      %v804 = vpack.c.bf16 %v788, %v788
      %v806 = vsel %vm628, %v793, 0
      %v809 = vsel %vm628, %v794, 0
      %v812 = vsel %vm628, %v795, 0
      %v815 = vsel %vm628, %v796, 0
      %v818 = vsel %vm628, %v797, 0
      %v821 = vsel %vm628, %v798, 0
      %v824 = vsel %vm628, %v799, 0
      %v827 = vsel %vm628, %v800, 0
      %v830 = vsel %vm628, %v801, 0
      %v833 = vsel %vm628, %v802, 0
      %v836 = vsel %vm628, %v803, 0
      %v839 = vsel %vm628, %v804, 0
      %841 = vmatprep.subr.bf16.mxu0 0
      %842 = vmatpush1.bf16.xpose.msra.mxu0 %v630
      %843 = vmatprep.subr.bf16.mxu0 0
      %844 = vmatpush1.bf16.xpose.msra.mxu0 %v633
      %845 = vmatprep.subr.bf16.mxu0 0
      %846 = vmatpush1.bf16.xpose.msra.mxu0 %v636
      %847 = vmatprep.subr.bf16.mxu0 0
      %848 = vmatpush1.bf16.xpose.msra.mxu0 %v639
      %849 = vmatprep.subr.bf16.mxu0 0
      %850 = vmatpush1.bf16.xpose.msra.mxu0 %v642
      %851 = vmatprep.subr.bf16.mxu0 0
      %852 = vmatpush1.bf16.xpose.msra.mxu0 %v645
      %853 = vmatprep.subr.bf16.mxu0 0
      %854 = vmatpush1.bf16.xpose.msra.mxu0 %v648
      %855 = vmatprep.subr.bf16.mxu0 0
      %856 = vmatpush1.bf16.xpose.msra.mxu0 %v651
      %857 = vmatprep.subr.bf16.mxu0 0
      %858 = vmatpush1.bf16.xpose.msra.mxu0 %v654
      %859 = vmatprep.subr.bf16.mxu0 0
      %860 = vmatpush1.bf16.xpose.msra.mxu0 %v657
      %861 = vmatprep.subr.bf16.mxu0 0
      %862 = vmatpush1.bf16.xpose.msra.mxu0 %v660
      %863 = vmatprep.subr.bf16.mxu0 0
      %864 = vmatpush1.bf16.xpose.msra.mxu0 %v663
      %865 = vmatprep.subr.bf16.mxu0 0
      %866 = vmatpush1.bf16.xpose.msra.mxu0 0
      %867 = vmatprep.subr.bf16.mxu0 0
      %868 = vmatpush1.bf16.xpose.msra.mxu0 0
      %869 = vmatprep.subr.bf16.mxu0 0
      %870 = vmatpush1.bf16.xpose.msra.mxu0 0
      %871 = vmatprep.subr.bf16.mxu0 0
      %872 = vmatpush1.bf16.xpose.msra.mxu0 0
      %873 = vmatprep.mubr.bf16.mxu0 0
      %874 = vmatmul.mubr.bf16.gmra.mrb[0].mxu0 %v806
      %v875 = vpop.f32.mrb[0].mxu0
      %v876 = vadd.f32 0.0, %v875
      %v877 = vpop.f32.mrb[0].mxu0
      %v878 = vadd.f32 0.0, %v877
      %v879 = vpop.f32.mrb[0].mxu0
      %v880 = vadd.f32 0.0, %v879
      %v881 = vpop.f32.mrb[0].mxu0
      %v882 = vadd.f32 0.0, %v881
      %883 = vmatprep.mubr.bf16.mxu0 0
      %884 = vmatmul.mubr.bf16.gmra.mrb[0].mxu0 %v809
      %v885 = vpop.f32.mrb[0].mxu0
      %v886 = vadd.f32 0.0, %v885
      %v887 = vpop.f32.mrb[0].mxu0
      %v888 = vadd.f32 0.0, %v887
      %v889 = vpop.f32.mrb[0].mxu0
      %v890 = vadd.f32 0.0, %v889
      %v891 = vpop.f32.mrb[0].mxu0
      %v892 = vadd.f32 0.0, %v891
      %893 = vmatprep.mubr.bf16.mxu0 0
      %894 = vmatmul.mubr.bf16.gmra.mrb[0].mxu0 %v812
      %v895 = vpop.f32.mrb[0].mxu0
      %v896 = vadd.f32 0.0, %v895
      %v897 = vpop.f32.mrb[0].mxu0
      %v898 = vadd.f32 0.0, %v897
      %v899 = vpop.f32.mrb[0].mxu0
      %v900 = vadd.f32 0.0, %v899
      %v901 = vpop.f32.mrb[0].mxu0
      %v902 = vadd.f32 0.0, %v901
      %903 = vmatprep.mubr.bf16.mxu0 0
      %904 = vmatmul.mubr.bf16.gmra.mrb[0].mxu0 %v815
      %v905 = vpop.f32.mrb[0].mxu0
      %v906 = vadd.f32 0.0, %v905
      %v907 = vpop.f32.mrb[0].mxu0
      %v908 = vadd.f32 0.0, %v907
      %v909 = vpop.f32.mrb[0].mxu0
      %v910 = vadd.f32 0.0, %v909
      %v911 = vpop.f32.mrb[0].mxu0
      %v912 = vadd.f32 0.0, %v911
      %913 = vmatprep.mubr.bf16.mxu0 0
      %914 = vmatmul.mubr.bf16.gmra.mrb[0].mxu0 %v818
      %v915 = vpop.f32.mrb[0].mxu0
      %v916 = vadd.f32 0.0, %v915
      %v917 = vpop.f32.mrb[0].mxu0
      %v918 = vadd.f32 0.0, %v917
      %v919 = vpop.f32.mrb[0].mxu0
      %v920 = vadd.f32 0.0, %v919
      %v921 = vpop.f32.mrb[0].mxu0
      %v922 = vadd.f32 0.0, %v921
      %923 = vmatprep.mubr.bf16.mxu0 0
      %924 = vmatmul.mubr.bf16.gmra.mrb[0].mxu0 %v821
      %v925 = vpop.f32.mrb[0].mxu0
      %v926 = vadd.f32 0.0, %v925
      %v927 = vpop.f32.mrb[0].mxu0
      %v928 = vadd.f32 0.0, %v927
      %v929 = vpop.f32.mrb[0].mxu0
      %v930 = vadd.f32 0.0, %v929
      %v931 = vpop.f32.mrb[0].mxu0
      %v932 = vadd.f32 0.0, %v931
      %933 = vmatprep.mubr.bf16.mxu0 0
      %934 = vmatmul.mubr.bf16.gmra.mrb[0].mxu0 %v824
      %v935 = vpop.f32.mrb[0].mxu0
      %v936 = vadd.f32 0.0, %v935
      %v937 = vpop.f32.mrb[0].mxu0
      %v938 = vadd.f32 0.0, %v937
      %v939 = vpop.f32.mrb[0].mxu0
      %v940 = vadd.f32 0.0, %v939
      %v941 = vpop.f32.mrb[0].mxu0
      %v942 = vadd.f32 0.0, %v941
      %943 = vmatprep.mubr.bf16.mxu0 0
      %944 = vmatmul.mubr.bf16.gmra.mrb[0].mxu0 %v827
      %v945 = vpop.f32.mrb[0].mxu0
      %v946 = vadd.f32 0.0, %v945
      %v947 = vpop.f32.mrb[0].mxu0
      %v948 = vadd.f32 0.0, %v947
      %v949 = vpop.f32.mrb[0].mxu0
      %v950 = vadd.f32 0.0, %v949
      %v951 = vpop.f32.mrb[0].mxu0
      %v952 = vadd.f32 0.0, %v951
      %953 = vmatprep.mubr.bf16.mxu0 0
      %954 = vmatmul.mubr.bf16.gmra.mrb[0].mxu0 %v830
      %v955 = vpop.f32.mrb[0].mxu0
      %v956 = vadd.f32 0.0, %v955
      %v957 = vpop.f32.mrb[0].mxu0
      %v958 = vadd.f32 0.0, %v957
      %v959 = vpop.f32.mrb[0].mxu0
      %v960 = vadd.f32 0.0, %v959
      %v961 = vpop.f32.mrb[0].mxu0
      %v962 = vadd.f32 0.0, %v961
      %963 = vmatprep.mubr.bf16.mxu0 0
      %964 = vmatmul.mubr.bf16.gmra.mrb[0].mxu0 %v833
      %v965 = vpop.f32.mrb[0].mxu0
      %v966 = vadd.f32 0.0, %v965
      %v967 = vpop.f32.mrb[0].mxu0
      %v968 = vadd.f32 0.0, %v967
      %v969 = vpop.f32.mrb[0].mxu0
      %v970 = vadd.f32 0.0, %v969
      %v971 = vpop.f32.mrb[0].mxu0
      %v972 = vadd.f32 0.0, %v971
      %973 = vmatprep.mubr.bf16.mxu0 0
      %974 = vmatmul.mubr.bf16.gmra.mrb[0].mxu0 %v836
      %v975 = vpop.f32.mrb[0].mxu0
      %v976 = vadd.f32 0.0, %v975
      %v977 = vpop.f32.mrb[0].mxu0
      %v978 = vadd.f32 0.0, %v977
      %v979 = vpop.f32.mrb[0].mxu0
      %v980 = vadd.f32 0.0, %v979
      %v981 = vpop.f32.mrb[0].mxu0
      %v982 = vadd.f32 0.0, %v981
      %983 = vmatprep.mubr.bf16.mxu0 0
      %984 = vmatmul.mubr.bf16.gmra.mrb[0].mxu0 %v839
      %v985 = vpop.f32.mrb[0].mxu0
      %v986 = vadd.f32 0.0, %v985
      %v987 = vpop.f32.mrb[0].mxu0
      %v988 = vadd.f32 0.0, %v987
      %v989 = vpop.f32.mrb[0].mxu0
      %v990 = vpop.f32.mrb[0].mxu0
      %991 = vdwg.mxu0
      %v992 = vld [vmem:[#allocation2] sm:$0xff]
      %v993 = vld [vmem:[#allocation2 + $0x8] sm:$0xff]
      %v994 = vld [vmem:[#allocation2 + $0x10] sm:$0xff]
      %v995 = vld [vmem:[#allocation2 + $0x18] sm:$0xff]
      %v996 = vld [vmem:[#allocation2 + $0x20] sm:$0xff]
      %v997 = vld [vmem:[#allocation2 + $0x28] sm:$0xff]
      %v998 = vld [vmem:[#allocation2 + $0x30] sm:$0xff]
      %v999 = vld [vmem:[#allocation2 + $0x38] sm:$0xff]
      %v1000 = vld [vmem:[#allocation2 + $0x40] sm:$0xff]
      %v1001 = vld [vmem:[#allocation2 + $0x48] sm:$0xff]
      %v1002 = vld [vmem:[#allocation2 + $0x50] sm:$0xff]
      %v1003 = vld [vmem:[#allocation2 + $0x58] sm:$0xff]
      %v1004 = vld [vmem:[#allocation2 + $0x60] sm:$0xff]
      %v1005 = vld [vmem:[#allocation2 + $0x68] sm:$0xff]
      %v1006 = vld [vmem:[#allocation2 + $0x70] sm:$0xff]
      %v1007 = vld [vmem:[#allocation2 + $0x78] sm:$0xff]
      %v1008 = vld [vmem:[#allocation2 + $0x80] sm:$0xff]
      %v1009 = vld [vmem:[#allocation2 + $0x88] sm:$0xff]
      %v1010 = vld [vmem:[#allocation2 + $0x90] sm:$0xff]
      %v1011 = vld [vmem:[#allocation2 + $0x98] sm:$0xff]
      %v1012 = vld [vmem:[#allocation2 + $0xa0] sm:$0xff]
      %v1013 = vld [vmem:[#allocation2 + $0xa8] sm:$0xff]
      %v1014 = vld [vmem:[#allocation2 + $0xb0] sm:$0xff]
      %v1015 = vld [vmem:[#allocation2 + $0xb8] sm:$0xff]
      %v1016 = vld [vmem:[#allocation2 + $0xc0] sm:$0xff]
      %v1017 = vld [vmem:[#allocation2 + $0xc8] sm:$0xff]
      %v1018 = vld [vmem:[#allocation2 + $0xd0] sm:$0xff]
      %v1019 = vld [vmem:[#allocation2 + $0xd8] sm:$0xff]
      %v1020 = vld [vmem:[#allocation2 + $0xe0] sm:$0xff]
      %v1021 = vld [vmem:[#allocation2 + $0xe8] sm:$0xff]
      %v1022 = vld [vmem:[#allocation2 + $0xf0] sm:$0xff]
      %v1023 = vld [vmem:[#allocation2 + $0xf8] sm:$0xff]
      %v1024 = vld [vmem:[#allocation2 + $0x100] sm:$0xff]
      %v1025 = vld [vmem:[#allocation2 + $0x108] sm:$0xff]
      %v1026 = vld [vmem:[#allocation2 + $0x110] sm:$0xff]
      %v1027 = vld [vmem:[#allocation2 + $0x118] sm:$0xff]
      %v1028 = vld [vmem:[#allocation2 + $0x120] sm:$0xff]
      %v1029 = vld [vmem:[#allocation2 + $0x128] sm:$0xff]
      %v1030 = vld [vmem:[#allocation2 + $0x130] sm:$0xff]
      %v1031 = vld [vmem:[#allocation2 + $0x138] sm:$0xff]
      %v1032 = vld [vmem:[#allocation2 + $0x140] sm:$0xff]
      %v1033 = vld [vmem:[#allocation2 + $0x148] sm:$0xff]
      %v1034 = vld [vmem:[#allocation2 + $0x150] sm:$0xff]
      %v1035 = vld [vmem:[#allocation2 + $0x158] sm:$0xff]
      %v1036 = vld [vmem:[#allocation2 + $0x160] sm:$0x7]
      %v1037 = vld [vmem:[#allocation2 + $0x168] sm:$0x7]
      %v1038 = vmul.f32 %v876, %v992
      %v1039 = vmul.f32 %v878, %v993
      %v1040 = vmul.f32 %v880, %v994
      %v1041 = vmul.f32 %v882, %v995
      %v1042 = vmul.f32 %v886, %v996
      %v1043 = vmul.f32 %v888, %v997
      %v1044 = vmul.f32 %v890, %v998
      %v1045 = vmul.f32 %v892, %v999
      %v1046 = vmul.f32 %v896, %v1000
      %v1047 = vmul.f32 %v898, %v1001
      %v1048 = vmul.f32 %v900, %v1002
      %v1049 = vmul.f32 %v902, %v1003
      %v1050 = vmul.f32 %v906, %v1004
      %v1051 = vmul.f32 %v908, %v1005
      %v1052 = vmul.f32 %v910, %v1006
      %v1053 = vmul.f32 %v912, %v1007
      %v1054 = vmul.f32 %v916, %v1008
      %v1055 = vmul.f32 %v918, %v1009
      %v1056 = vmul.f32 %v920, %v1010
      %v1057 = vmul.f32 %v922, %v1011
      %v1058 = vmul.f32 %v926, %v1012
      %v1059 = vmul.f32 %v928, %v1013
      %v1060 = vmul.f32 %v930, %v1014
      %v1061 = vmul.f32 %v932, %v1015
      %v1062 = vmul.f32 %v936, %v1016
      %v1063 = vmul.f32 %v938, %v1017
      %v1064 = vmul.f32 %v940, %v1018
      %v1065 = vmul.f32 %v942, %v1019
      %v1066 = vmul.f32 %v946, %v1020
      %v1067 = vmul.f32 %v948, %v1021
      %v1068 = vmul.f32 %v950, %v1022
      %v1069 = vmul.f32 %v952, %v1023
      %v1070 = vmul.f32 %v956, %v1024
      %v1071 = vmul.f32 %v958, %v1025
      %v1072 = vmul.f32 %v960, %v1026
      %v1073 = vmul.f32 %v962, %v1027
      %v1074 = vmul.f32 %v966, %v1028
      %v1075 = vmul.f32 %v968, %v1029
      %v1076 = vmul.f32 %v970, %v1030
      %v1077 = vmul.f32 %v972, %v1031
      %v1078 = vmul.f32 %v976, %v1032
      %v1079 = vmul.f32 %v978, %v1033
      %v1080 = vmul.f32 %v980, %v1034
      %v1081 = vmul.f32 %v982, %v1035
      %v1082 = vmul.f32 %v986, %v1036
      %v1083 = vmul.f32 %v988, %v1037
      %v1084 = vsel %vm530, %v1039, -inf
      %v1085 = vmax.f32 %v1038, %v1084
      %1086 = vmax.xlane.f32.xlu0 %v1085
      %v1087 = vpop.xlane.xlu0 %1086
      %v1088 = vsel %vm530, %v1041, -inf
      %v1089 = vmax.f32 %v1040, %v1088
      %1090 = vmax.xlane.f32.xlu0 %v1089
      %v1091 = vpop.xlane.xlu0 %1090
      %v1092 = vsel %vm530, %v1043, -inf
      %v1093 = vmax.f32 %v1042, %v1092
      %1094 = vmax.xlane.f32.xlu0 %v1093
      %v1095 = vpop.xlane.xlu0 %1094
      %v1096 = vsel %vm530, %v1045, -inf
      %v1097 = vmax.f32 %v1044, %v1096
      %1098 = vmax.xlane.f32.xlu0 %v1097
      %v1099 = vpop.xlane.xlu0 %1098
      %v1100 = vsel %vm530, %v1047, -inf
      %v1101 = vmax.f32 %v1046, %v1100
      %1102 = vmax.xlane.f32.xlu0 %v1101
      %v1103 = vpop.xlane.xlu0 %1102
      %v1104 = vsel %vm530, %v1049, -inf
      %v1105 = vmax.f32 %v1048, %v1104
      %1106 = vmax.xlane.f32.xlu0 %v1105
      %v1107 = vpop.xlane.xlu0 %1106
      %v1108 = vsel %vm530, %v1051, -inf
      %v1109 = vmax.f32 %v1050, %v1108
      %1110 = vmax.xlane.f32.xlu0 %v1109
      %v1111 = vpop.xlane.xlu0 %1110
      %v1112 = vsel %vm530, %v1053, -inf
      %v1113 = vmax.f32 %v1052, %v1112
      %1114 = vmax.xlane.f32.xlu0 %v1113
      %v1115 = vpop.xlane.xlu0 %1114
      %v1116 = vsel %vm530, %v1055, -inf
      %v1117 = vmax.f32 %v1054, %v1116
      %1118 = vmax.xlane.f32.xlu0 %v1117
      %v1119 = vpop.xlane.xlu0 %1118
      %v1120 = vsel %vm530, %v1057, -inf
      %v1121 = vmax.f32 %v1056, %v1120
      %1122 = vmax.xlane.f32.xlu0 %v1121
      %v1123 = vpop.xlane.xlu0 %1122
      %v1124 = vsel %vm530, %v1059, -inf
      %v1125 = vmax.f32 %v1058, %v1124
      %1126 = vmax.xlane.f32.xlu0 %v1125
      %v1127 = vpop.xlane.xlu0 %1126
      %v1128 = vsel %vm530, %v1061, -inf
      %v1129 = vmax.f32 %v1060, %v1128
      %1130 = vmax.xlane.f32.xlu0 %v1129
      %v1131 = vpop.xlane.xlu0 %1130
      %v1132 = vsel %vm530, %v1063, -inf
      %v1133 = vmax.f32 %v1062, %v1132
      %1134 = vmax.xlane.f32.xlu0 %v1133
      %v1135 = vpop.xlane.xlu0 %1134
      %v1136 = vsel %vm530, %v1065, -inf
      %v1137 = vmax.f32 %v1064, %v1136
      %1138 = vmax.xlane.f32.xlu0 %v1137
      %v1139 = vpop.xlane.xlu0 %1138
      %v1140 = vsel %vm530, %v1067, -inf
      %v1141 = vmax.f32 %v1066, %v1140
      %1142 = vmax.xlane.f32.xlu0 %v1141
      %v1143 = vpop.xlane.xlu0 %1142
      %v1144 = vsel %vm530, %v1069, -inf
      %v1145 = vmax.f32 %v1068, %v1144
      %1146 = vmax.xlane.f32.xlu0 %v1145
      %v1147 = vpop.xlane.xlu0 %1146
      %v1148 = vsel %vm530, %v1071, -inf
      %v1149 = vmax.f32 %v1070, %v1148
      %1150 = vmax.xlane.f32.xlu0 %v1149
      %v1151 = vpop.xlane.xlu0 %1150
      %v1152 = vsel %vm530, %v1073, -inf
      %v1153 = vmax.f32 %v1072, %v1152
      %1154 = vmax.xlane.f32.xlu0 %v1153
      %v1155 = vpop.xlane.xlu0 %1154
      %v1156 = vsel %vm530, %v1075, -inf
      %v1157 = vmax.f32 %v1074, %v1156
      %1158 = vmax.xlane.f32.xlu0 %v1157
      %v1159 = vpop.xlane.xlu0 %1158
      %v1160 = vsel %vm530, %v1077, -inf
      %v1161 = vmax.f32 %v1076, %v1160
      %1162 = vmax.xlane.f32.xlu0 %v1161
      %v1163 = vpop.xlane.xlu0 %1162
      %v1164 = vsel %vm530, %v1079, -inf
      %v1165 = vmax.f32 %v1078, %v1164
      %1166 = vmax.xlane.f32.xlu0 %v1165
      %v1167 = vpop.xlane.xlu0 %1166
      %v1168 = vsel %vm530, %v1081, -inf
      %v1169 = vmax.f32 %v1080, %v1168
      %1170 = vmax.xlane.f32.xlu0 %v1169
      %v1171 = vpop.xlane.xlu0 %1170
      %vm1172 = vcmask 1042432
      %v1173 = vsel %vm1172, %v1082, -inf
      %v1174 = vsel %vm575, %v1083, -inf
      %v1175 = vmax.f32 %v1173, %v1174
      %1176 = vmax.xlane.f32.xlu0 %v1175
      %v1177 = vpop.xlane.xlu0 %1176
      %v1178 = vsub.f32 %v1038, %v1087
      %v1179 = vsub.f32 %v1039, %v1087
      %v1180 = vsub.f32 %v1040, %v1091
      %v1181 = vsub.f32 %v1041, %v1091
      %v1182 = vsub.f32 %v1042, %v1095
      %v1183 = vsub.f32 %v1043, %v1095
      %v1184 = vsub.f32 %v1044, %v1099
      %v1185 = vsub.f32 %v1045, %v1099
      %v1186 = vsub.f32 %v1046, %v1103
      %v1187 = vsub.f32 %v1047, %v1103
      %v1188 = vsub.f32 %v1048, %v1107
      %v1189 = vsub.f32 %v1049, %v1107
      %v1190 = vsub.f32 %v1050, %v1111
      %v1191 = vsub.f32 %v1051, %v1111
      %v1192 = vsub.f32 %v1052, %v1115
      %v1193 = vsub.f32 %v1053, %v1115
      %v1194 = vsub.f32 %v1054, %v1119
      %v1195 = vsub.f32 %v1055, %v1119
      %v1196 = vsub.f32 %v1056, %v1123
      %v1197 = vsub.f32 %v1057, %v1123
      %v1198 = vsub.f32 %v1058, %v1127
      %v1199 = vsub.f32 %v1059, %v1127
      %v1200 = vsub.f32 %v1060, %v1131
      %v1201 = vsub.f32 %v1061, %v1131
      %v1202 = vsub.f32 %v1062, %v1135
      %v1203 = vsub.f32 %v1063, %v1135
      %v1204 = vsub.f32 %v1064, %v1139
      %v1205 = vsub.f32 %v1065, %v1139
      %v1206 = vsub.f32 %v1066, %v1143
      %v1207 = vsub.f32 %v1067, %v1143
      %v1208 = vsub.f32 %v1068, %v1147
      %v1209 = vsub.f32 %v1069, %v1147
      %v1210 = vsub.f32 %v1070, %v1151
      %v1211 = vsub.f32 %v1071, %v1151
      %v1212 = vsub.f32 %v1072, %v1155
      %v1213 = vsub.f32 %v1073, %v1155
      %v1214 = vsub.f32 %v1074, %v1159
      %v1215 = vsub.f32 %v1075, %v1159
      %v1216 = vsub.f32 %v1076, %v1163
      %v1217 = vsub.f32 %v1077, %v1163
      %v1218 = vsub.f32 %v1078, %v1167
      %v1219 = vsub.f32 %v1079, %v1167
      %v1220 = vsub.f32 %v1080, %v1171
      %v1221 = vsub.f32 %v1081, %v1171
      %v1222 = vsub.f32 %v1082, %v1177
      %v1223 = vsub.f32 %v1083, %v1177
      %v1224 = vmul.f32 %v1178, 1.442695
      %v1225 = vpow.pop %v1224
      %v1226 = vmul.f32 %v1179, 1.442695
      %v1227 = vpow.pop %v1226
      %v1228 = vmul.f32 %v1180, 1.442695
      %v1229 = vpow.pop %v1228
      %v1230 = vmul.f32 %v1181, 1.442695
      %v1231 = vpow.pop %v1230
      %v1232 = vmul.f32 %v1182, 1.442695
      %v1233 = vpow.pop %v1232
      %v1234 = vmul.f32 %v1183, 1.442695
      %v1235 = vpow.pop %v1234
      %v1236 = vmul.f32 %v1184, 1.442695
      %v1237 = vpow.pop %v1236
      %v1238 = vmul.f32 %v1185, 1.442695
      %v1239 = vpow.pop %v1238
      %v1240 = vmul.f32 %v1186, 1.442695
      %v1241 = vpow.pop %v1240
      %v1242 = vmul.f32 %v1187, 1.442695
      %v1243 = vpow.pop %v1242
      %v1244 = vmul.f32 %v1188, 1.442695
      %v1245 = vpow.pop %v1244
      %v1246 = vmul.f32 %v1189, 1.442695
      %v1247 = vpow.pop %v1246
      %v1248 = vmul.f32 %v1190, 1.442695
      %v1249 = vpow.pop %v1248
      %v1250 = vmul.f32 %v1191, 1.442695
      %v1251 = vpow.pop %v1250
      %v1252 = vmul.f32 %v1192, 1.442695
      %v1253 = vpow.pop %v1252
      %v1254 = vmul.f32 %v1193, 1.442695
      %v1255 = vpow.pop %v1254
      %v1256 = vmul.f32 %v1194, 1.442695
      %v1257 = vpow.pop %v1256
      %v1258 = vmul.f32 %v1195, 1.442695
      %v1259 = vpow.pop %v1258
      %v1260 = vmul.f32 %v1196, 1.442695
      %v1261 = vpow.pop %v1260
      %v1262 = vmul.f32 %v1197, 1.442695
      %v1263 = vpow.pop %v1262
      %v1264 = vmul.f32 %v1198, 1.442695
      %v1265 = vpow.pop %v1264
      %v1266 = vmul.f32 %v1199, 1.442695
      %v1267 = vpow.pop %v1266
      %v1268 = vmul.f32 %v1200, 1.442695
      %v1269 = vpow.pop %v1268
      %v1270 = vmul.f32 %v1201, 1.442695
      %v1271 = vpow.pop %v1270
      %v1272 = vmul.f32 %v1202, 1.442695
      %v1273 = vpow.pop %v1272
      %v1274 = vmul.f32 %v1203, 1.442695
      %v1275 = vpow.pop %v1274
      %v1276 = vmul.f32 %v1204, 1.442695
      %v1277 = vpow.pop %v1276
      %v1278 = vmul.f32 %v1205, 1.442695
      %v1279 = vpow.pop %v1278
      %v1280 = vmul.f32 %v1206, 1.442695
      %v1281 = vpow.pop %v1280
      %v1282 = vmul.f32 %v1207, 1.442695
      %v1283 = vpow.pop %v1282
      %v1284 = vmul.f32 %v1208, 1.442695
      %v1285 = vpow.pop %v1284
      %v1286 = vmul.f32 %v1209, 1.442695
      %v1287 = vpow.pop %v1286
      %v1288 = vmul.f32 %v1210, 1.442695
      %v1289 = vpow.pop %v1288
      %v1290 = vmul.f32 %v1211, 1.442695
      %v1291 = vpow.pop %v1290
      %v1292 = vmul.f32 %v1212, 1.442695
      %v1293 = vpow.pop %v1292
      %v1294 = vmul.f32 %v1213, 1.442695
      %v1295 = vpow.pop %v1294
      %v1296 = vmul.f32 %v1214, 1.442695
      %v1297 = vpow.pop %v1296
      %v1298 = vmul.f32 %v1215, 1.442695
      %v1299 = vpow.pop %v1298
      %v1300 = vmul.f32 %v1216, 1.442695
      %v1301 = vpow.pop %v1300
      %v1302 = vmul.f32 %v1217, 1.442695
      %v1303 = vpow.pop %v1302
      %v1304 = vmul.f32 %v1218, 1.442695
      %v1305 = vpow.pop %v1304
      %v1306 = vmul.f32 %v1219, 1.442695
      %v1307 = vpow.pop %v1306
      %v1308 = vmul.f32 %v1220, 1.442695
      %v1309 = vpow.pop %v1308
      %v1310 = vmul.f32 %v1221, 1.442695
      %v1311 = vpow.pop %v1310
      %v1312 = vmul.f32 %v1222, 1.442695
      %v1313 = vpow.pop %v1312
      %v1314 = vmul.f32 %v1223, 1.442695
      %v1315 = vpow.pop %v1314
      %v1316 = vsel %vm530, %v1227, 0.0
      %v1317 = vadd.f32 %v1225, %v1316
      %1318 = vadd.xlane.f32.xlu0 %v1317
      %v1319 = vpop.xlane.xlu0 %1318
      %v1320 = vsel %vm530, %v1231, 0.0
      %v1321 = vadd.f32 %v1229, %v1320
      %1322 = vadd.xlane.f32.xlu0 %v1321
      %v1323 = vpop.xlane.xlu0 %1322
      %v1324 = vsel %vm530, %v1235, 0.0
      %v1325 = vadd.f32 %v1233, %v1324
      %1326 = vadd.xlane.f32.xlu0 %v1325
      %v1327 = vpop.xlane.xlu0 %1326
      %v1328 = vsel %vm530, %v1239, 0.0
      %v1329 = vadd.f32 %v1237, %v1328
      %1330 = vadd.xlane.f32.xlu0 %v1329
      %v1331 = vpop.xlane.xlu0 %1330
      %v1332 = vsel %vm530, %v1243, 0.0
      %v1333 = vadd.f32 %v1241, %v1332
      %1334 = vadd.xlane.f32.xlu0 %v1333
      %v1335 = vpop.xlane.xlu0 %1334
      %v1336 = vsel %vm530, %v1247, 0.0
      %v1337 = vadd.f32 %v1245, %v1336
      %1338 = vadd.xlane.f32.xlu0 %v1337
      %v1339 = vpop.xlane.xlu0 %1338
      %v1340 = vsel %vm530, %v1251, 0.0
      %v1341 = vadd.f32 %v1249, %v1340
      %1342 = vadd.xlane.f32.xlu0 %v1341
      %v1343 = vpop.xlane.xlu0 %1342
      %v1344 = vsel %vm530, %v1255, 0.0
      %v1345 = vadd.f32 %v1253, %v1344
      %1346 = vadd.xlane.f32.xlu0 %v1345
      %v1347 = vpop.xlane.xlu0 %1346
      %v1348 = vsel %vm530, %v1259, 0.0
      %v1349 = vadd.f32 %v1257, %v1348
      %1350 = vadd.xlane.f32.xlu0 %v1349
      %v1351 = vpop.xlane.xlu0 %1350
      %v1352 = vsel %vm530, %v1263, 0.0
      %v1353 = vadd.f32 %v1261, %v1352
      %1354 = vadd.xlane.f32.xlu0 %v1353
      %v1355 = vpop.xlane.xlu0 %1354
      %v1356 = vsel %vm530, %v1267, 0.0
      %v1357 = vadd.f32 %v1265, %v1356
      %1358 = vadd.xlane.f32.xlu0 %v1357
      %v1359 = vpop.xlane.xlu0 %1358
      %v1360 = vsel %vm530, %v1271, 0.0
      %v1361 = vadd.f32 %v1269, %v1360
      %1362 = vadd.xlane.f32.xlu0 %v1361
      %v1363 = vpop.xlane.xlu0 %1362
      %v1364 = vsel %vm530, %v1275, 0.0
      %v1365 = vadd.f32 %v1273, %v1364
      %1366 = vadd.xlane.f32.xlu0 %v1365
      %v1367 = vpop.xlane.xlu0 %1366
      %v1368 = vsel %vm530, %v1279, 0.0
      %v1369 = vadd.f32 %v1277, %v1368
      %1370 = vadd.xlane.f32.xlu0 %v1369
      %v1371 = vpop.xlane.xlu0 %1370
      %v1372 = vsel %vm530, %v1283, 0.0
      %v1373 = vadd.f32 %v1281, %v1372
      %1374 = vadd.xlane.f32.xlu0 %v1373
      %v1375 = vpop.xlane.xlu0 %1374
      %v1376 = vsel %vm530, %v1287, 0.0
      %v1377 = vadd.f32 %v1285, %v1376
      %1378 = vadd.xlane.f32.xlu0 %v1377
      %v1379 = vpop.xlane.xlu0 %1378
      %v1380 = vsel %vm530, %v1291, 0.0
      %v1381 = vadd.f32 %v1289, %v1380
      %1382 = vadd.xlane.f32.xlu0 %v1381
      %v1383 = vpop.xlane.xlu0 %1382
      %v1384 = vsel %vm530, %v1295, 0.0
      %v1385 = vadd.f32 %v1293, %v1384
      %1386 = vadd.xlane.f32.xlu0 %v1385
      %v1387 = vpop.xlane.xlu0 %1386
      %v1388 = vsel %vm530, %v1299, 0.0
      %v1389 = vadd.f32 %v1297, %v1388
      %1390 = vadd.xlane.f32.xlu0 %v1389
      %v1391 = vpop.xlane.xlu0 %1390
      %v1392 = vsel %vm530, %v1303, 0.0
      %v1393 = vadd.f32 %v1301, %v1392
      %1394 = vadd.xlane.f32.xlu0 %v1393
      %v1395 = vpop.xlane.xlu0 %1394
      %v1396 = vsel %vm530, %v1307, 0.0
      %v1397 = vadd.f32 %v1305, %v1396
      %1398 = vadd.xlane.f32.xlu0 %v1397
      %v1399 = vpop.xlane.xlu0 %1398
      %v1400 = vsel %vm530, %v1311, 0.0
      %v1401 = vadd.f32 %v1309, %v1400
      %1402 = vadd.xlane.f32.xlu0 %v1401
      %v1403 = vpop.xlane.xlu0 %1402
      %v1404 = vsel %vm1172, %v1313, 0.0
      %v1405 = vsel %vm575, %v1315, 0.0
      %v1406 = vadd.f32 %v1404, %v1405
      %1407 = vadd.xlane.f32.xlu0 %v1406
      %v1408 = vpop.xlane.xlu0 %1407
      %v1409 = vpack.c.bf16 %v1229, %v1225
      %v1410 = vpack.c.bf16 %v1231, %v1227
      %v1411 = vpack.c.bf16 %v1237, %v1233
      %v1412 = vpack.c.bf16 %v1239, %v1235
      %v1413 = vpack.c.bf16 %v1245, %v1241
      %v1414 = vpack.c.bf16 %v1247, %v1243
      %v1415 = vpack.c.bf16 %v1253, %v1249
      %v1416 = vpack.c.bf16 %v1255, %v1251
      %v1417 = vpack.c.bf16 %v1261, %v1257
      %v1418 = vpack.c.bf16 %v1263, %v1259
      %v1419 = vpack.c.bf16 %v1269, %v1265
      %v1420 = vpack.c.bf16 %v1271, %v1267
      %v1421 = vpack.c.bf16 %v1277, %v1273
      %v1422 = vpack.c.bf16 %v1279, %v1275
      %v1423 = vpack.c.bf16 %v1285, %v1281
      %v1424 = vpack.c.bf16 %v1287, %v1283
      %v1425 = vpack.c.bf16 %v1293, %v1289
      %v1426 = vpack.c.bf16 %v1295, %v1291
      %v1427 = vpack.c.bf16 %v1301, %v1297
      %v1428 = vpack.c.bf16 %v1303, %v1299
      %v1429 = vpack.c.bf16 %v1309, %v1305
      %v1430 = vpack.c.bf16 %v1311, %v1307
      %v1431 = vpack.c.bf16 %v1313, %v1313
      %v1432 = vpack.c.bf16 %v1315, %v1315
      %v1434 = vsel %vm530, %v1410, 0
      %v1437 = vsel %vm530, %v1412, 0
      %v1440 = vsel %vm530, %v1414, 0
      %v1443 = vsel %vm530, %v1416, 0
      %v1446 = vsel %vm530, %v1418, 0
      %v1449 = vsel %vm530, %v1420, 0
      %v1452 = vsel %vm530, %v1422, 0
      %v1455 = vsel %vm530, %v1424, 0
      %v1458 = vsel %vm530, %v1426, 0
      %v1461 = vsel %vm530, %v1428, 0
      %v1464 = vsel %vm530, %v1430, 0
      %v1467 = vsel %vm530, %v1432, 0
      %vm1469 = vcmask 1040384
      %vm1470 = vcmask 1041408
      %v1471 = vsel %vm1469, 4294967295, 65535
      %v1472 = vsel %vm1470, %v1471, 0
      %v1473 = vand.u32 %v611, %v1472
      %1475 = vmatprep.subr.bf16.mxu0 0
      %1476 = vmatpush1.bf16.msra.mxu0 %v600
      %1477 = vmatprep.subr.bf16.mxu0 0
      %1478 = vmatpush1.bf16.msra.mxu0 %v601
      %1479 = vmatprep.subr.bf16.mxu0 0
      %1480 = vmatpush1.bf16.msra.mxu0 %v602
      %1481 = vmatprep.subr.bf16.mxu0 0
      %1482 = vmatpush1.bf16.msra.mxu0 %v603
      %1483 = vmatprep.subr.bf16.mxu0 0
      %1484 = vmatpush1.bf16.msra.mxu0 %v604
      %1485 = vmatprep.subr.bf16.mxu0 0
      %1486 = vmatpush1.bf16.msra.mxu0 %v605
      %1487 = vmatprep.subr.bf16.mxu0 0
      %1488 = vmatpush1.bf16.msra.mxu0 %v606
      %1489 = vmatprep.subr.bf16.mxu0 0
      %1490 = vmatpush1.bf16.msra.mxu0 %v607
      %1491 = vmatprep.subr.bf16.mxu0 0
      %1492 = vmatpush1.bf16.msra.mxu0 %v608
      %1493 = vmatprep.subr.bf16.mxu0 0
      %1494 = vmatpush1.bf16.msra.mxu0 %v609
      %1495 = vmatprep.subr.bf16.mxu0 0
      %1496 = vmatpush1.bf16.msra.mxu0 %v610
      %1497 = vmatprep.subr.bf16.mxu0 0
      %1498 = vmatpush1.bf16.msra.mxu0 %v1473
      %1499 = vmatprep.subr.bf16.mxu0 0
      %1500 = vmatpush1.bf16.msra.mxu0 0
      %1501 = vmatprep.subr.bf16.mxu0 0
      %1502 = vmatpush1.bf16.msra.mxu0 0
      %1503 = vmatprep.subr.bf16.mxu0 0
      %1504 = vmatpush1.bf16.msra.mxu0 0
      %1505 = vmatprep.subr.bf16.mxu0 0
      %1506 = vmatpush1.bf16.msra.mxu0 0
      %1507 = vmatprep.mubr.bf16.mxu0 %v1434
      %1508 = vmatmul.mubr.bf16.gmra.mrb[0].mxu0 %v1409
      %v1509 = vpop.f32.mrb[0].mxu0
      %v1510 = vadd.f32 0.0, %v1509
      %v1511 = vpop.f32.mrb[0].mxu0
      %v1512 = vpop.f32.mrb[0].mxu0
      %v1513 = vadd.f32 0.0, %v1512
      %v1514 = vpop.f32.mrb[0].mxu0
      %1515 = vmatprep.mubr.bf16.mxu0 %v1437
      %1516 = vmatmul.mubr.bf16.gmra.mrb[0].mxu0 %v1411
      %v1517 = vpop.f32.mrb[0].mxu0
      %v1518 = vadd.f32 0.0, %v1517
      %v1519 = vpop.f32.mrb[0].mxu0
      %v1520 = vpop.f32.mrb[0].mxu0
      %v1521 = vadd.f32 0.0, %v1520
      %v1522 = vpop.f32.mrb[0].mxu0
      %1523 = vmatprep.mubr.bf16.mxu0 %v1440
      %1524 = vmatmul.mubr.bf16.gmra.mrb[0].mxu0 %v1413
      %v1525 = vpop.f32.mrb[0].mxu0
      %v1526 = vadd.f32 0.0, %v1525
      %v1527 = vpop.f32.mrb[0].mxu0
      %v1528 = vpop.f32.mrb[0].mxu0
      %v1529 = vadd.f32 0.0, %v1528
      %v1530 = vpop.f32.mrb[0].mxu0
      %1531 = vmatprep.mubr.bf16.mxu0 %v1443
      %1532 = vmatmul.mubr.bf16.gmra.mrb[0].mxu0 %v1415
      %v1533 = vpop.f32.mrb[0].mxu0
      %v1534 = vadd.f32 0.0, %v1533
      %v1535 = vpop.f32.mrb[0].mxu0
      %v1536 = vpop.f32.mrb[0].mxu0
      %v1537 = vadd.f32 0.0, %v1536
      %v1538 = vpop.f32.mrb[0].mxu0
      %1539 = vmatprep.mubr.bf16.mxu0 %v1446
      %1540 = vmatmul.mubr.bf16.gmra.mrb[0].mxu0 %v1417
      %v1541 = vpop.f32.mrb[0].mxu0
      %v1542 = vadd.f32 0.0, %v1541
      %v1543 = vpop.f32.mrb[0].mxu0
      %v1544 = vpop.f32.mrb[0].mxu0
      %v1545 = vadd.f32 0.0, %v1544
      %v1546 = vpop.f32.mrb[0].mxu0
      %1547 = vmatprep.mubr.bf16.mxu0 %v1449
      %1548 = vmatmul.mubr.bf16.gmra.mrb[0].mxu0 %v1419
      %v1549 = vpop.f32.mrb[0].mxu0
      %v1550 = vadd.f32 0.0, %v1549
      %v1551 = vpop.f32.mrb[0].mxu0
      %v1552 = vpop.f32.mrb[0].mxu0
      %v1553 = vadd.f32 0.0, %v1552
      %v1554 = vpop.f32.mrb[0].mxu0
      %1555 = vmatprep.mubr.bf16.mxu0 %v1452
      %1556 = vmatmul.mubr.bf16.gmra.mrb[0].mxu0 %v1421
      %v1557 = vpop.f32.mrb[0].mxu0
      %v1558 = vadd.f32 0.0, %v1557
      %v1559 = vpop.f32.mrb[0].mxu0
      %v1560 = vpop.f32.mrb[0].mxu0
      %v1561 = vadd.f32 0.0, %v1560
      %v1562 = vpop.f32.mrb[0].mxu0
      %1563 = vmatprep.mubr.bf16.mxu0 %v1455
      %1564 = vmatmul.mubr.bf16.gmra.mrb[0].mxu0 %v1423
      %v1565 = vpop.f32.mrb[0].mxu0
      %v1566 = vadd.f32 0.0, %v1565
      %v1567 = vpop.f32.mrb[0].mxu0
      %v1568 = vpop.f32.mrb[0].mxu0
      %v1569 = vadd.f32 0.0, %v1568
      %v1570 = vpop.f32.mrb[0].mxu0
      %1571 = vmatprep.mubr.bf16.mxu0 %v1458
      %1572 = vmatmul.mubr.bf16.gmra.mrb[0].mxu0 %v1425
      %v1573 = vpop.f32.mrb[0].mxu0
      %v1574 = vadd.f32 0.0, %v1573
      %v1575 = vpop.f32.mrb[0].mxu0
      %v1576 = vpop.f32.mrb[0].mxu0
      %v1577 = vadd.f32 0.0, %v1576
      %v1578 = vpop.f32.mrb[0].mxu0
      %1579 = vmatprep.mubr.bf16.mxu0 %v1461
      %1580 = vmatmul.mubr.bf16.gmra.mrb[0].mxu0 %v1427
      %v1581 = vpop.f32.mrb[0].mxu0
      %v1582 = vadd.f32 0.0, %v1581
      %v1583 = vpop.f32.mrb[0].mxu0
      %v1584 = vpop.f32.mrb[0].mxu0
      %v1585 = vadd.f32 0.0, %v1584
      %v1586 = vpop.f32.mrb[0].mxu0
      %1587 = vmatprep.mubr.bf16.mxu0 %v1464
      %1588 = vmatmul.mubr.bf16.gmra.mrb[0].mxu0 %v1429
      %v1589 = vpop.f32.mrb[0].mxu0
      %v1590 = vadd.f32 0.0, %v1589
      %v1591 = vpop.f32.mrb[0].mxu0
      %v1592 = vpop.f32.mrb[0].mxu0
      %v1593 = vadd.f32 0.0, %v1592
      %v1594 = vpop.f32.mrb[0].mxu0
      %1595 = vmatprep.mubr.bf16.mxu0 %v1467
      %1596 = vmatmul.mubr.bf16.gmra.mrb[0].mxu0 %v1431
      %v1597 = vpop.f32.mrb[0].mxu0
      %v1598 = vadd.f32 0.0, %v1597
      %v1599 = vpop.f32.mrb[0].mxu0
      %v1600 = vpop.f32.mrb[0].mxu0
      %v1601 = vpop.f32.mrb[0].mxu0
      %1602 = vdwg.mxu0
      %v1603 = vrcp.pop %v1319
      %v1604 = vmul.f32 %v1510, %v1603
      %v1605 = vrcp.pop %v1323
      %v1606 = vmul.f32 %v1513, %v1605
      %v1607 = vrcp.pop %v1327
      %v1608 = vmul.f32 %v1518, %v1607
      %v1609 = vrcp.pop %v1331
      %v1610 = vmul.f32 %v1521, %v1609
      %v1611 = vrcp.pop %v1335
      %v1612 = vmul.f32 %v1526, %v1611
      %v1613 = vrcp.pop %v1339
      %v1614 = vmul.f32 %v1529, %v1613
      %v1615 = vrcp.pop %v1343
      %v1616 = vmul.f32 %v1534, %v1615
      %v1617 = vrcp.pop %v1347
      %v1618 = vmul.f32 %v1537, %v1617
      %v1619 = vrcp.pop %v1351
      %v1620 = vmul.f32 %v1542, %v1619
      %v1621 = vrcp.pop %v1355
      %v1622 = vmul.f32 %v1545, %v1621
      %v1623 = vrcp.pop %v1359
      %v1624 = vmul.f32 %v1550, %v1623
      %v1625 = vrcp.pop %v1363
      %v1626 = vmul.f32 %v1553, %v1625
      %v1627 = vrcp.pop %v1367
      %v1628 = vmul.f32 %v1558, %v1627
      %v1629 = vrcp.pop %v1371
      %v1630 = vmul.f32 %v1561, %v1629
      %v1631 = vrcp.pop %v1375
      %v1632 = vmul.f32 %v1566, %v1631
      %v1633 = vrcp.pop %v1379
      %v1634 = vmul.f32 %v1569, %v1633
      %v1635 = vrcp.pop %v1383
      %v1636 = vmul.f32 %v1574, %v1635
      %v1637 = vrcp.pop %v1387
      %v1638 = vmul.f32 %v1577, %v1637
      %v1639 = vrcp.pop %v1391
      %v1640 = vmul.f32 %v1582, %v1639
      %v1641 = vrcp.pop %v1395
      %v1642 = vmul.f32 %v1585, %v1641
      %v1643 = vrcp.pop %v1399
      %v1644 = vmul.f32 %v1590, %v1643
      %v1645 = vrcp.pop %v1403
      %v1646 = vmul.f32 %v1593, %v1645
      %v1647 = vrcp.pop %v1408
      %v1648 = vmul.f32 %v1598, %v1647
      %v1649 = vpack.c.bf16 %v1606, %v1604
      %v1650 = vpack.c.bf16 %v1610, %v1608
      %v1651 = vpack.c.bf16 %v1614, %v1612
      %v1652 = vpack.c.bf16 %v1618, %v1616
      %v1653 = vpack.c.bf16 %v1622, %v1620
      %v1654 = vpack.c.bf16 %v1626, %v1624
      %v1655 = vpack.c.bf16 %v1630, %v1628
      %v1656 = vpack.c.bf16 %v1634, %v1632
      %v1657 = vpack.c.bf16 %v1638, %v1636
      %v1658 = vpack.c.bf16 %v1642, %v1640
      %v1659 = vpack.c.bf16 %v1646, %v1644
      %v1660 = vpack.c.bf16 %v1648, %v1648
      %v1661 = vld [vmem:[%s2] sm:$0xf]
      %v1662 = vld [vmem:[%s2 + $0x4] sm:$0xf]
      %v1663 = vld [vmem:[%s2 + $0x8] sm:$0xf]
      %v1664 = vld [vmem:[%s2 + $0xc] sm:$0xf]
      %s1665 = scalar_lea.vmem %s1, 16
      %v1666 = vld [vmem:[%s1665] sm:$0xf]
      %v1667 = vld [vmem:[%s1665 + $0x4] sm:$0xf]
      %v1668 = vld [vmem:[%s1665 + $0x8] sm:$0xf]
      %v1669 = vld [vmem:[%s1665 + $0xc] sm:$0xf]
      %v1674 = vunpack.c.l.b16 %v1666
      %v1675 = vunpack.c.l.b16 %v1667
      %v1676 = vunpack.c.l.b16 %v1668
      %v1677 = vunpack.c.l.b16 %v1669
      %v1678 = vpack.c.b16 %v1675, %v1674
      %v1679 = vpack.c.b16 %v1677, %v1676
      %1682 = vmatprep.subr.bf16.mxu0 0
      %1683 = vmatpush1.bf16.msra.mxu0 %v1678
      %1684 = vmatprep.subr.bf16.mxu0 0
      %1685 = vmatpush1.bf16.msra.mxu0 %v1679
      %1686 = vmatprep.subr.bf16.mxu0 0
      %1687 = vmatpush1.bf16.msra.mxu0 0
      %1688 = vmatprep.subr.bf16.mxu0 0
      %1689 = vmatpush1.bf16.msra.mxu0 0
      %1690 = vmatprep.subr.bf16.mxu0 0
      %1691 = vmatpush1.bf16.msra.mxu0 0
      %1692 = vmatprep.subr.bf16.mxu0 0
      %1693 = vmatpush1.bf16.msra.mxu0 0
      %1694 = vmatprep.subr.bf16.mxu0 0
      %1695 = vmatpush1.bf16.msra.mxu0 0
      %1696 = vmatprep.subr.bf16.mxu0 0
      %1697 = vmatpush1.bf16.msra.mxu0 0
      %1698 = vmatprep.subr.bf16.mxu0 0
      %1699 = vmatpush1.bf16.msra.mxu0 0
      %1700 = vmatprep.subr.bf16.mxu0 0
      %1701 = vmatpush1.bf16.msra.mxu0 0
      %1702 = vmatprep.subr.bf16.mxu0 0
      %1703 = vmatpush1.bf16.msra.mxu0 0
      %1704 = vmatprep.subr.bf16.mxu0 0
      %1705 = vmatpush1.bf16.msra.mxu0 0
      %1706 = vmatprep.subr.bf16.mxu0 0
      %1707 = vmatpush1.bf16.msra.mxu0 0
      %1708 = vmatprep.subr.bf16.mxu0 0
      %1709 = vmatpush1.bf16.msra.mxu0 0
      %1710 = vmatprep.subr.bf16.mxu0 0
      %1711 = vmatpush1.bf16.msra.mxu0 0
      %1712 = vmatprep.subr.bf16.mxu0 0
      %1713 = vmatpush1.bf16.msra.mxu0 0
      %1714 = vmatprep.mubr.bf16.mxu0 0
      %1715 = vmatmul.mubr.bf16.gmra.mrb[0].mxu0 %v630
      %v1716 = vpop.f32.mrb[0].mxu0
      %v1717 = vadd.f32 0.0, %v1716
      %v1718 = vpop.f32.mrb[0].mxu0
      %v1719 = vpop.f32.mrb[0].mxu0
      %v1720 = vadd.f32 0.0, %v1719
      %v1721 = vpop.f32.mrb[0].mxu0
      %1722 = vmatprep.mubr.bf16.mxu0 0
      %1723 = vmatmul.mubr.bf16.gmra.mrb[0].mxu0 %v633
      %v1724 = vpop.f32.mrb[0].mxu0
      %v1725 = vadd.f32 0.0, %v1724
      %v1726 = vpop.f32.mrb[0].mxu0
      %v1727 = vpop.f32.mrb[0].mxu0
      %v1728 = vadd.f32 0.0, %v1727
      %v1729 = vpop.f32.mrb[0].mxu0
      %1730 = vmatprep.mubr.bf16.mxu0 0
      %1731 = vmatmul.mubr.bf16.gmra.mrb[0].mxu0 %v636
      %v1732 = vpop.f32.mrb[0].mxu0
      %v1733 = vadd.f32 0.0, %v1732
      %v1734 = vpop.f32.mrb[0].mxu0
      %v1735 = vpop.f32.mrb[0].mxu0
      %v1736 = vadd.f32 0.0, %v1735
      %v1737 = vpop.f32.mrb[0].mxu0
      %1738 = vmatprep.mubr.bf16.mxu0 0
      %1739 = vmatmul.mubr.bf16.gmra.mrb[0].mxu0 %v639
      %v1740 = vpop.f32.mrb[0].mxu0
      %v1741 = vadd.f32 0.0, %v1740
      %v1742 = vpop.f32.mrb[0].mxu0
      %v1743 = vpop.f32.mrb[0].mxu0
      %v1744 = vadd.f32 0.0, %v1743
      %v1745 = vpop.f32.mrb[0].mxu0
      %1746 = vmatprep.mubr.bf16.mxu0 0
      %1747 = vmatmul.mubr.bf16.gmra.mrb[0].mxu0 %v642
      %v1748 = vpop.f32.mrb[0].mxu0
      %v1749 = vadd.f32 0.0, %v1748
      %v1750 = vpop.f32.mrb[0].mxu0
      %v1751 = vpop.f32.mrb[0].mxu0
      %v1752 = vadd.f32 0.0, %v1751
      %v1753 = vpop.f32.mrb[0].mxu0
      %1754 = vmatprep.mubr.bf16.mxu0 0
      %1755 = vmatmul.mubr.bf16.gmra.mrb[0].mxu0 %v645
      %v1756 = vpop.f32.mrb[0].mxu0
      %v1757 = vadd.f32 0.0, %v1756
      %v1758 = vpop.f32.mrb[0].mxu0
      %v1759 = vpop.f32.mrb[0].mxu0
      %v1760 = vadd.f32 0.0, %v1759
      %v1761 = vpop.f32.mrb[0].mxu0
      %1762 = vmatprep.mubr.bf16.mxu0 0
      %1763 = vmatmul.mubr.bf16.gmra.mrb[0].mxu0 %v648
      %v1764 = vpop.f32.mrb[0].mxu0
      %v1765 = vadd.f32 0.0, %v1764
      %v1766 = vpop.f32.mrb[0].mxu0
      %v1767 = vpop.f32.mrb[0].mxu0
      %v1768 = vadd.f32 0.0, %v1767
      %v1769 = vpop.f32.mrb[0].mxu0
      %1770 = vmatprep.mubr.bf16.mxu0 0
      %1771 = vmatmul.mubr.bf16.gmra.mrb[0].mxu0 %v651
      %v1772 = vpop.f32.mrb[0].mxu0
      %v1773 = vadd.f32 0.0, %v1772
      %v1774 = vpop.f32.mrb[0].mxu0
      %v1775 = vpop.f32.mrb[0].mxu0
      %v1776 = vadd.f32 0.0, %v1775
      %v1777 = vpop.f32.mrb[0].mxu0
      %1778 = vmatprep.mubr.bf16.mxu0 0
      %1779 = vmatmul.mubr.bf16.gmra.mrb[0].mxu0 %v654
      %v1780 = vpop.f32.mrb[0].mxu0
      %v1781 = vadd.f32 0.0, %v1780
      %v1782 = vpop.f32.mrb[0].mxu0
      %v1783 = vpop.f32.mrb[0].mxu0
      %v1784 = vadd.f32 0.0, %v1783
      %v1785 = vpop.f32.mrb[0].mxu0
      %1786 = vmatprep.mubr.bf16.mxu0 0
      %1787 = vmatmul.mubr.bf16.gmra.mrb[0].mxu0 %v657
      %v1788 = vpop.f32.mrb[0].mxu0
      %v1789 = vadd.f32 0.0, %v1788
      %v1790 = vpop.f32.mrb[0].mxu0
      %v1791 = vpop.f32.mrb[0].mxu0
      %v1792 = vadd.f32 0.0, %v1791
      %v1793 = vpop.f32.mrb[0].mxu0
      %1794 = vmatprep.mubr.bf16.mxu0 0
      %1795 = vmatmul.mubr.bf16.gmra.mrb[0].mxu0 %v660
      %v1796 = vpop.f32.mrb[0].mxu0
      %v1797 = vadd.f32 0.0, %v1796
      %v1798 = vpop.f32.mrb[0].mxu0
      %v1799 = vpop.f32.mrb[0].mxu0
      %v1800 = vadd.f32 0.0, %v1799
      %v1801 = vpop.f32.mrb[0].mxu0
      %1802 = vmatprep.mubr.bf16.mxu0 0
      %1803 = vmatmul.mubr.bf16.gmra.mrb[0].mxu0 %v663
      %v1804 = vpop.f32.mrb[0].mxu0
      %v1805 = vadd.f32 0.0, %v1804
      %v1806 = vpop.f32.mrb[0].mxu0
      %v1807 = vpop.f32.mrb[0].mxu0
      %v1808 = vpop.f32.mrb[0].mxu0
      %1809 = vdwg.mxu0
      %v1810 = vpack.c.bf16 %v1720, %v1717
      %v1811 = vpack.c.bf16 %v1728, %v1725
      %v1812 = vpack.c.bf16 %v1736, %v1733
      %v1813 = vpack.c.bf16 %v1744, %v1741
      %v1814 = vpack.c.bf16 %v1752, %v1749
      %v1815 = vpack.c.bf16 %v1760, %v1757
      %v1816 = vpack.c.bf16 %v1768, %v1765
      %v1817 = vpack.c.bf16 %v1776, %v1773
      %v1818 = vpack.c.bf16 %v1784, %v1781
      %v1819 = vpack.c.bf16 %v1792, %v1789
      %v1820 = vpack.c.bf16 %v1800, %v1797
      %v1821 = vpack.c.bf16 %v1805, %v1805
      %v1823 = vsel %vm628, %v1810, 0
      %v1826 = vsel %vm628, %v1811, 0
      %v1829 = vsel %vm628, %v1812, 0
      %v1832 = vsel %vm628, %v1813, 0
      %v1835 = vsel %vm628, %v1814, 0
      %v1838 = vsel %vm628, %v1815, 0
      %v1841 = vsel %vm628, %v1816, 0
      %v1844 = vsel %vm628, %v1817, 0
      %v1847 = vsel %vm628, %v1818, 0
      %v1850 = vsel %vm628, %v1819, 0
      %v1853 = vsel %vm628, %v1820, 0
      %v1856 = vsel %vm628, %v1821, 0
      %1858 = vmatprep.subr.bf16.mxu0 0
      %1859 = vmatpush1.bf16.xpose.msra.mxu0 %v630
      %1860 = vmatprep.subr.bf16.mxu0 0
      %1861 = vmatpush1.bf16.xpose.msra.mxu0 %v633
      %1862 = vmatprep.subr.bf16.mxu0 0
      %1863 = vmatpush1.bf16.xpose.msra.mxu0 %v636
      %1864 = vmatprep.subr.bf16.mxu0 0
      %1865 = vmatpush1.bf16.xpose.msra.mxu0 %v639
      %1866 = vmatprep.subr.bf16.mxu0 0
      %1867 = vmatpush1.bf16.xpose.msra.mxu0 %v642
      %1868 = vmatprep.subr.bf16.mxu0 0
      %1869 = vmatpush1.bf16.xpose.msra.mxu0 %v645
      %1870 = vmatprep.subr.bf16.mxu0 0
      %1871 = vmatpush1.bf16.xpose.msra.mxu0 %v648
      %1872 = vmatprep.subr.bf16.mxu0 0
      %1873 = vmatpush1.bf16.xpose.msra.mxu0 %v651
      %1874 = vmatprep.subr.bf16.mxu0 0
      %1875 = vmatpush1.bf16.xpose.msra.mxu0 %v654
      %1876 = vmatprep.subr.bf16.mxu0 0
      %1877 = vmatpush1.bf16.xpose.msra.mxu0 %v657
      %1878 = vmatprep.subr.bf16.mxu0 0
      %1879 = vmatpush1.bf16.xpose.msra.mxu0 %v660
      %1880 = vmatprep.subr.bf16.mxu0 0
      %1881 = vmatpush1.bf16.xpose.msra.mxu0 %v663
      %1882 = vmatprep.subr.bf16.mxu0 0
      %1883 = vmatpush1.bf16.xpose.msra.mxu0 0
      %1884 = vmatprep.subr.bf16.mxu0 0
      %1885 = vmatpush1.bf16.xpose.msra.mxu0 0
      %1886 = vmatprep.subr.bf16.mxu0 0
      %1887 = vmatpush1.bf16.xpose.msra.mxu0 0
      %1888 = vmatprep.subr.bf16.mxu0 0
      %1889 = vmatpush1.bf16.xpose.msra.mxu0 0
      %1890 = vmatprep.mubr.bf16.mxu0 0
      %1891 = vmatmul.mubr.bf16.gmra.mrb[0].mxu0 %v1823
      %v1892 = vpop.f32.mrb[0].mxu0
      %v1893 = vadd.f32 0.0, %v1892
      %v1894 = vpop.f32.mrb[0].mxu0
      %v1895 = vadd.f32 0.0, %v1894
      %v1896 = vpop.f32.mrb[0].mxu0
      %v1897 = vadd.f32 0.0, %v1896
      %v1898 = vpop.f32.mrb[0].mxu0
      %v1899 = vadd.f32 0.0, %v1898
      %1900 = vmatprep.mubr.bf16.mxu0 0
      %1901 = vmatmul.mubr.bf16.gmra.mrb[0].mxu0 %v1826
      %v1902 = vpop.f32.mrb[0].mxu0
      %v1903 = vadd.f32 0.0, %v1902
      %v1904 = vpop.f32.mrb[0].mxu0
      %v1905 = vadd.f32 0.0, %v1904
      %v1906 = vpop.f32.mrb[0].mxu0
      %v1907 = vadd.f32 0.0, %v1906
      %v1908 = vpop.f32.mrb[0].mxu0
      %v1909 = vadd.f32 0.0, %v1908
      %1910 = vmatprep.mubr.bf16.mxu0 0
      %1911 = vmatmul.mubr.bf16.gmra.mrb[0].mxu0 %v1829
      %v1912 = vpop.f32.mrb[0].mxu0
      %v1913 = vadd.f32 0.0, %v1912
      %v1914 = vpop.f32.mrb[0].mxu0
      %v1915 = vadd.f32 0.0, %v1914
      %v1916 = vpop.f32.mrb[0].mxu0
      %v1917 = vadd.f32 0.0, %v1916
      %v1918 = vpop.f32.mrb[0].mxu0
      %v1919 = vadd.f32 0.0, %v1918
      %1920 = vmatprep.mubr.bf16.mxu0 0
      %1921 = vmatmul.mubr.bf16.gmra.mrb[0].mxu0 %v1832
      %v1922 = vpop.f32.mrb[0].mxu0
      %v1923 = vadd.f32 0.0, %v1922
      %v1924 = vpop.f32.mrb[0].mxu0
      %v1925 = vadd.f32 0.0, %v1924
      %v1926 = vpop.f32.mrb[0].mxu0
      %v1927 = vadd.f32 0.0, %v1926
      %v1928 = vpop.f32.mrb[0].mxu0
      %v1929 = vadd.f32 0.0, %v1928
      %1930 = vmatprep.mubr.bf16.mxu0 0
      %1931 = vmatmul.mubr.bf16.gmra.mrb[0].mxu0 %v1835
      %v1932 = vpop.f32.mrb[0].mxu0
      %v1933 = vadd.f32 0.0, %v1932
      %v1934 = vpop.f32.mrb[0].mxu0
      %v1935 = vadd.f32 0.0, %v1934
      %v1936 = vpop.f32.mrb[0].mxu0
      %v1937 = vadd.f32 0.0, %v1936
      %v1938 = vpop.f32.mrb[0].mxu0
      %v1939 = vadd.f32 0.0, %v1938
      %1940 = vmatprep.mubr.bf16.mxu0 0
      %1941 = vmatmul.mubr.bf16.gmra.mrb[0].mxu0 %v1838
      %v1942 = vpop.f32.mrb[0].mxu0
      %v1943 = vadd.f32 0.0, %v1942
      %v1944 = vpop.f32.mrb[0].mxu0
      %v1945 = vadd.f32 0.0, %v1944
      %v1946 = vpop.f32.mrb[0].mxu0
      %v1947 = vadd.f32 0.0, %v1946
      %v1948 = vpop.f32.mrb[0].mxu0
      %v1949 = vadd.f32 0.0, %v1948
      %1950 = vmatprep.mubr.bf16.mxu0 0
      %1951 = vmatmul.mubr.bf16.gmra.mrb[0].mxu0 %v1841
      %v1952 = vpop.f32.mrb[0].mxu0
      %v1953 = vadd.f32 0.0, %v1952
      %v1954 = vpop.f32.mrb[0].mxu0
      %v1955 = vadd.f32 0.0, %v1954
      %v1956 = vpop.f32.mrb[0].mxu0
      %v1957 = vadd.f32 0.0, %v1956
      %v1958 = vpop.f32.mrb[0].mxu0
      %v1959 = vadd.f32 0.0, %v1958
      %1960 = vmatprep.mubr.bf16.mxu0 0
      %1961 = vmatmul.mubr.bf16.gmra.mrb[0].mxu0 %v1844
      %v1962 = vpop.f32.mrb[0].mxu0
      %v1963 = vadd.f32 0.0, %v1962
      %v1964 = vpop.f32.mrb[0].mxu0
      %v1965 = vadd.f32 0.0, %v1964
      %v1966 = vpop.f32.mrb[0].mxu0
      %v1967 = vadd.f32 0.0, %v1966
      %v1968 = vpop.f32.mrb[0].mxu0
      %v1969 = vadd.f32 0.0, %v1968
      %1970 = vmatprep.mubr.bf16.mxu0 0
      %1971 = vmatmul.mubr.bf16.gmra.mrb[0].mxu0 %v1847
      %v1972 = vpop.f32.mrb[0].mxu0
      %v1973 = vadd.f32 0.0, %v1972
      %v1974 = vpop.f32.mrb[0].mxu0
      %v1975 = vadd.f32 0.0, %v1974
      %v1976 = vpop.f32.mrb[0].mxu0
      %v1977 = vadd.f32 0.0, %v1976
      %v1978 = vpop.f32.mrb[0].mxu0
      %v1979 = vadd.f32 0.0, %v1978
      %1980 = vmatprep.mubr.bf16.mxu0 0
      %1981 = vmatmul.mubr.bf16.gmra.mrb[0].mxu0 %v1850
      %v1982 = vpop.f32.mrb[0].mxu0
      %v1983 = vadd.f32 0.0, %v1982
      %v1984 = vpop.f32.mrb[0].mxu0
      %v1985 = vadd.f32 0.0, %v1984
      %v1986 = vpop.f32.mrb[0].mxu0
      %v1987 = vadd.f32 0.0, %v1986
      %v1988 = vpop.f32.mrb[0].mxu0
      %v1989 = vadd.f32 0.0, %v1988
      %1990 = vmatprep.mubr.bf16.mxu0 0
      %1991 = vmatmul.mubr.bf16.gmra.mrb[0].mxu0 %v1853
      %v1992 = vpop.f32.mrb[0].mxu0
      %v1993 = vadd.f32 0.0, %v1992
      %v1994 = vpop.f32.mrb[0].mxu0
      %v1995 = vadd.f32 0.0, %v1994
      %v1996 = vpop.f32.mrb[0].mxu0
      %v1997 = vadd.f32 0.0, %v1996
      %v1998 = vpop.f32.mrb[0].mxu0
      %v1999 = vadd.f32 0.0, %v1998
      %2000 = vmatprep.mubr.bf16.mxu0 0
      %2001 = vmatmul.mubr.bf16.gmra.mrb[0].mxu0 %v1856
      %v2002 = vpop.f32.mrb[0].mxu0
      %v2003 = vadd.f32 0.0, %v2002
      %v2004 = vpop.f32.mrb[0].mxu0
      %v2005 = vadd.f32 0.0, %v2004
      %v2006 = vpop.f32.mrb[0].mxu0
      %v2007 = vpop.f32.mrb[0].mxu0
      %2008 = vdwg.mxu0
      %v2009 = vmul.f32 %v1893, %v992
      %v2010 = vmul.f32 %v1895, %v993
      %v2011 = vmul.f32 %v1897, %v994
      %v2012 = vmul.f32 %v1899, %v995
      %v2013 = vmul.f32 %v1903, %v996
      %v2014 = vmul.f32 %v1905, %v997
      %v2015 = vmul.f32 %v1907, %v998
      %v2016 = vmul.f32 %v1909, %v999
      %v2017 = vmul.f32 %v1913, %v1000
      %v2018 = vmul.f32 %v1915, %v1001
      %v2019 = vmul.f32 %v1917, %v1002
      %v2020 = vmul.f32 %v1919, %v1003
      %v2021 = vmul.f32 %v1923, %v1004
      %v2022 = vmul.f32 %v1925, %v1005
      %v2023 = vmul.f32 %v1927, %v1006
      %v2024 = vmul.f32 %v1929, %v1007
      %v2025 = vmul.f32 %v1933, %v1008
      %v2026 = vmul.f32 %v1935, %v1009
      %v2027 = vmul.f32 %v1937, %v1010
      %v2028 = vmul.f32 %v1939, %v1011
      %v2029 = vmul.f32 %v1943, %v1012
      %v2030 = vmul.f32 %v1945, %v1013
      %v2031 = vmul.f32 %v1947, %v1014
      %v2032 = vmul.f32 %v1949, %v1015
      %v2033 = vmul.f32 %v1953, %v1016
      %v2034 = vmul.f32 %v1955, %v1017
      %v2035 = vmul.f32 %v1957, %v1018
      %v2036 = vmul.f32 %v1959, %v1019
      %v2037 = vmul.f32 %v1963, %v1020
      %v2038 = vmul.f32 %v1965, %v1021
      %v2039 = vmul.f32 %v1967, %v1022
      %v2040 = vmul.f32 %v1969, %v1023
      %v2041 = vmul.f32 %v1973, %v1024
      %v2042 = vmul.f32 %v1975, %v1025
      %v2043 = vmul.f32 %v1977, %v1026
      %v2044 = vmul.f32 %v1979, %v1027
      %v2045 = vmul.f32 %v1983, %v1028
      %v2046 = vmul.f32 %v1985, %v1029
      %v2047 = vmul.f32 %v1987, %v1030
      %v2048 = vmul.f32 %v1989, %v1031
      %v2049 = vmul.f32 %v1993, %v1032
      %v2050 = vmul.f32 %v1995, %v1033
      %v2051 = vmul.f32 %v1997, %v1034
      %v2052 = vmul.f32 %v1999, %v1035
      %v2053 = vmul.f32 %v2003, %v1036
      %v2054 = vmul.f32 %v2005, %v1037
      %v2055 = vsel %vm530, %v2010, -inf
      %v2056 = vmax.f32 %v2009, %v2055
      %2057 = vmax.xlane.f32.xlu0 %v2056
      %v2058 = vpop.xlane.xlu0 %2057
      %v2059 = vsel %vm530, %v2012, -inf
      %v2060 = vmax.f32 %v2011, %v2059
      %2061 = vmax.xlane.f32.xlu0 %v2060
      %v2062 = vpop.xlane.xlu0 %2061
      %v2063 = vsel %vm530, %v2014, -inf
      %v2064 = vmax.f32 %v2013, %v2063
      %2065 = vmax.xlane.f32.xlu0 %v2064
      %v2066 = vpop.xlane.xlu0 %2065
      %v2067 = vsel %vm530, %v2016, -inf
      %v2068 = vmax.f32 %v2015, %v2067
      %2069 = vmax.xlane.f32.xlu0 %v2068
      %v2070 = vpop.xlane.xlu0 %2069
      %v2071 = vsel %vm530, %v2018, -inf
      %v2072 = vmax.f32 %v2017, %v2071
      %2073 = vmax.xlane.f32.xlu0 %v2072
      %v2074 = vpop.xlane.xlu0 %2073
      %v2075 = vsel %vm530, %v2020, -inf
      %v2076 = vmax.f32 %v2019, %v2075
      %2077 = vmax.xlane.f32.xlu0 %v2076
      %v2078 = vpop.xlane.xlu0 %2077
      %v2079 = vsel %vm530, %v2022, -inf
      %v2080 = vmax.f32 %v2021, %v2079
      %2081 = vmax.xlane.f32.xlu0 %v2080
      %v2082 = vpop.xlane.xlu0 %2081
      %v2083 = vsel %vm530, %v2024, -inf
      %v2084 = vmax.f32 %v2023, %v2083
      %2085 = vmax.xlane.f32.xlu0 %v2084
      %v2086 = vpop.xlane.xlu0 %2085
      %v2087 = vsel %vm530, %v2026, -inf
      %v2088 = vmax.f32 %v2025, %v2087
      %2089 = vmax.xlane.f32.xlu0 %v2088
      %v2090 = vpop.xlane.xlu0 %2089
      %v2091 = vsel %vm530, %v2028, -inf
      %v2092 = vmax.f32 %v2027, %v2091
      %2093 = vmax.xlane.f32.xlu0 %v2092
      %v2094 = vpop.xlane.xlu0 %2093
      %v2095 = vsel %vm530, %v2030, -inf
      %v2096 = vmax.f32 %v2029, %v2095
      %2097 = vmax.xlane.f32.xlu0 %v2096
      %v2098 = vpop.xlane.xlu0 %2097
      %v2099 = vsel %vm530, %v2032, -inf
      %v2100 = vmax.f32 %v2031, %v2099
      %2101 = vmax.xlane.f32.xlu0 %v2100
      %v2102 = vpop.xlane.xlu0 %2101
      %v2103 = vsel %vm530, %v2034, -inf
      %v2104 = vmax.f32 %v2033, %v2103
      %2105 = vmax.xlane.f32.xlu0 %v2104
      %v2106 = vpop.xlane.xlu0 %2105
      %v2107 = vsel %vm530, %v2036, -inf
      %v2108 = vmax.f32 %v2035, %v2107
      %2109 = vmax.xlane.f32.xlu0 %v2108
      %v2110 = vpop.xlane.xlu0 %2109
      %v2111 = vsel %vm530, %v2038, -inf
      %v2112 = vmax.f32 %v2037, %v2111
      %2113 = vmax.xlane.f32.xlu0 %v2112
      %v2114 = vpop.xlane.xlu0 %2113
      %v2115 = vsel %vm530, %v2040, -inf
      %v2116 = vmax.f32 %v2039, %v2115
      %2117 = vmax.xlane.f32.xlu0 %v2116
      %v2118 = vpop.xlane.xlu0 %2117
      %v2119 = vsel %vm530, %v2042, -inf
      %v2120 = vmax.f32 %v2041, %v2119
      %2121 = vmax.xlane.f32.xlu0 %v2120
      %v2122 = vpop.xlane.xlu0 %2121
      %v2123 = vsel %vm530, %v2044, -inf
      %v2124 = vmax.f32 %v2043, %v2123
      %2125 = vmax.xlane.f32.xlu0 %v2124
      %v2126 = vpop.xlane.xlu0 %2125
      %v2127 = vsel %vm530, %v2046, -inf
      %v2128 = vmax.f32 %v2045, %v2127
      %2129 = vmax.xlane.f32.xlu0 %v2128
      %v2130 = vpop.xlane.xlu0 %2129
      %v2131 = vsel %vm530, %v2048, -inf
      %v2132 = vmax.f32 %v2047, %v2131
      %2133 = vmax.xlane.f32.xlu0 %v2132
      %v2134 = vpop.xlane.xlu0 %2133
      %v2135 = vsel %vm530, %v2050, -inf
      %v2136 = vmax.f32 %v2049, %v2135
      %2137 = vmax.xlane.f32.xlu0 %v2136
      %v2138 = vpop.xlane.xlu0 %2137
      %v2139 = vsel %vm530, %v2052, -inf
      %v2140 = vmax.f32 %v2051, %v2139
      %2141 = vmax.xlane.f32.xlu0 %v2140
      %v2142 = vpop.xlane.xlu0 %2141
      %v2143 = vsel %vm1172, %v2053, -inf
      %v2144 = vsel %vm575, %v2054, -inf
      %v2145 = vmax.f32 %v2143, %v2144
      %2146 = vmax.xlane.f32.xlu0 %v2145
      %v2147 = vpop.xlane.xlu0 %2146
      %v2148 = vsub.f32 %v2009, %v2058
      %v2149 = vsub.f32 %v2010, %v2058
      %v2150 = vsub.f32 %v2011, %v2062
      %v2151 = vsub.f32 %v2012, %v2062
      %v2152 = vsub.f32 %v2013, %v2066
      %v2153 = vsub.f32 %v2014, %v2066
      %v2154 = vsub.f32 %v2015, %v2070
      %v2155 = vsub.f32 %v2016, %v2070
      %v2156 = vsub.f32 %v2017, %v2074
      %v2157 = vsub.f32 %v2018, %v2074
      %v2158 = vsub.f32 %v2019, %v2078
      %v2159 = vsub.f32 %v2020, %v2078
      %v2160 = vsub.f32 %v2021, %v2082
      %v2161 = vsub.f32 %v2022, %v2082
      %v2162 = vsub.f32 %v2023, %v2086
      %v2163 = vsub.f32 %v2024, %v2086
      %v2164 = vsub.f32 %v2025, %v2090
      %v2165 = vsub.f32 %v2026, %v2090
      %v2166 = vsub.f32 %v2027, %v2094
      %v2167 = vsub.f32 %v2028, %v2094
      %v2168 = vsub.f32 %v2029, %v2098
      %v2169 = vsub.f32 %v2030, %v2098
      %v2170 = vsub.f32 %v2031, %v2102
      %v2171 = vsub.f32 %v2032, %v2102
      %v2172 = vsub.f32 %v2033, %v2106
      %v2173 = vsub.f32 %v2034, %v2106
      %v2174 = vsub.f32 %v2035, %v2110
      %v2175 = vsub.f32 %v2036, %v2110
      %v2176 = vsub.f32 %v2037, %v2114
      %v2177 = vsub.f32 %v2038, %v2114
      %v2178 = vsub.f32 %v2039, %v2118
      %v2179 = vsub.f32 %v2040, %v2118
      %v2180 = vsub.f32 %v2041, %v2122
      %v2181 = vsub.f32 %v2042, %v2122
      %v2182 = vsub.f32 %v2043, %v2126
      %v2183 = vsub.f32 %v2044, %v2126
      %v2184 = vsub.f32 %v2045, %v2130
      %v2185 = vsub.f32 %v2046, %v2130
      %v2186 = vsub.f32 %v2047, %v2134
      %v2187 = vsub.f32 %v2048, %v2134
      %v2188 = vsub.f32 %v2049, %v2138
      %v2189 = vsub.f32 %v2050, %v2138
      %v2190 = vsub.f32 %v2051, %v2142
      %v2191 = vsub.f32 %v2052, %v2142
      %v2192 = vsub.f32 %v2053, %v2147
      %v2193 = vsub.f32 %v2054, %v2147
      %v2194 = vmul.f32 %v2148, 1.442695
      %v2195 = vpow.pop %v2194
      %v2196 = vmul.f32 %v2149, 1.442695
      %v2197 = vpow.pop %v2196
      %v2198 = vmul.f32 %v2150, 1.442695
      %v2199 = vpow.pop %v2198
      %v2200 = vmul.f32 %v2151, 1.442695
      %v2201 = vpow.pop %v2200
      %v2202 = vmul.f32 %v2152, 1.442695
      %v2203 = vpow.pop %v2202
      %v2204 = vmul.f32 %v2153, 1.442695
      %v2205 = vpow.pop %v2204
      %v2206 = vmul.f32 %v2154, 1.442695
      %v2207 = vpow.pop %v2206
      %v2208 = vmul.f32 %v2155, 1.442695
      %v2209 = vpow.pop %v2208
      %v2210 = vmul.f32 %v2156, 1.442695
      %v2211 = vpow.pop %v2210
      %v2212 = vmul.f32 %v2157, 1.442695
      %v2213 = vpow.pop %v2212
      %v2214 = vmul.f32 %v2158, 1.442695
      %v2215 = vpow.pop %v2214
      %v2216 = vmul.f32 %v2159, 1.442695
      %v2217 = vpow.pop %v2216
      %v2218 = vmul.f32 %v2160, 1.442695
      %v2219 = vpow.pop %v2218
      %v2220 = vmul.f32 %v2161, 1.442695
      %v2221 = vpow.pop %v2220
      %v2222 = vmul.f32 %v2162, 1.442695
      %v2223 = vpow.pop %v2222
      %v2224 = vmul.f32 %v2163, 1.442695
      %v2225 = vpow.pop %v2224
      %v2226 = vmul.f32 %v2164, 1.442695
      %v2227 = vpow.pop %v2226
      %v2228 = vmul.f32 %v2165, 1.442695
      %v2229 = vpow.pop %v2228
      %v2230 = vmul.f32 %v2166, 1.442695
      %v2231 = vpow.pop %v2230
      %v2232 = vmul.f32 %v2167, 1.442695
      %v2233 = vpow.pop %v2232
      %v2234 = vmul.f32 %v2168, 1.442695
      %v2235 = vpow.pop %v2234
      %v2236 = vmul.f32 %v2169, 1.442695
      %v2237 = vpow.pop %v2236
      %v2238 = vmul.f32 %v2170, 1.442695
      %v2239 = vpow.pop %v2238
      %v2240 = vmul.f32 %v2171, 1.442695
      %v2241 = vpow.pop %v2240
      %v2242 = vmul.f32 %v2172, 1.442695
      %v2243 = vpow.pop %v2242
      %v2244 = vmul.f32 %v2173, 1.442695
      %v2245 = vpow.pop %v2244
      %v2246 = vmul.f32 %v2174, 1.442695
      %v2247 = vpow.pop %v2246
      %v2248 = vmul.f32 %v2175, 1.442695
      %v2249 = vpow.pop %v2248
      %v2250 = vmul.f32 %v2176, 1.442695
      %v2251 = vpow.pop %v2250
      %v2252 = vmul.f32 %v2177, 1.442695
      %v2253 = vpow.pop %v2252
      %v2254 = vmul.f32 %v2178, 1.442695
      %v2255 = vpow.pop %v2254
      %v2256 = vmul.f32 %v2179, 1.442695
      %v2257 = vpow.pop %v2256
      %v2258 = vmul.f32 %v2180, 1.442695
      %v2259 = vpow.pop %v2258
      %v2260 = vmul.f32 %v2181, 1.442695
      %v2261 = vpow.pop %v2260
      %v2262 = vmul.f32 %v2182, 1.442695
      %v2263 = vpow.pop %v2262
      %v2264 = vmul.f32 %v2183, 1.442695
      %v2265 = vpow.pop %v2264
      %v2266 = vmul.f32 %v2184, 1.442695
      %v2267 = vpow.pop %v2266
      %v2268 = vmul.f32 %v2185, 1.442695
      %v2269 = vpow.pop %v2268
      %v2270 = vmul.f32 %v2186, 1.442695
      %v2271 = vpow.pop %v2270
      %v2272 = vmul.f32 %v2187, 1.442695
      %v2273 = vpow.pop %v2272
      %v2274 = vmul.f32 %v2188, 1.442695
      %v2275 = vpow.pop %v2274
      %v2276 = vmul.f32 %v2189, 1.442695
      %v2277 = vpow.pop %v2276
      %v2278 = vmul.f32 %v2190, 1.442695
      %v2279 = vpow.pop %v2278
      %v2280 = vmul.f32 %v2191, 1.442695
      %v2281 = vpow.pop %v2280
      %v2282 = vmul.f32 %v2192, 1.442695
      %v2283 = vpow.pop %v2282
      %v2284 = vmul.f32 %v2193, 1.442695
      %v2285 = vpow.pop %v2284
      %v2286 = vsel %vm530, %v2197, 0.0
      %v2287 = vadd.f32 %v2195, %v2286
      %2288 = vadd.xlane.f32.xlu0 %v2287
      %v2289 = vpop.xlane.xlu0 %2288
      %v2290 = vsel %vm530, %v2201, 0.0
      %v2291 = vadd.f32 %v2199, %v2290
      %2292 = vadd.xlane.f32.xlu0 %v2291
      %v2293 = vpop.xlane.xlu0 %2292
      %v2294 = vsel %vm530, %v2205, 0.0
      %v2295 = vadd.f32 %v2203, %v2294
      %2296 = vadd.xlane.f32.xlu0 %v2295
      %v2297 = vpop.xlane.xlu0 %2296
      %v2298 = vsel %vm530, %v2209, 0.0
      %v2299 = vadd.f32 %v2207, %v2298
      %2300 = vadd.xlane.f32.xlu0 %v2299
      %v2301 = vpop.xlane.xlu0 %2300
      %v2302 = vsel %vm530, %v2213, 0.0
      %v2303 = vadd.f32 %v2211, %v2302
      %2304 = vadd.xlane.f32.xlu0 %v2303
      %v2305 = vpop.xlane.xlu0 %2304
      %v2306 = vsel %vm530, %v2217, 0.0
      %v2307 = vadd.f32 %v2215, %v2306
      %2308 = vadd.xlane.f32.xlu0 %v2307
      %v2309 = vpop.xlane.xlu0 %2308
      %v2310 = vsel %vm530, %v2221, 0.0
      %v2311 = vadd.f32 %v2219, %v2310
      %2312 = vadd.xlane.f32.xlu0 %v2311
      %v2313 = vpop.xlane.xlu0 %2312
      %v2314 = vsel %vm530, %v2225, 0.0
      %v2315 = vadd.f32 %v2223, %v2314
      %2316 = vadd.xlane.f32.xlu0 %v2315
      %v2317 = vpop.xlane.xlu0 %2316
      %v2318 = vsel %vm530, %v2229, 0.0
      %v2319 = vadd.f32 %v2227, %v2318
      %2320 = vadd.xlane.f32.xlu0 %v2319
      %v2321 = vpop.xlane.xlu0 %2320
      %v2322 = vsel %vm530, %v2233, 0.0
      %v2323 = vadd.f32 %v2231, %v2322
      %2324 = vadd.xlane.f32.xlu0 %v2323
      %v2325 = vpop.xlane.xlu0 %2324
      %v2326 = vsel %vm530, %v2237, 0.0
      %v2327 = vadd.f32 %v2235, %v2326
      %2328 = vadd.xlane.f32.xlu0 %v2327
      %v2329 = vpop.xlane.xlu0 %2328
      %v2330 = vsel %vm530, %v2241, 0.0
      %v2331 = vadd.f32 %v2239, %v2330
      %2332 = vadd.xlane.f32.xlu0 %v2331
      %v2333 = vpop.xlane.xlu0 %2332
      %v2334 = vsel %vm530, %v2245, 0.0
      %v2335 = vadd.f32 %v2243, %v2334
      %2336 = vadd.xlane.f32.xlu0 %v2335
      %v2337 = vpop.xlane.xlu0 %2336
      %v2338 = vsel %vm530, %v2249, 0.0
      %v2339 = vadd.f32 %v2247, %v2338
      %2340 = vadd.xlane.f32.xlu0 %v2339
      %v2341 = vpop.xlane.xlu0 %2340
      %v2342 = vsel %vm530, %v2253, 0.0
      %v2343 = vadd.f32 %v2251, %v2342
      %2344 = vadd.xlane.f32.xlu0 %v2343
      %v2345 = vpop.xlane.xlu0 %2344
      %v2346 = vsel %vm530, %v2257, 0.0
      %v2347 = vadd.f32 %v2255, %v2346
      %2348 = vadd.xlane.f32.xlu0 %v2347
      %v2349 = vpop.xlane.xlu0 %2348
      %v2350 = vsel %vm530, %v2261, 0.0
      %v2351 = vadd.f32 %v2259, %v2350
      %2352 = vadd.xlane.f32.xlu0 %v2351
      %v2353 = vpop.xlane.xlu0 %2352
      %v2354 = vsel %vm530, %v2265, 0.0
      %v2355 = vadd.f32 %v2263, %v2354
      %2356 = vadd.xlane.f32.xlu0 %v2355
      %v2357 = vpop.xlane.xlu0 %2356
      %v2358 = vsel %vm530, %v2269, 0.0
      %v2359 = vadd.f32 %v2267, %v2358
      %2360 = vadd.xlane.f32.xlu0 %v2359
      %v2361 = vpop.xlane.xlu0 %2360
      %v2362 = vsel %vm530, %v2273, 0.0
      %v2363 = vadd.f32 %v2271, %v2362
      %2364 = vadd.xlane.f32.xlu0 %v2363
      %v2365 = vpop.xlane.xlu0 %2364
      %v2366 = vsel %vm530, %v2277, 0.0
      %v2367 = vadd.f32 %v2275, %v2366
      %2368 = vadd.xlane.f32.xlu0 %v2367
      %v2369 = vpop.xlane.xlu0 %2368
      %v2370 = vsel %vm530, %v2281, 0.0
      %v2371 = vadd.f32 %v2279, %v2370
      %2372 = vadd.xlane.f32.xlu0 %v2371
      %v2373 = vpop.xlane.xlu0 %2372
      %v2374 = vsel %vm1172, %v2283, 0.0
      %v2375 = vsel %vm575, %v2285, 0.0
      %v2376 = vadd.f32 %v2374, %v2375
      %2377 = vadd.xlane.f32.xlu0 %v2376
      %v2378 = vpop.xlane.xlu0 %2377
      %v2379 = vpack.c.bf16 %v2199, %v2195
      %v2380 = vpack.c.bf16 %v2201, %v2197
      %v2381 = vpack.c.bf16 %v2207, %v2203
      %v2382 = vpack.c.bf16 %v2209, %v2205
      %v2383 = vpack.c.bf16 %v2215, %v2211
      %v2384 = vpack.c.bf16 %v2217, %v2213
      %v2385 = vpack.c.bf16 %v2223, %v2219
      %v2386 = vpack.c.bf16 %v2225, %v2221
      %v2387 = vpack.c.bf16 %v2231, %v2227
      %v2388 = vpack.c.bf16 %v2233, %v2229
      %v2389 = vpack.c.bf16 %v2239, %v2235
      %v2390 = vpack.c.bf16 %v2241, %v2237
      %v2391 = vpack.c.bf16 %v2247, %v2243
      %v2392 = vpack.c.bf16 %v2249, %v2245
      %v2393 = vpack.c.bf16 %v2255, %v2251
      %v2394 = vpack.c.bf16 %v2257, %v2253
      %v2395 = vpack.c.bf16 %v2263, %v2259
      %v2396 = vpack.c.bf16 %v2265, %v2261
      %v2397 = vpack.c.bf16 %v2271, %v2267
      %v2398 = vpack.c.bf16 %v2273, %v2269
      %v2399 = vpack.c.bf16 %v2279, %v2275
      %v2400 = vpack.c.bf16 %v2281, %v2277
      %v2401 = vpack.c.bf16 %v2283, %v2283
      %v2402 = vpack.c.bf16 %v2285, %v2285
      %v2404 = vsel %vm530, %v2380, 0
      %v2407 = vsel %vm530, %v2382, 0
      %v2410 = vsel %vm530, %v2384, 0
      %v2413 = vsel %vm530, %v2386, 0
      %v2416 = vsel %vm530, %v2388, 0
      %v2419 = vsel %vm530, %v2390, 0
      %v2422 = vsel %vm530, %v2392, 0
      %v2425 = vsel %vm530, %v2394, 0
      %v2428 = vsel %vm530, %v2396, 0
      %v2431 = vsel %vm530, %v2398, 0
      %v2434 = vsel %vm530, %v2400, 0
      %v2437 = vsel %vm530, %v2402, 0
      %2439 = vmatprep.subr.bf16.mxu0 0
      %2440 = vmatpush1.bf16.msra.mxu0 %v600
      %2441 = vmatprep.subr.bf16.mxu0 0
      %2442 = vmatpush1.bf16.msra.mxu0 %v601
      %2443 = vmatprep.subr.bf16.mxu0 0
      %2444 = vmatpush1.bf16.msra.mxu0 %v602
      %2445 = vmatprep.subr.bf16.mxu0 0
      %2446 = vmatpush1.bf16.msra.mxu0 %v603
      %2447 = vmatprep.subr.bf16.mxu0 0
      %2448 = vmatpush1.bf16.msra.mxu0 %v604
      %2449 = vmatprep.subr.bf16.mxu0 0
      %2450 = vmatpush1.bf16.msra.mxu0 %v605
      %2451 = vmatprep.subr.bf16.mxu0 0
      %2452 = vmatpush1.bf16.msra.mxu0 %v606
      %2453 = vmatprep.subr.bf16.mxu0 0
      %2454 = vmatpush1.bf16.msra.mxu0 %v607
      %2455 = vmatprep.subr.bf16.mxu0 0
      %2456 = vmatpush1.bf16.msra.mxu0 %v608
      %2457 = vmatprep.subr.bf16.mxu0 0
      %2458 = vmatpush1.bf16.msra.mxu0 %v609
      %2459 = vmatprep.subr.bf16.mxu0 0
      %2460 = vmatpush1.bf16.msra.mxu0 %v610
      %2461 = vmatprep.subr.bf16.mxu0 0
      %2462 = vmatpush1.bf16.msra.mxu0 %v1473
      %2463 = vmatprep.subr.bf16.mxu0 0
      %2464 = vmatpush1.bf16.msra.mxu0 0
      %2465 = vmatprep.subr.bf16.mxu0 0
      %2466 = vmatpush1.bf16.msra.mxu0 0
      %2467 = vmatprep.subr.bf16.mxu0 0
      %2468 = vmatpush1.bf16.msra.mxu0 0
      %2469 = vmatprep.subr.bf16.mxu0 0
      %2470 = vmatpush1.bf16.msra.mxu0 0
      %2471 = vmatprep.mubr.bf16.mxu0 %v2404
      %2472 = vmatmul.mubr.bf16.gmra.mrb[0].mxu0 %v2379
      %v2473 = vpop.f32.mrb[0].mxu0
      %v2474 = vadd.f32 0.0, %v2473
      %v2475 = vpop.f32.mrb[0].mxu0
      %v2476 = vpop.f32.mrb[0].mxu0
      %v2477 = vadd.f32 0.0, %v2476
      %v2478 = vpop.f32.mrb[0].mxu0
      %2479 = vmatprep.mubr.bf16.mxu0 %v2407
      %2480 = vmatmul.mubr.bf16.gmra.mrb[0].mxu0 %v2381
      %v2481 = vpop.f32.mrb[0].mxu0
      %v2482 = vadd.f32 0.0, %v2481
      %v2483 = vpop.f32.mrb[0].mxu0
      %v2484 = vpop.f32.mrb[0].mxu0
      %v2485 = vadd.f32 0.0, %v2484
      %v2486 = vpop.f32.mrb[0].mxu0
      %2487 = vmatprep.mubr.bf16.mxu0 %v2410
      %2488 = vmatmul.mubr.bf16.gmra.mrb[0].mxu0 %v2383
      %v2489 = vpop.f32.mrb[0].mxu0
      %v2490 = vadd.f32 0.0, %v2489
      %v2491 = vpop.f32.mrb[0].mxu0
      %v2492 = vpop.f32.mrb[0].mxu0
      %v2493 = vadd.f32 0.0, %v2492
      %v2494 = vpop.f32.mrb[0].mxu0
      %2495 = vmatprep.mubr.bf16.mxu0 %v2413
      %2496 = vmatmul.mubr.bf16.gmra.mrb[0].mxu0 %v2385
      %v2497 = vpop.f32.mrb[0].mxu0
      %v2498 = vadd.f32 0.0, %v2497
      %v2499 = vpop.f32.mrb[0].mxu0
      %v2500 = vpop.f32.mrb[0].mxu0
      %v2501 = vadd.f32 0.0, %v2500
      %v2502 = vpop.f32.mrb[0].mxu0
      %2503 = vmatprep.mubr.bf16.mxu0 %v2416
      %2504 = vmatmul.mubr.bf16.gmra.mrb[0].mxu0 %v2387
      %v2505 = vpop.f32.mrb[0].mxu0
      %v2506 = vadd.f32 0.0, %v2505
      %v2507 = vpop.f32.mrb[0].mxu0
      %v2508 = vpop.f32.mrb[0].mxu0
      %v2509 = vadd.f32 0.0, %v2508
      %v2510 = vpop.f32.mrb[0].mxu0
      %2511 = vmatprep.mubr.bf16.mxu0 %v2419
      %2512 = vmatmul.mubr.bf16.gmra.mrb[0].mxu0 %v2389
      %v2513 = vpop.f32.mrb[0].mxu0
      %v2514 = vadd.f32 0.0, %v2513
      %v2515 = vpop.f32.mrb[0].mxu0
      %v2516 = vpop.f32.mrb[0].mxu0
      %v2517 = vadd.f32 0.0, %v2516
      %v2518 = vpop.f32.mrb[0].mxu0
      %2519 = vmatprep.mubr.bf16.mxu0 %v2422
      %2520 = vmatmul.mubr.bf16.gmra.mrb[0].mxu0 %v2391
      %v2521 = vpop.f32.mrb[0].mxu0
      %v2522 = vadd.f32 0.0, %v2521
      %v2523 = vpop.f32.mrb[0].mxu0
      %v2524 = vpop.f32.mrb[0].mxu0
      %v2525 = vadd.f32 0.0, %v2524
      %v2526 = vpop.f32.mrb[0].mxu0
      %2527 = vmatprep.mubr.bf16.mxu0 %v2425
      %2528 = vmatmul.mubr.bf16.gmra.mrb[0].mxu0 %v2393
      %v2529 = vpop.f32.mrb[0].mxu0
      %v2530 = vadd.f32 0.0, %v2529
      %v2531 = vpop.f32.mrb[0].mxu0
      %v2532 = vpop.f32.mrb[0].mxu0
      %v2533 = vadd.f32 0.0, %v2532
      %v2534 = vpop.f32.mrb[0].mxu0
      %2535 = vmatprep.mubr.bf16.mxu0 %v2428
      %2536 = vmatmul.mubr.bf16.gmra.mrb[0].mxu0 %v2395
      %v2537 = vpop.f32.mrb[0].mxu0
      %v2538 = vadd.f32 0.0, %v2537
      %v2539 = vpop.f32.mrb[0].mxu0
      %v2540 = vpop.f32.mrb[0].mxu0
      %v2541 = vadd.f32 0.0, %v2540
      %v2542 = vpop.f32.mrb[0].mxu0
      %2543 = vmatprep.mubr.bf16.mxu0 %v2431
      %2544 = vmatmul.mubr.bf16.gmra.mrb[0].mxu0 %v2397
      %v2545 = vpop.f32.mrb[0].mxu0
      %v2546 = vadd.f32 0.0, %v2545
      %v2547 = vpop.f32.mrb[0].mxu0
      %v2548 = vpop.f32.mrb[0].mxu0
      %v2549 = vadd.f32 0.0, %v2548
      %v2550 = vpop.f32.mrb[0].mxu0
      %2551 = vmatprep.mubr.bf16.mxu0 %v2434
      %2552 = vmatmul.mubr.bf16.gmra.mrb[0].mxu0 %v2399
      %v2553 = vpop.f32.mrb[0].mxu0
      %v2554 = vadd.f32 0.0, %v2553
      %v2555 = vpop.f32.mrb[0].mxu0
      %v2556 = vpop.f32.mrb[0].mxu0
      %v2557 = vadd.f32 0.0, %v2556
      %v2558 = vpop.f32.mrb[0].mxu0
      %2559 = vmatprep.mubr.bf16.mxu0 %v2437
      %2560 = vmatmul.mubr.bf16.gmra.mrb[0].mxu0 %v2401
      %v2561 = vpop.f32.mrb[0].mxu0
      %v2562 = vadd.f32 0.0, %v2561
      %v2563 = vpop.f32.mrb[0].mxu0
      %v2564 = vpop.f32.mrb[0].mxu0
      %v2565 = vpop.f32.mrb[0].mxu0
      %2566 = vdwg.mxu0
      %v2567 = vrcp.pop %v2289
      %v2568 = vmul.f32 %v2474, %v2567
      %v2569 = vrcp.pop %v2293
      %v2570 = vmul.f32 %v2477, %v2569
      %v2571 = vrcp.pop %v2297
      %v2572 = vmul.f32 %v2482, %v2571
      %v2573 = vrcp.pop %v2301
      %v2574 = vmul.f32 %v2485, %v2573
      %v2575 = vrcp.pop %v2305
      %v2576 = vmul.f32 %v2490, %v2575
      %v2577 = vrcp.pop %v2309
      %v2578 = vmul.f32 %v2493, %v2577
      %v2579 = vrcp.pop %v2313
      %v2580 = vmul.f32 %v2498, %v2579
      %v2581 = vrcp.pop %v2317
      %v2582 = vmul.f32 %v2501, %v2581
      %v2583 = vrcp.pop %v2321
      %v2584 = vmul.f32 %v2506, %v2583
      %v2585 = vrcp.pop %v2325
      %v2586 = vmul.f32 %v2509, %v2585
      %v2587 = vrcp.pop %v2329
      %v2588 = vmul.f32 %v2514, %v2587
      %v2589 = vrcp.pop %v2333
      %v2590 = vmul.f32 %v2517, %v2589
      %v2591 = vrcp.pop %v2337
      %v2592 = vmul.f32 %v2522, %v2591
      %v2593 = vrcp.pop %v2341
      %v2594 = vmul.f32 %v2525, %v2593
      %v2595 = vrcp.pop %v2345
      %v2596 = vmul.f32 %v2530, %v2595
      %v2597 = vrcp.pop %v2349
      %v2598 = vmul.f32 %v2533, %v2597
      %v2599 = vrcp.pop %v2353
      %v2600 = vmul.f32 %v2538, %v2599
      %v2601 = vrcp.pop %v2357
      %v2602 = vmul.f32 %v2541, %v2601
      %v2603 = vrcp.pop %v2361
      %v2604 = vmul.f32 %v2546, %v2603
      %v2605 = vrcp.pop %v2365
      %v2606 = vmul.f32 %v2549, %v2605
      %v2607 = vrcp.pop %v2369
      %v2608 = vmul.f32 %v2554, %v2607
      %v2609 = vrcp.pop %v2373
      %v2610 = vmul.f32 %v2557, %v2609
      %v2611 = vrcp.pop %v2378
      %v2612 = vmul.f32 %v2562, %v2611
      %v2613 = vpack.c.bf16 %v2570, %v2568
      %v2614 = vpack.c.bf16 %v2574, %v2572
      %v2615 = vpack.c.bf16 %v2578, %v2576
      %v2616 = vpack.c.bf16 %v2582, %v2580
      %v2617 = vpack.c.bf16 %v2586, %v2584
      %v2618 = vpack.c.bf16 %v2590, %v2588
      %v2619 = vpack.c.bf16 %v2594, %v2592
      %v2620 = vpack.c.bf16 %v2598, %v2596
      %v2621 = vpack.c.bf16 %v2602, %v2600
      %v2622 = vpack.c.bf16 %v2606, %v2604
      %v2623 = vpack.c.bf16 %v2610, %v2608
      %v2624 = vpack.c.bf16 %v2612, %v2612
      %s2625 = scalar_lea.vmem %s2, 16
      %v2626 = vld [vmem:[%s2625] sm:$0xf]
      %v2627 = vld [vmem:[%s2625 + $0x4] sm:$0xf]
      %v2628 = vld [vmem:[%s2625 + $0x8] sm:$0xf]
      %v2629 = vld [vmem:[%s2625 + $0xc] sm:$0xf]
      %v2634 = vunpack.c.l.b16 %v2626
      %v2635 = vunpack.c.l.b16 %v2627
      %v2636 = vunpack.c.l.b16 %v2628
      %v2637 = vunpack.c.l.b16 %v2629
      %v2638 = vpack.c.b16 %v2635, %v2634
      %v2639 = vpack.c.b16 %v2637, %v2636
      %v2643 = vsel %vm628, %v2613, 0
      %v2646 = vsel %vm628, %v2614, 0
      %v2649 = vsel %vm628, %v2615, 0
      %v2652 = vsel %vm628, %v2616, 0
      %v2655 = vsel %vm628, %v2617, 0
      %v2658 = vsel %vm628, %v2618, 0
      %v2661 = vsel %vm628, %v2619, 0
      %v2664 = vsel %vm628, %v2620, 0
      %v2667 = vsel %vm628, %v2621, 0
      %v2670 = vsel %vm628, %v2622, 0
      %v2673 = vsel %vm628, %v2623, 0
      %v2676 = vsel %vm628, %v2624, 0
      %2678 = vmatprep.subr.bf16.mxu0 0
      %2679 = vmatpush1.bf16.msra.mxu0 %v2638
      %2680 = vmatprep.subr.bf16.mxu0 0
      %2681 = vmatpush1.bf16.msra.mxu0 %v2639
      %2682 = vmatprep.subr.bf16.mxu0 0
      %2683 = vmatpush1.bf16.msra.mxu0 0
      %2684 = vmatprep.subr.bf16.mxu0 0
      %2685 = vmatpush1.bf16.msra.mxu0 0
      %2686 = vmatprep.subr.bf16.mxu0 0
      %2687 = vmatpush1.bf16.msra.mxu0 0
      %2688 = vmatprep.subr.bf16.mxu0 0
      %2689 = vmatpush1.bf16.msra.mxu0 0
      %2690 = vmatprep.subr.bf16.mxu0 0
      %2691 = vmatpush1.bf16.msra.mxu0 0
      %2692 = vmatprep.subr.bf16.mxu0 0
      %2693 = vmatpush1.bf16.msra.mxu0 0
      %2694 = vmatprep.subr.bf16.mxu0 0
      %2695 = vmatpush1.bf16.msra.mxu0 0
      %2696 = vmatprep.subr.bf16.mxu0 0
      %2697 = vmatpush1.bf16.msra.mxu0 0
      %2698 = vmatprep.subr.bf16.mxu0 0
      %2699 = vmatpush1.bf16.msra.mxu0 0
      %2700 = vmatprep.subr.bf16.mxu0 0
      %2701 = vmatpush1.bf16.msra.mxu0 0
      %2702 = vmatprep.subr.bf16.mxu0 0
      %2703 = vmatpush1.bf16.msra.mxu0 0
      %2704 = vmatprep.subr.bf16.mxu0 0
      %2705 = vmatpush1.bf16.msra.mxu0 0
      %2706 = vmatprep.subr.bf16.mxu0 0
      %2707 = vmatpush1.bf16.msra.mxu0 0
      %2708 = vmatprep.subr.bf16.mxu0 0
      %2709 = vmatpush1.bf16.msra.mxu0 0
      %2710 = vmatprep.mubr.bf16.mxu0 0
      %2711 = vmatmul.mubr.bf16.gmra.mrb[0].mxu0 %v2643
      %v2712 = vpop.f32.mrb[0].mxu0
      %v2713 = vadd.f32 0.0, %v2712
      %v2714 = vpop.f32.mrb[0].mxu0
      %v2715 = vpop.f32.mrb[0].mxu0
      %v2716 = vadd.f32 0.0, %v2715
      %v2717 = vpop.f32.mrb[0].mxu0
      %2718 = vmatprep.mubr.bf16.mxu0 0
      %2719 = vmatmul.mubr.bf16.gmra.mrb[0].mxu0 %v2646
      %v2720 = vpop.f32.mrb[0].mxu0
      %v2721 = vadd.f32 0.0, %v2720
      %v2722 = vpop.f32.mrb[0].mxu0
      %v2723 = vpop.f32.mrb[0].mxu0
      %v2724 = vadd.f32 0.0, %v2723
      %v2725 = vpop.f32.mrb[0].mxu0
      %2726 = vmatprep.mubr.bf16.mxu0 0
      %2727 = vmatmul.mubr.bf16.gmra.mrb[0].mxu0 %v2649
      %v2728 = vpop.f32.mrb[0].mxu0
      %v2729 = vadd.f32 0.0, %v2728
      %v2730 = vpop.f32.mrb[0].mxu0
      %v2731 = vpop.f32.mrb[0].mxu0
      %v2732 = vadd.f32 0.0, %v2731
      %v2733 = vpop.f32.mrb[0].mxu0
      %2734 = vmatprep.mubr.bf16.mxu0 0
      %2735 = vmatmul.mubr.bf16.gmra.mrb[0].mxu0 %v2652
      %v2736 = vpop.f32.mrb[0].mxu0
      %v2737 = vadd.f32 0.0, %v2736
      %v2738 = vpop.f32.mrb[0].mxu0
      %v2739 = vpop.f32.mrb[0].mxu0
      %v2740 = vadd.f32 0.0, %v2739
      %v2741 = vpop.f32.mrb[0].mxu0
      %2742 = vmatprep.mubr.bf16.mxu0 0
      %2743 = vmatmul.mubr.bf16.gmra.mrb[0].mxu0 %v2655
      %v2744 = vpop.f32.mrb[0].mxu0
      %v2745 = vadd.f32 0.0, %v2744
      %v2746 = vpop.f32.mrb[0].mxu0
      %v2747 = vpop.f32.mrb[0].mxu0
      %v2748 = vadd.f32 0.0, %v2747
      %v2749 = vpop.f32.mrb[0].mxu0
      %2750 = vmatprep.mubr.bf16.mxu0 0
      %2751 = vmatmul.mubr.bf16.gmra.mrb[0].mxu0 %v2658
      %v2752 = vpop.f32.mrb[0].mxu0
      %v2753 = vadd.f32 0.0, %v2752
      %v2754 = vpop.f32.mrb[0].mxu0
      %v2755 = vpop.f32.mrb[0].mxu0
      %v2756 = vadd.f32 0.0, %v2755
      %v2757 = vpop.f32.mrb[0].mxu0
      %2758 = vmatprep.mubr.bf16.mxu0 0
      %2759 = vmatmul.mubr.bf16.gmra.mrb[0].mxu0 %v2661
      %v2760 = vpop.f32.mrb[0].mxu0
      %v2761 = vadd.f32 0.0, %v2760
      %v2762 = vpop.f32.mrb[0].mxu0
      %v2763 = vpop.f32.mrb[0].mxu0
      %v2764 = vadd.f32 0.0, %v2763
      %v2765 = vpop.f32.mrb[0].mxu0
      %2766 = vmatprep.mubr.bf16.mxu0 0
      %2767 = vmatmul.mubr.bf16.gmra.mrb[0].mxu0 %v2664
      %v2768 = vpop.f32.mrb[0].mxu0
      %v2769 = vadd.f32 0.0, %v2768
      %v2770 = vpop.f32.mrb[0].mxu0
      %v2771 = vpop.f32.mrb[0].mxu0
      %v2772 = vadd.f32 0.0, %v2771
      %v2773 = vpop.f32.mrb[0].mxu0
      %2774 = vmatprep.mubr.bf16.mxu0 0
      %2775 = vmatmul.mubr.bf16.gmra.mrb[0].mxu0 %v2667
      %v2776 = vpop.f32.mrb[0].mxu0
      %v2777 = vadd.f32 0.0, %v2776
      %v2778 = vpop.f32.mrb[0].mxu0
      %v2779 = vpop.f32.mrb[0].mxu0
      %v2780 = vadd.f32 0.0, %v2779
      %v2781 = vpop.f32.mrb[0].mxu0
      %2782 = vmatprep.mubr.bf16.mxu0 0
      %2783 = vmatmul.mubr.bf16.gmra.mrb[0].mxu0 %v2670
      %v2784 = vpop.f32.mrb[0].mxu0
      %v2785 = vadd.f32 0.0, %v2784
      %v2786 = vpop.f32.mrb[0].mxu0
      %v2787 = vpop.f32.mrb[0].mxu0
      %v2788 = vadd.f32 0.0, %v2787
      %v2789 = vpop.f32.mrb[0].mxu0
      %2790 = vmatprep.mubr.bf16.mxu0 0
      %2791 = vmatmul.mubr.bf16.gmra.mrb[0].mxu0 %v2673
      %v2792 = vpop.f32.mrb[0].mxu0
      %v2793 = vadd.f32 0.0, %v2792
      %v2794 = vpop.f32.mrb[0].mxu0
      %v2795 = vpop.f32.mrb[0].mxu0
      %v2796 = vadd.f32 0.0, %v2795
      %v2797 = vpop.f32.mrb[0].mxu0
      %2798 = vmatprep.mubr.bf16.mxu0 0
      %2799 = vmatmul.mubr.bf16.gmra.mrb[0].mxu0 %v2676
      %v2800 = vpop.f32.mrb[0].mxu0
      %v2801 = vadd.f32 0.0, %v2800
      %v2802 = vpop.f32.mrb[0].mxu0
      %v2803 = vpop.f32.mrb[0].mxu0
      %v2804 = vpop.f32.mrb[0].mxu0
      %2805 = vdwg.mxu0
      %v2810 = vunpack.c.l.b16 %v1661
      %v2811 = vunpack.c.l.b16 %v1662
      %v2812 = vunpack.c.l.b16 %v1663
      %v2813 = vunpack.c.l.b16 %v1664
      %v2814 = vpack.c.b16 %v2811, %v2810
      %v2815 = vpack.c.b16 %v2813, %v2812
      %v2819 = vsel %vm628, %v1649, 0
      %v2822 = vsel %vm628, %v1650, 0
      %v2825 = vsel %vm628, %v1651, 0
      %v2828 = vsel %vm628, %v1652, 0
      %v2831 = vsel %vm628, %v1653, 0
      %v2834 = vsel %vm628, %v1654, 0
      %v2837 = vsel %vm628, %v1655, 0
      %v2840 = vsel %vm628, %v1656, 0
      %v2843 = vsel %vm628, %v1657, 0
      %v2846 = vsel %vm628, %v1658, 0
      %v2849 = vsel %vm628, %v1659, 0
      %v2852 = vsel %vm628, %v1660, 0
      %2854 = vmatprep.subr.bf16.mxu0 0
      %2855 = vmatpush1.bf16.msra.mxu0 %v2814
      %2856 = vmatprep.subr.bf16.mxu0 0
      %2857 = vmatpush1.bf16.msra.mxu0 %v2815
      %2858 = vmatprep.subr.bf16.mxu0 0
      %2859 = vmatpush1.bf16.msra.mxu0 0
      %2860 = vmatprep.subr.bf16.mxu0 0
      %2861 = vmatpush1.bf16.msra.mxu0 0
      %2862 = vmatprep.subr.bf16.mxu0 0
      %2863 = vmatpush1.bf16.msra.mxu0 0
      %2864 = vmatprep.subr.bf16.mxu0 0
      %2865 = vmatpush1.bf16.msra.mxu0 0
      %2866 = vmatprep.subr.bf16.mxu0 0
      %2867 = vmatpush1.bf16.msra.mxu0 0
      %2868 = vmatprep.subr.bf16.mxu0 0
      %2869 = vmatpush1.bf16.msra.mxu0 0
      %2870 = vmatprep.subr.bf16.mxu0 0
      %2871 = vmatpush1.bf16.msra.mxu0 0
      %2872 = vmatprep.subr.bf16.mxu0 0
      %2873 = vmatpush1.bf16.msra.mxu0 0
      %2874 = vmatprep.subr.bf16.mxu0 0
      %2875 = vmatpush1.bf16.msra.mxu0 0
      %2876 = vmatprep.subr.bf16.mxu0 0
      %2877 = vmatpush1.bf16.msra.mxu0 0
      %2878 = vmatprep.subr.bf16.mxu0 0
      %2879 = vmatpush1.bf16.msra.mxu0 0
      %2880 = vmatprep.subr.bf16.mxu0 0
      %2881 = vmatpush1.bf16.msra.mxu0 0
      %2882 = vmatprep.subr.bf16.mxu0 0
      %2883 = vmatpush1.bf16.msra.mxu0 0
      %2884 = vmatprep.subr.bf16.mxu0 0
      %2885 = vmatpush1.bf16.msra.mxu0 0
      %2886 = vmatprep.mubr.bf16.mxu0 0
      %2887 = vmatmul.mubr.bf16.gmra.mrb[0].mxu0 %v2819
      %v2888 = vpop.f32.mrb[0].mxu0
      %v2889 = vadd.f32 %v2713, %v2888
      %v2890 = vpop.f32.mrb[0].mxu0
      %v2891 = vpop.f32.mrb[0].mxu0
      %v2892 = vadd.f32 %v2716, %v2891
      %v2893 = vpop.f32.mrb[0].mxu0
      %2894 = vmatprep.mubr.bf16.mxu0 0
      %2895 = vmatmul.mubr.bf16.gmra.mrb[0].mxu0 %v2822
      %v2896 = vpop.f32.mrb[0].mxu0
      %v2897 = vadd.f32 %v2721, %v2896
      %v2898 = vpop.f32.mrb[0].mxu0
      %v2899 = vpop.f32.mrb[0].mxu0
      %v2900 = vadd.f32 %v2724, %v2899
      %v2901 = vpop.f32.mrb[0].mxu0
      %2902 = vmatprep.mubr.bf16.mxu0 0
      %2903 = vmatmul.mubr.bf16.gmra.mrb[0].mxu0 %v2825
      %v2904 = vpop.f32.mrb[0].mxu0
      %v2905 = vadd.f32 %v2729, %v2904
      %v2906 = vpop.f32.mrb[0].mxu0
      %v2907 = vpop.f32.mrb[0].mxu0
      %v2908 = vadd.f32 %v2732, %v2907
      %v2909 = vpop.f32.mrb[0].mxu0
      %2910 = vmatprep.mubr.bf16.mxu0 0
      %2911 = vmatmul.mubr.bf16.gmra.mrb[0].mxu0 %v2828
      %v2912 = vpop.f32.mrb[0].mxu0
      %v2913 = vadd.f32 %v2737, %v2912
      %v2914 = vpop.f32.mrb[0].mxu0
      %v2915 = vpop.f32.mrb[0].mxu0
      %v2916 = vadd.f32 %v2740, %v2915
      %v2917 = vpop.f32.mrb[0].mxu0
      %2918 = vmatprep.mubr.bf16.mxu0 0
      %2919 = vmatmul.mubr.bf16.gmra.mrb[0].mxu0 %v2831
      %v2920 = vpop.f32.mrb[0].mxu0
      %v2921 = vadd.f32 %v2745, %v2920
      %v2922 = vpop.f32.mrb[0].mxu0
      %v2923 = vpop.f32.mrb[0].mxu0
      %v2924 = vadd.f32 %v2748, %v2923
      %v2925 = vpop.f32.mrb[0].mxu0
      %2926 = vmatprep.mubr.bf16.mxu0 0
      %2927 = vmatmul.mubr.bf16.gmra.mrb[0].mxu0 %v2834
      %v2928 = vpop.f32.mrb[0].mxu0
      %v2929 = vadd.f32 %v2753, %v2928
      %v2930 = vpop.f32.mrb[0].mxu0
      %v2931 = vpop.f32.mrb[0].mxu0
      %v2932 = vadd.f32 %v2756, %v2931
      %v2933 = vpop.f32.mrb[0].mxu0
      %2934 = vmatprep.mubr.bf16.mxu0 0
      %2935 = vmatmul.mubr.bf16.gmra.mrb[0].mxu0 %v2837
      %v2936 = vpop.f32.mrb[0].mxu0
      %v2937 = vadd.f32 %v2761, %v2936
      %v2938 = vpop.f32.mrb[0].mxu0
      %v2939 = vpop.f32.mrb[0].mxu0
      %v2940 = vadd.f32 %v2764, %v2939
      %v2941 = vpop.f32.mrb[0].mxu0
      %2942 = vmatprep.mubr.bf16.mxu0 0
      %2943 = vmatmul.mubr.bf16.gmra.mrb[0].mxu0 %v2840
      %v2944 = vpop.f32.mrb[0].mxu0
      %v2945 = vadd.f32 %v2769, %v2944
      %v2946 = vpop.f32.mrb[0].mxu0
      %v2947 = vpop.f32.mrb[0].mxu0
      %v2948 = vadd.f32 %v2772, %v2947
      %v2949 = vpop.f32.mrb[0].mxu0
      %2950 = vmatprep.mubr.bf16.mxu0 0
      %2951 = vmatmul.mubr.bf16.gmra.mrb[0].mxu0 %v2843
      %v2952 = vpop.f32.mrb[0].mxu0
      %v2953 = vadd.f32 %v2777, %v2952
      %v2954 = vpop.f32.mrb[0].mxu0
      %v2955 = vpop.f32.mrb[0].mxu0
      %v2956 = vadd.f32 %v2780, %v2955
      %v2957 = vpop.f32.mrb[0].mxu0
      %2958 = vmatprep.mubr.bf16.mxu0 0
      %2959 = vmatmul.mubr.bf16.gmra.mrb[0].mxu0 %v2846
      %v2960 = vpop.f32.mrb[0].mxu0
      %v2961 = vadd.f32 %v2785, %v2960
      %v2962 = vpop.f32.mrb[0].mxu0
      %v2963 = vpop.f32.mrb[0].mxu0
      %v2964 = vadd.f32 %v2788, %v2963
      %v2965 = vpop.f32.mrb[0].mxu0
      %2966 = vmatprep.mubr.bf16.mxu0 0
      %2967 = vmatmul.mubr.bf16.gmra.mrb[0].mxu0 %v2849
      %v2968 = vpop.f32.mrb[0].mxu0
      %v2969 = vadd.f32 %v2793, %v2968
      %v2970 = vpop.f32.mrb[0].mxu0
      %v2971 = vpop.f32.mrb[0].mxu0
      %v2972 = vadd.f32 %v2796, %v2971
      %v2973 = vpop.f32.mrb[0].mxu0
      %2974 = vmatprep.mubr.bf16.mxu0 0
      %2975 = vmatmul.mubr.bf16.gmra.mrb[0].mxu0 %v2852
      %v2976 = vpop.f32.mrb[0].mxu0
      %v2977 = vadd.f32 %v2801, %v2976
      %v2978 = vpop.f32.mrb[0].mxu0
      %v2979 = vpop.f32.mrb[0].mxu0
      %v2980 = vpop.f32.mrb[0].mxu0
      %2981 = vdwg.mxu0
      %s2982 = scalar_lea.vmem %s1, 32
      %v2983 = vld [vmem:[%s2982] sm:$0xf]
      %v2984 = vld [vmem:[%s2982 + $0x4] sm:$0xf]
      %v2985 = vld [vmem:[%s2982 + $0x8] sm:$0xf]
      %v2986 = vld [vmem:[%s2982 + $0xc] sm:$0xf]
      %v2991 = vunpack.c.l.b16 %v2983
      %v2992 = vunpack.c.l.b16 %v2984
      %v2993 = vunpack.c.l.b16 %v2985
      %v2994 = vunpack.c.l.b16 %v2986
      %v2995 = vpack.c.b16 %v2992, %v2991
      %v2996 = vpack.c.b16 %v2994, %v2993
      %2999 = vmatprep.subr.bf16.mxu0 0
      %3000 = vmatpush1.bf16.msra.mxu0 %v2995
      %3001 = vmatprep.subr.bf16.mxu0 0
      %3002 = vmatpush1.bf16.msra.mxu0 %v2996
      %3003 = vmatprep.subr.bf16.mxu0 0
      %3004 = vmatpush1.bf16.msra.mxu0 0
      %3005 = vmatprep.subr.bf16.mxu0 0
      %3006 = vmatpush1.bf16.msra.mxu0 0
      %3007 = vmatprep.subr.bf16.mxu0 0
      %3008 = vmatpush1.bf16.msra.mxu0 0
      %3009 = vmatprep.subr.bf16.mxu0 0
      %3010 = vmatpush1.bf16.msra.mxu0 0
      %3011 = vmatprep.subr.bf16.mxu0 0
      %3012 = vmatpush1.bf16.msra.mxu0 0
      %3013 = vmatprep.subr.bf16.mxu0 0
      %3014 = vmatpush1.bf16.msra.mxu0 0
      %3015 = vmatprep.subr.bf16.mxu0 0
      %3016 = vmatpush1.bf16.msra.mxu0 0
      %3017 = vmatprep.subr.bf16.mxu0 0
      %3018 = vmatpush1.bf16.msra.mxu0 0
      %3019 = vmatprep.subr.bf16.mxu0 0
      %3020 = vmatpush1.bf16.msra.mxu0 0
      %3021 = vmatprep.subr.bf16.mxu0 0
      %3022 = vmatpush1.bf16.msra.mxu0 0
      %3023 = vmatprep.subr.bf16.mxu0 0
      %3024 = vmatpush1.bf16.msra.mxu0 0
      %3025 = vmatprep.subr.bf16.mxu0 0
      %3026 = vmatpush1.bf16.msra.mxu0 0
      %3027 = vmatprep.subr.bf16.mxu0 0
      %3028 = vmatpush1.bf16.msra.mxu0 0
      %3029 = vmatprep.subr.bf16.mxu0 0
      %3030 = vmatpush1.bf16.msra.mxu0 0
      %3031 = vmatprep.mubr.bf16.mxu0 0
      %3032 = vmatmul.mubr.bf16.gmra.mrb[0].mxu0 %v630
      %v3033 = vpop.f32.mrb[0].mxu0
      %v3034 = vadd.f32 0.0, %v3033
      %v3035 = vpop.f32.mrb[0].mxu0
      %v3036 = vpop.f32.mrb[0].mxu0
      %v3037 = vadd.f32 0.0, %v3036
      %v3038 = vpop.f32.mrb[0].mxu0
      %3039 = vmatprep.mubr.bf16.mxu0 0
      %3040 = vmatmul.mubr.bf16.gmra.mrb[0].mxu0 %v633
      %v3041 = vpop.f32.mrb[0].mxu0
      %v3042 = vadd.f32 0.0, %v3041
      %v3043 = vpop.f32.mrb[0].mxu0
      %v3044 = vpop.f32.mrb[0].mxu0
      %v3045 = vadd.f32 0.0, %v3044
      %v3046 = vpop.f32.mrb[0].mxu0
      %3047 = vmatprep.mubr.bf16.mxu0 0
      %3048 = vmatmul.mubr.bf16.gmra.mrb[0].mxu0 %v636
      %v3049 = vpop.f32.mrb[0].mxu0
      %v3050 = vadd.f32 0.0, %v3049
      %v3051 = vpop.f32.mrb[0].mxu0
      %v3052 = vpop.f32.mrb[0].mxu0
      %v3053 = vadd.f32 0.0, %v3052
      %v3054 = vpop.f32.mrb[0].mxu0
      %3055 = vmatprep.mubr.bf16.mxu0 0
      %3056 = vmatmul.mubr.bf16.gmra.mrb[0].mxu0 %v639
      %v3057 = vpop.f32.mrb[0].mxu0
      %v3058 = vadd.f32 0.0, %v3057
      %v3059 = vpop.f32.mrb[0].mxu0
      %v3060 = vpop.f32.mrb[0].mxu0
      %v3061 = vadd.f32 0.0, %v3060
      %v3062 = vpop.f32.mrb[0].mxu0
      %3063 = vmatprep.mubr.bf16.mxu0 0
      %3064 = vmatmul.mubr.bf16.gmra.mrb[0].mxu0 %v642
      %v3065 = vpop.f32.mrb[0].mxu0
      %v3066 = vadd.f32 0.0, %v3065
      %v3067 = vpop.f32.mrb[0].mxu0
      %v3068 = vpop.f32.mrb[0].mxu0
      %v3069 = vadd.f32 0.0, %v3068
      %v3070 = vpop.f32.mrb[0].mxu0
      %3071 = vmatprep.mubr.bf16.mxu0 0
      %3072 = vmatmul.mubr.bf16.gmra.mrb[0].mxu0 %v645
      %v3073 = vpop.f32.mrb[0].mxu0
      %v3074 = vadd.f32 0.0, %v3073
      %v3075 = vpop.f32.mrb[0].mxu0
      %v3076 = vpop.f32.mrb[0].mxu0
      %v3077 = vadd.f32 0.0, %v3076
      %v3078 = vpop.f32.mrb[0].mxu0
      %3079 = vmatprep.mubr.bf16.mxu0 0
      %3080 = vmatmul.mubr.bf16.gmra.mrb[0].mxu0 %v648
      %v3081 = vpop.f32.mrb[0].mxu0
      %v3082 = vadd.f32 0.0, %v3081
      %v3083 = vpop.f32.mrb[0].mxu0
      %v3084 = vpop.f32.mrb[0].mxu0
      %v3085 = vadd.f32 0.0, %v3084
      %v3086 = vpop.f32.mrb[0].mxu0
      %3087 = vmatprep.mubr.bf16.mxu0 0
      %3088 = vmatmul.mubr.bf16.gmra.mrb[0].mxu0 %v651
      %v3089 = vpop.f32.mrb[0].mxu0
      %v3090 = vadd.f32 0.0, %v3089
      %v3091 = vpop.f32.mrb[0].mxu0
      %v3092 = vpop.f32.mrb[0].mxu0
      %v3093 = vadd.f32 0.0, %v3092
      %v3094 = vpop.f32.mrb[0].mxu0
      %3095 = vmatprep.mubr.bf16.mxu0 0
      %3096 = vmatmul.mubr.bf16.gmra.mrb[0].mxu0 %v654
      %v3097 = vpop.f32.mrb[0].mxu0
      %v3098 = vadd.f32 0.0, %v3097
      %v3099 = vpop.f32.mrb[0].mxu0
      %v3100 = vpop.f32.mrb[0].mxu0
      %v3101 = vadd.f32 0.0, %v3100
      %v3102 = vpop.f32.mrb[0].mxu0
      %3103 = vmatprep.mubr.bf16.mxu0 0
      %3104 = vmatmul.mubr.bf16.gmra.mrb[0].mxu0 %v657
      %v3105 = vpop.f32.mrb[0].mxu0
      %v3106 = vadd.f32 0.0, %v3105
      %v3107 = vpop.f32.mrb[0].mxu0
      %v3108 = vpop.f32.mrb[0].mxu0
      %v3109 = vadd.f32 0.0, %v3108
      %v3110 = vpop.f32.mrb[0].mxu0
      %3111 = vmatprep.mubr.bf16.mxu0 0
      %3112 = vmatmul.mubr.bf16.gmra.mrb[0].mxu0 %v660
      %v3113 = vpop.f32.mrb[0].mxu0
      %v3114 = vadd.f32 0.0, %v3113
      %v3115 = vpop.f32.mrb[0].mxu0
      %v3116 = vpop.f32.mrb[0].mxu0
      %v3117 = vadd.f32 0.0, %v3116
      %v3118 = vpop.f32.mrb[0].mxu0
      %3119 = vmatprep.mubr.bf16.mxu0 0
      %3120 = vmatmul.mubr.bf16.gmra.mrb[0].mxu0 %v663
      %v3121 = vpop.f32.mrb[0].mxu0
      %v3122 = vadd.f32 0.0, %v3121
      %v3123 = vpop.f32.mrb[0].mxu0
      %v3124 = vpop.f32.mrb[0].mxu0
      %v3125 = vpop.f32.mrb[0].mxu0
      %3126 = vdwg.mxu0
      %v3127 = vpack.c.bf16 %v3037, %v3034
      %v3128 = vpack.c.bf16 %v3045, %v3042
      %v3129 = vpack.c.bf16 %v3053, %v3050
      %v3130 = vpack.c.bf16 %v3061, %v3058
      %v3131 = vpack.c.bf16 %v3069, %v3066
      %v3132 = vpack.c.bf16 %v3077, %v3074
      %v3133 = vpack.c.bf16 %v3085, %v3082
      %v3134 = vpack.c.bf16 %v3093, %v3090
      %v3135 = vpack.c.bf16 %v3101, %v3098
      %v3136 = vpack.c.bf16 %v3109, %v3106
      %v3137 = vpack.c.bf16 %v3117, %v3114
      %v3138 = vpack.c.bf16 %v3122, %v3122
      %v3140 = vsel %vm628, %v3127, 0
      %v3143 = vsel %vm628, %v3128, 0
      %v3146 = vsel %vm628, %v3129, 0
      %v3149 = vsel %vm628, %v3130, 0
      %v3152 = vsel %vm628, %v3131, 0
      %v3155 = vsel %vm628, %v3132, 0
      %v3158 = vsel %vm628, %v3133, 0
      %v3161 = vsel %vm628, %v3134, 0
      %v3164 = vsel %vm628, %v3135, 0
      %v3167 = vsel %vm628, %v3136, 0
      %v3170 = vsel %vm628, %v3137, 0
      %v3173 = vsel %vm628, %v3138, 0
      %3175 = vmatprep.subr.bf16.mxu0 0
      %3176 = vmatpush1.bf16.xpose.msra.mxu0 %v630
      %3177 = vmatprep.subr.bf16.mxu0 0
      %3178 = vmatpush1.bf16.xpose.msra.mxu0 %v633
      %3179 = vmatprep.subr.bf16.mxu0 0
      %3180 = vmatpush1.bf16.xpose.msra.mxu0 %v636
      %3181 = vmatprep.subr.bf16.mxu0 0
      %3182 = vmatpush1.bf16.xpose.msra.mxu0 %v639
      %3183 = vmatprep.subr.bf16.mxu0 0
      %3184 = vmatpush1.bf16.xpose.msra.mxu0 %v642
      %3185 = vmatprep.subr.bf16.mxu0 0
      %3186 = vmatpush1.bf16.xpose.msra.mxu0 %v645
      %3187 = vmatprep.subr.bf16.mxu0 0
      %3188 = vmatpush1.bf16.xpose.msra.mxu0 %v648
      %3189 = vmatprep.subr.bf16.mxu0 0
      %3190 = vmatpush1.bf16.xpose.msra.mxu0 %v651
      %3191 = vmatprep.subr.bf16.mxu0 0
      %3192 = vmatpush1.bf16.xpose.msra.mxu0 %v654
      %3193 = vmatprep.subr.bf16.mxu0 0
      %3194 = vmatpush1.bf16.xpose.msra.mxu0 %v657
      %3195 = vmatprep.subr.bf16.mxu0 0
      %3196 = vmatpush1.bf16.xpose.msra.mxu0 %v660
      %3197 = vmatprep.subr.bf16.mxu0 0
      %3198 = vmatpush1.bf16.xpose.msra.mxu0 %v663
      %3199 = vmatprep.subr.bf16.mxu0 0
      %3200 = vmatpush1.bf16.xpose.msra.mxu0 0
      %3201 = vmatprep.subr.bf16.mxu0 0
      %3202 = vmatpush1.bf16.xpose.msra.mxu0 0
      %3203 = vmatprep.subr.bf16.mxu0 0
      %3204 = vmatpush1.bf16.xpose.msra.mxu0 0
      %3205 = vmatprep.subr.bf16.mxu0 0
      %3206 = vmatpush1.bf16.xpose.msra.mxu0 0
      %3207 = vmatprep.mubr.bf16.mxu0 0
      %3208 = vmatmul.mubr.bf16.gmra.mrb[0].mxu0 %v3140
      %v3209 = vpop.f32.mrb[0].mxu0
      %v3210 = vadd.f32 0.0, %v3209
      %v3211 = vpop.f32.mrb[0].mxu0
      %v3212 = vadd.f32 0.0, %v3211
      %v3213 = vpop.f32.mrb[0].mxu0
      %v3214 = vadd.f32 0.0, %v3213
      %v3215 = vpop.f32.mrb[0].mxu0
      %v3216 = vadd.f32 0.0, %v3215
      %3217 = vmatprep.mubr.bf16.mxu0 0
      %3218 = vmatmul.mubr.bf16.gmra.mrb[0].mxu0 %v3143
      %v3219 = vpop.f32.mrb[0].mxu0
      %v3220 = vadd.f32 0.0, %v3219
      %v3221 = vpop.f32.mrb[0].mxu0
      %v3222 = vadd.f32 0.0, %v3221
      %v3223 = vpop.f32.mrb[0].mxu0
      %v3224 = vadd.f32 0.0, %v3223
      %v3225 = vpop.f32.mrb[0].mxu0
      %v3226 = vadd.f32 0.0, %v3225
      %3227 = vmatprep.mubr.bf16.mxu0 0
      %3228 = vmatmul.mubr.bf16.gmra.mrb[0].mxu0 %v3146
      %v3229 = vpop.f32.mrb[0].mxu0
      %v3230 = vadd.f32 0.0, %v3229
      %v3231 = vpop.f32.mrb[0].mxu0
      %v3232 = vadd.f32 0.0, %v3231
      %v3233 = vpop.f32.mrb[0].mxu0
      %v3234 = vadd.f32 0.0, %v3233
      %v3235 = vpop.f32.mrb[0].mxu0
      %v3236 = vadd.f32 0.0, %v3235
      %3237 = vmatprep.mubr.bf16.mxu0 0
      %3238 = vmatmul.mubr.bf16.gmra.mrb[0].mxu0 %v3149
      %v3239 = vpop.f32.mrb[0].mxu0
      %v3240 = vadd.f32 0.0, %v3239
      %v3241 = vpop.f32.mrb[0].mxu0
      %v3242 = vadd.f32 0.0, %v3241
      %v3243 = vpop.f32.mrb[0].mxu0
      %v3244 = vadd.f32 0.0, %v3243
      %v3245 = vpop.f32.mrb[0].mxu0
      %v3246 = vadd.f32 0.0, %v3245
      %3247 = vmatprep.mubr.bf16.mxu0 0
      %3248 = vmatmul.mubr.bf16.gmra.mrb[0].mxu0 %v3152
      %v3249 = vpop.f32.mrb[0].mxu0
      %v3250 = vadd.f32 0.0, %v3249
      %v3251 = vpop.f32.mrb[0].mxu0
      %v3252 = vadd.f32 0.0, %v3251
      %v3253 = vpop.f32.mrb[0].mxu0
      %v3254 = vadd.f32 0.0, %v3253
      %v3255 = vpop.f32.mrb[0].mxu0
      %v3256 = vadd.f32 0.0, %v3255
      %3257 = vmatprep.mubr.bf16.mxu0 0
      %3258 = vmatmul.mubr.bf16.gmra.mrb[0].mxu0 %v3155
      %v3259 = vpop.f32.mrb[0].mxu0
      %v3260 = vadd.f32 0.0, %v3259
      %v3261 = vpop.f32.mrb[0].mxu0
      %v3262 = vadd.f32 0.0, %v3261
      %v3263 = vpop.f32.mrb[0].mxu0
      %v3264 = vadd.f32 0.0, %v3263
      %v3265 = vpop.f32.mrb[0].mxu0
      %v3266 = vadd.f32 0.0, %v3265
      %3267 = vmatprep.mubr.bf16.mxu0 0
      %3268 = vmatmul.mubr.bf16.gmra.mrb[0].mxu0 %v3158
      %v3269 = vpop.f32.mrb[0].mxu0
      %v3270 = vadd.f32 0.0, %v3269
      %v3271 = vpop.f32.mrb[0].mxu0
      %v3272 = vadd.f32 0.0, %v3271
      %v3273 = vpop.f32.mrb[0].mxu0
      %v3274 = vadd.f32 0.0, %v3273
      %v3275 = vpop.f32.mrb[0].mxu0
      %v3276 = vadd.f32 0.0, %v3275
      %3277 = vmatprep.mubr.bf16.mxu0 0
      %3278 = vmatmul.mubr.bf16.gmra.mrb[0].mxu0 %v3161
      %v3279 = vpop.f32.mrb[0].mxu0
      %v3280 = vadd.f32 0.0, %v3279
      %v3281 = vpop.f32.mrb[0].mxu0
      %v3282 = vadd.f32 0.0, %v3281
      %v3283 = vpop.f32.mrb[0].mxu0
      %v3284 = vadd.f32 0.0, %v3283
      %v3285 = vpop.f32.mrb[0].mxu0
      %v3286 = vadd.f32 0.0, %v3285
      %3287 = vmatprep.mubr.bf16.mxu0 0
      %3288 = vmatmul.mubr.bf16.gmra.mrb[0].mxu0 %v3164
      %v3289 = vpop.f32.mrb[0].mxu0
      %v3290 = vadd.f32 0.0, %v3289
      %v3291 = vpop.f32.mrb[0].mxu0
      %v3292 = vadd.f32 0.0, %v3291
      %v3293 = vpop.f32.mrb[0].mxu0
      %v3294 = vadd.f32 0.0, %v3293
      %v3295 = vpop.f32.mrb[0].mxu0
      %v3296 = vadd.f32 0.0, %v3295
      %3297 = vmatprep.mubr.bf16.mxu0 0
      %3298 = vmatmul.mubr.bf16.gmra.mrb[0].mxu0 %v3167
      %v3299 = vpop.f32.mrb[0].mxu0
      %v3300 = vadd.f32 0.0, %v3299
      %v3301 = vpop.f32.mrb[0].mxu0
      %v3302 = vadd.f32 0.0, %v3301
      %v3303 = vpop.f32.mrb[0].mxu0
      %v3304 = vadd.f32 0.0, %v3303
      %v3305 = vpop.f32.mrb[0].mxu0
      %v3306 = vadd.f32 0.0, %v3305
      %3307 = vmatprep.mubr.bf16.mxu0 0
      %3308 = vmatmul.mubr.bf16.gmra.mrb[0].mxu0 %v3170
      %v3309 = vpop.f32.mrb[0].mxu0
      %v3310 = vadd.f32 0.0, %v3309
      %v3311 = vpop.f32.mrb[0].mxu0
      %v3312 = vadd.f32 0.0, %v3311
      %v3313 = vpop.f32.mrb[0].mxu0
      %v3314 = vadd.f32 0.0, %v3313
      %v3315 = vpop.f32.mrb[0].mxu0
      %v3316 = vadd.f32 0.0, %v3315
      %3317 = vmatprep.mubr.bf16.mxu0 0
      %3318 = vmatmul.mubr.bf16.gmra.mrb[0].mxu0 %v3173
      %v3319 = vpop.f32.mrb[0].mxu0
      %v3320 = vadd.f32 0.0, %v3319
      %v3321 = vpop.f32.mrb[0].mxu0
      %v3322 = vadd.f32 0.0, %v3321
      %v3323 = vpop.f32.mrb[0].mxu0
      %v3324 = vpop.f32.mrb[0].mxu0
      %3325 = vdwg.mxu0
      %v3326 = vmul.f32 %v3210, %v992
      %v3327 = vmul.f32 %v3212, %v993
      %v3328 = vmul.f32 %v3214, %v994
      %v3329 = vmul.f32 %v3216, %v995
      %v3330 = vmul.f32 %v3220, %v996
      %v3331 = vmul.f32 %v3222, %v997
      %v3332 = vmul.f32 %v3224, %v998
      %v3333 = vmul.f32 %v3226, %v999
      %v3334 = vmul.f32 %v3230, %v1000
      %v3335 = vmul.f32 %v3232, %v1001
      %v3336 = vmul.f32 %v3234, %v1002
      %v3337 = vmul.f32 %v3236, %v1003
      %v3338 = vmul.f32 %v3240, %v1004
      %v3339 = vmul.f32 %v3242, %v1005
      %v3340 = vmul.f32 %v3244, %v1006
      %v3341 = vmul.f32 %v3246, %v1007
      %v3342 = vmul.f32 %v3250, %v1008
      %v3343 = vmul.f32 %v3252, %v1009
      %v3344 = vmul.f32 %v3254, %v1010
      %v3345 = vmul.f32 %v3256, %v1011
      %v3346 = vmul.f32 %v3260, %v1012
      %v3347 = vmul.f32 %v3262, %v1013
      %v3348 = vmul.f32 %v3264, %v1014
      %v3349 = vmul.f32 %v3266, %v1015
      %v3350 = vmul.f32 %v3270, %v1016
      %v3351 = vmul.f32 %v3272, %v1017
      %v3352 = vmul.f32 %v3274, %v1018
      %v3353 = vmul.f32 %v3276, %v1019
      %v3354 = vmul.f32 %v3280, %v1020
      %v3355 = vmul.f32 %v3282, %v1021
      %v3356 = vmul.f32 %v3284, %v1022
      %v3357 = vmul.f32 %v3286, %v1023
      %v3358 = vmul.f32 %v3290, %v1024
      %v3359 = vmul.f32 %v3292, %v1025
      %v3360 = vmul.f32 %v3294, %v1026
      %v3361 = vmul.f32 %v3296, %v1027
      %v3362 = vmul.f32 %v3300, %v1028
      %v3363 = vmul.f32 %v3302, %v1029
      %v3364 = vmul.f32 %v3304, %v1030
      %v3365 = vmul.f32 %v3306, %v1031
      %v3366 = vmul.f32 %v3310, %v1032
      %v3367 = vmul.f32 %v3312, %v1033
      %v3368 = vmul.f32 %v3314, %v1034
      %v3369 = vmul.f32 %v3316, %v1035
      %v3370 = vmul.f32 %v3320, %v1036
      %v3371 = vmul.f32 %v3322, %v1037
      %v3372 = vsel %vm530, %v3327, -inf
      %v3373 = vmax.f32 %v3326, %v3372
      %3374 = vmax.xlane.f32.xlu0 %v3373
      %v3375 = vpop.xlane.xlu0 %3374
      %v3376 = vsel %vm530, %v3329, -inf
      %v3377 = vmax.f32 %v3328, %v3376
      %3378 = vmax.xlane.f32.xlu0 %v3377
      %v3379 = vpop.xlane.xlu0 %3378
      %v3380 = vsel %vm530, %v3331, -inf
      %v3381 = vmax.f32 %v3330, %v3380
      %3382 = vmax.xlane.f32.xlu0 %v3381
      %v3383 = vpop.xlane.xlu0 %3382
      %v3384 = vsel %vm530, %v3333, -inf
      %v3385 = vmax.f32 %v3332, %v3384
      %3386 = vmax.xlane.f32.xlu0 %v3385
      %v3387 = vpop.xlane.xlu0 %3386
      %v3388 = vsel %vm530, %v3335, -inf
      %v3389 = vmax.f32 %v3334, %v3388
      %3390 = vmax.xlane.f32.xlu0 %v3389
      %v3391 = vpop.xlane.xlu0 %3390
      %v3392 = vsel %vm530, %v3337, -inf
      %v3393 = vmax.f32 %v3336, %v3392
      %3394 = vmax.xlane.f32.xlu0 %v3393
      %v3395 = vpop.xlane.xlu0 %3394
      %v3396 = vsel %vm530, %v3339, -inf
      %v3397 = vmax.f32 %v3338, %v3396
      %3398 = vmax.xlane.f32.xlu0 %v3397
      %v3399 = vpop.xlane.xlu0 %3398
      %v3400 = vsel %vm530, %v3341, -inf
      %v3401 = vmax.f32 %v3340, %v3400
      %3402 = vmax.xlane.f32.xlu0 %v3401
      %v3403 = vpop.xlane.xlu0 %3402
      %v3404 = vsel %vm530, %v3343, -inf
      %v3405 = vmax.f32 %v3342, %v3404
      %3406 = vmax.xlane.f32.xlu0 %v3405
      %v3407 = vpop.xlane.xlu0 %3406
      %v3408 = vsel %vm530, %v3345, -inf
      %v3409 = vmax.f32 %v3344, %v3408
      %3410 = vmax.xlane.f32.xlu0 %v3409
      %v3411 = vpop.xlane.xlu0 %3410
      %v3412 = vsel %vm530, %v3347, -inf
      %v3413 = vmax.f32 %v3346, %v3412
      %3414 = vmax.xlane.f32.xlu0 %v3413
      %v3415 = vpop.xlane.xlu0 %3414
      %v3416 = vsel %vm530, %v3349, -inf
      %v3417 = vmax.f32 %v3348, %v3416
      %3418 = vmax.xlane.f32.xlu0 %v3417
      %v3419 = vpop.xlane.xlu0 %3418
      %v3420 = vsel %vm530, %v3351, -inf
      %v3421 = vmax.f32 %v3350, %v3420
      %3422 = vmax.xlane.f32.xlu0 %v3421
      %v3423 = vpop.xlane.xlu0 %3422
      %v3424 = vsel %vm530, %v3353, -inf
      %v3425 = vmax.f32 %v3352, %v3424
      %3426 = vmax.xlane.f32.xlu0 %v3425
      %v3427 = vpop.xlane.xlu0 %3426
      %v3428 = vsel %vm530, %v3355, -inf
      %v3429 = vmax.f32 %v3354, %v3428
      %3430 = vmax.xlane.f32.xlu0 %v3429
      %v3431 = vpop.xlane.xlu0 %3430
      %v3432 = vsel %vm530, %v3357, -inf
      %v3433 = vmax.f32 %v3356, %v3432
      %3434 = vmax.xlane.f32.xlu0 %v3433
      %v3435 = vpop.xlane.xlu0 %3434
      %v3436 = vsel %vm530, %v3359, -inf
      %v3437 = vmax.f32 %v3358, %v3436
      %3438 = vmax.xlane.f32.xlu0 %v3437
      %v3439 = vpop.xlane.xlu0 %3438
      %v3440 = vsel %vm530, %v3361, -inf
      %v3441 = vmax.f32 %v3360, %v3440
      %3442 = vmax.xlane.f32.xlu0 %v3441
      %v3443 = vpop.xlane.xlu0 %3442
      %v3444 = vsel %vm530, %v3363, -inf
      %v3445 = vmax.f32 %v3362, %v3444
      %3446 = vmax.xlane.f32.xlu0 %v3445
      %v3447 = vpop.xlane.xlu0 %3446
      %v3448 = vsel %vm530, %v3365, -inf
      %v3449 = vmax.f32 %v3364, %v3448
      %3450 = vmax.xlane.f32.xlu0 %v3449
      %v3451 = vpop.xlane.xlu0 %3450
      %v3452 = vsel %vm530, %v3367, -inf
      %v3453 = vmax.f32 %v3366, %v3452
      %3454 = vmax.xlane.f32.xlu0 %v3453
      %v3455 = vpop.xlane.xlu0 %3454
      %v3456 = vsel %vm530, %v3369, -inf
      %v3457 = vmax.f32 %v3368, %v3456
      %3458 = vmax.xlane.f32.xlu0 %v3457
      %v3459 = vpop.xlane.xlu0 %3458
      %v3460 = vsel %vm1172, %v3370, -inf
      %v3461 = vsel %vm575, %v3371, -inf
      %v3462 = vmax.f32 %v3460, %v3461
      %3463 = vmax.xlane.f32.xlu0 %v3462
      %v3464 = vpop.xlane.xlu0 %3463
      %v3465 = vsub.f32 %v3326, %v3375
      %v3466 = vsub.f32 %v3327, %v3375
      %v3467 = vsub.f32 %v3328, %v3379
      %v3468 = vsub.f32 %v3329, %v3379
      %v3469 = vsub.f32 %v3330, %v3383
      %v3470 = vsub.f32 %v3331, %v3383
      %v3471 = vsub.f32 %v3332, %v3387
      %v3472 = vsub.f32 %v3333, %v3387
      %v3473 = vsub.f32 %v3334, %v3391
      %v3474 = vsub.f32 %v3335, %v3391
      %v3475 = vsub.f32 %v3336, %v3395
      %v3476 = vsub.f32 %v3337, %v3395
      %v3477 = vsub.f32 %v3338, %v3399
      %v3478 = vsub.f32 %v3339, %v3399
      %v3479 = vsub.f32 %v3340, %v3403
      %v3480 = vsub.f32 %v3341, %v3403
      %v3481 = vsub.f32 %v3342, %v3407
      %v3482 = vsub.f32 %v3343, %v3407
      %v3483 = vsub.f32 %v3344, %v3411
      %v3484 = vsub.f32 %v3345, %v3411
      %v3485 = vsub.f32 %v3346, %v3415
      %v3486 = vsub.f32 %v3347, %v3415
      %v3487 = vsub.f32 %v3348, %v3419
      %v3488 = vsub.f32 %v3349, %v3419
      %v3489 = vsub.f32 %v3350, %v3423
      %v3490 = vsub.f32 %v3351, %v3423
      %v3491 = vsub.f32 %v3352, %v3427
      %v3492 = vsub.f32 %v3353, %v3427
      %v3493 = vsub.f32 %v3354, %v3431
      %v3494 = vsub.f32 %v3355, %v3431
      %v3495 = vsub.f32 %v3356, %v3435
      %v3496 = vsub.f32 %v3357, %v3435
      %v3497 = vsub.f32 %v3358, %v3439
      %v3498 = vsub.f32 %v3359, %v3439
      %v3499 = vsub.f32 %v3360, %v3443
      %v3500 = vsub.f32 %v3361, %v3443
      %v3501 = vsub.f32 %v3362, %v3447
      %v3502 = vsub.f32 %v3363, %v3447
      %v3503 = vsub.f32 %v3364, %v3451
      %v3504 = vsub.f32 %v3365, %v3451
      %v3505 = vsub.f32 %v3366, %v3455
      %v3506 = vsub.f32 %v3367, %v3455
      %v3507 = vsub.f32 %v3368, %v3459
      %v3508 = vsub.f32 %v3369, %v3459
      %v3509 = vsub.f32 %v3370, %v3464
      %v3510 = vsub.f32 %v3371, %v3464
      %v3511 = vmul.f32 %v3465, 1.442695
      %v3512 = vpow.pop %v3511
      %v3513 = vmul.f32 %v3466, 1.442695
      %v3514 = vpow.pop %v3513
      %v3515 = vmul.f32 %v3467, 1.442695
      %v3516 = vpow.pop %v3515
      %v3517 = vmul.f32 %v3468, 1.442695
      %v3518 = vpow.pop %v3517
      %v3519 = vmul.f32 %v3469, 1.442695
      %v3520 = vpow.pop %v3519
      %v3521 = vmul.f32 %v3470, 1.442695
      %v3522 = vpow.pop %v3521
      %v3523 = vmul.f32 %v3471, 1.442695
      %v3524 = vpow.pop %v3523
      %v3525 = vmul.f32 %v3472, 1.442695
      %v3526 = vpow.pop %v3525
      %v3527 = vmul.f32 %v3473, 1.442695
      %v3528 = vpow.pop %v3527
      %v3529 = vmul.f32 %v3474, 1.442695
      %v3530 = vpow.pop %v3529
      %v3531 = vmul.f32 %v3475, 1.442695
      %v3532 = vpow.pop %v3531
      %v3533 = vmul.f32 %v3476, 1.442695
      %v3534 = vpow.pop %v3533
      %v3535 = vmul.f32 %v3477, 1.442695
      %v3536 = vpow.pop %v3535
      %v3537 = vmul.f32 %v3478, 1.442695
      %v3538 = vpow.pop %v3537
      %v3539 = vmul.f32 %v3479, 1.442695
      %v3540 = vpow.pop %v3539
      %v3541 = vmul.f32 %v3480, 1.442695
      %v3542 = vpow.pop %v3541
      %v3543 = vmul.f32 %v3481, 1.442695
      %v3544 = vpow.pop %v3543
      %v3545 = vmul.f32 %v3482, 1.442695
      %v3546 = vpow.pop %v3545
      %v3547 = vmul.f32 %v3483, 1.442695
      %v3548 = vpow.pop %v3547
      %v3549 = vmul.f32 %v3484, 1.442695
      %v3550 = vpow.pop %v3549
      %v3551 = vmul.f32 %v3485, 1.442695
      %v3552 = vpow.pop %v3551
      %v3553 = vmul.f32 %v3486, 1.442695
      %v3554 = vpow.pop %v3553
      %v3555 = vmul.f32 %v3487, 1.442695
      %v3556 = vpow.pop %v3555
      %v3557 = vmul.f32 %v3488, 1.442695
      %v3558 = vpow.pop %v3557
      %v3559 = vmul.f32 %v3489, 1.442695
      %v3560 = vpow.pop %v3559
      %v3561 = vmul.f32 %v3490, 1.442695
      %v3562 = vpow.pop %v3561
      %v3563 = vmul.f32 %v3491, 1.442695
      %v3564 = vpow.pop %v3563
      %v3565 = vmul.f32 %v3492, 1.442695
      %v3566 = vpow.pop %v3565
      %v3567 = vmul.f32 %v3493, 1.442695
      %v3568 = vpow.pop %v3567
      %v3569 = vmul.f32 %v3494, 1.442695
      %v3570 = vpow.pop %v3569
      %v3571 = vmul.f32 %v3495, 1.442695
      %v3572 = vpow.pop %v3571
      %v3573 = vmul.f32 %v3496, 1.442695
      %v3574 = vpow.pop %v3573
      %v3575 = vmul.f32 %v3497, 1.442695
      %v3576 = vpow.pop %v3575
      %v3577 = vmul.f32 %v3498, 1.442695
      %v3578 = vpow.pop %v3577
      %v3579 = vmul.f32 %v3499, 1.442695
      %v3580 = vpow.pop %v3579
      %v3581 = vmul.f32 %v3500, 1.442695
      %v3582 = vpow.pop %v3581
      %v3583 = vmul.f32 %v3501, 1.442695
      %v3584 = vpow.pop %v3583
      %v3585 = vmul.f32 %v3502, 1.442695
      %v3586 = vpow.pop %v3585
      %v3587 = vmul.f32 %v3503, 1.442695
      %v3588 = vpow.pop %v3587
      %v3589 = vmul.f32 %v3504, 1.442695
      %v3590 = vpow.pop %v3589
      %v3591 = vmul.f32 %v3505, 1.442695
      %v3592 = vpow.pop %v3591
      %v3593 = vmul.f32 %v3506, 1.442695
      %v3594 = vpow.pop %v3593
      %v3595 = vmul.f32 %v3507, 1.442695
      %v3596 = vpow.pop %v3595
      %v3597 = vmul.f32 %v3508, 1.442695
      %v3598 = vpow.pop %v3597
      %v3599 = vmul.f32 %v3509, 1.442695
      %v3600 = vpow.pop %v3599
      %v3601 = vmul.f32 %v3510, 1.442695
      %v3602 = vpow.pop %v3601
      %v3603 = vsel %vm530, %v3514, 0.0
      %v3604 = vadd.f32 %v3512, %v3603
      %3605 = vadd.xlane.f32.xlu0 %v3604
      %v3606 = vpop.xlane.xlu0 %3605
      %v3607 = vsel %vm530, %v3518, 0.0
      %v3608 = vadd.f32 %v3516, %v3607
      %3609 = vadd.xlane.f32.xlu0 %v3608
      %v3610 = vpop.xlane.xlu0 %3609
      %v3611 = vsel %vm530, %v3522, 0.0
      %v3612 = vadd.f32 %v3520, %v3611
      %3613 = vadd.xlane.f32.xlu0 %v3612
      %v3614 = vpop.xlane.xlu0 %3613
      %v3615 = vsel %vm530, %v3526, 0.0
      %v3616 = vadd.f32 %v3524, %v3615
      %3617 = vadd.xlane.f32.xlu0 %v3616
      %v3618 = vpop.xlane.xlu0 %3617
      %v3619 = vsel %vm530, %v3530, 0.0
      %v3620 = vadd.f32 %v3528, %v3619
      %3621 = vadd.xlane.f32.xlu0 %v3620
      %v3622 = vpop.xlane.xlu0 %3621
      %v3623 = vsel %vm530, %v3534, 0.0
      %v3624 = vadd.f32 %v3532, %v3623
      %3625 = vadd.xlane.f32.xlu0 %v3624
      %v3626 = vpop.xlane.xlu0 %3625
      %v3627 = vsel %vm530, %v3538, 0.0
      %v3628 = vadd.f32 %v3536, %v3627
      %3629 = vadd.xlane.f32.xlu0 %v3628
      %v3630 = vpop.xlane.xlu0 %3629
      %v3631 = vsel %vm530, %v3542, 0.0
      %v3632 = vadd.f32 %v3540, %v3631
      %3633 = vadd.xlane.f32.xlu0 %v3632
      %v3634 = vpop.xlane.xlu0 %3633
      %v3635 = vsel %vm530, %v3546, 0.0
      %v3636 = vadd.f32 %v3544, %v3635
      %3637 = vadd.xlane.f32.xlu0 %v3636
      %v3638 = vpop.xlane.xlu0 %3637
      %v3639 = vsel %vm530, %v3550, 0.0
      %v3640 = vadd.f32 %v3548, %v3639
      %3641 = vadd.xlane.f32.xlu0 %v3640
      %v3642 = vpop.xlane.xlu0 %3641
      %v3643 = vsel %vm530, %v3554, 0.0
      %v3644 = vadd.f32 %v3552, %v3643
      %3645 = vadd.xlane.f32.xlu0 %v3644
      %v3646 = vpop.xlane.xlu0 %3645
      %v3647 = vsel %vm530, %v3558, 0.0
      %v3648 = vadd.f32 %v3556, %v3647
      %3649 = vadd.xlane.f32.xlu0 %v3648
      %v3650 = vpop.xlane.xlu0 %3649
      %v3651 = vsel %vm530, %v3562, 0.0
      %v3652 = vadd.f32 %v3560, %v3651
      %3653 = vadd.xlane.f32.xlu0 %v3652
      %v3654 = vpop.xlane.xlu0 %3653
      %v3655 = vsel %vm530, %v3566, 0.0
      %v3656 = vadd.f32 %v3564, %v3655
      %3657 = vadd.xlane.f32.xlu0 %v3656
      %v3658 = vpop.xlane.xlu0 %3657
      %v3659 = vsel %vm530, %v3570, 0.0
      %v3660 = vadd.f32 %v3568, %v3659
      %3661 = vadd.xlane.f32.xlu0 %v3660
      %v3662 = vpop.xlane.xlu0 %3661
      %v3663 = vsel %vm530, %v3574, 0.0
      %v3664 = vadd.f32 %v3572, %v3663
      %3665 = vadd.xlane.f32.xlu0 %v3664
      %v3666 = vpop.xlane.xlu0 %3665
      %v3667 = vsel %vm530, %v3578, 0.0
      %v3668 = vadd.f32 %v3576, %v3667
      %3669 = vadd.xlane.f32.xlu0 %v3668
      %v3670 = vpop.xlane.xlu0 %3669
      %v3671 = vsel %vm530, %v3582, 0.0
      %v3672 = vadd.f32 %v3580, %v3671
      %3673 = vadd.xlane.f32.xlu0 %v3672
      %v3674 = vpop.xlane.xlu0 %3673
      %v3675 = vsel %vm530, %v3586, 0.0
      %v3676 = vadd.f32 %v3584, %v3675
      %3677 = vadd.xlane.f32.xlu0 %v3676
      %v3678 = vpop.xlane.xlu0 %3677
      %v3679 = vsel %vm530, %v3590, 0.0
      %v3680 = vadd.f32 %v3588, %v3679
      %3681 = vadd.xlane.f32.xlu0 %v3680
      %v3682 = vpop.xlane.xlu0 %3681
      %v3683 = vsel %vm530, %v3594, 0.0
      %v3684 = vadd.f32 %v3592, %v3683
      %3685 = vadd.xlane.f32.xlu0 %v3684
      %v3686 = vpop.xlane.xlu0 %3685
      %v3687 = vsel %vm530, %v3598, 0.0
      %v3688 = vadd.f32 %v3596, %v3687
      %3689 = vadd.xlane.f32.xlu0 %v3688
      %v3690 = vpop.xlane.xlu0 %3689
      %v3691 = vsel %vm1172, %v3600, 0.0
      %v3692 = vsel %vm575, %v3602, 0.0
      %v3693 = vadd.f32 %v3691, %v3692
      %3694 = vadd.xlane.f32.xlu0 %v3693
      %v3695 = vpop.xlane.xlu0 %3694
      %v3696 = vpack.c.bf16 %v3516, %v3512
      %v3697 = vpack.c.bf16 %v3518, %v3514
      %v3698 = vpack.c.bf16 %v3524, %v3520
      %v3699 = vpack.c.bf16 %v3526, %v3522
      %v3700 = vpack.c.bf16 %v3532, %v3528
      %v3701 = vpack.c.bf16 %v3534, %v3530
      %v3702 = vpack.c.bf16 %v3540, %v3536
      %v3703 = vpack.c.bf16 %v3542, %v3538
      %v3704 = vpack.c.bf16 %v3548, %v3544
      %v3705 = vpack.c.bf16 %v3550, %v3546
      %v3706 = vpack.c.bf16 %v3556, %v3552
      %v3707 = vpack.c.bf16 %v3558, %v3554
      %v3708 = vpack.c.bf16 %v3564, %v3560
      %v3709 = vpack.c.bf16 %v3566, %v3562
      %v3710 = vpack.c.bf16 %v3572, %v3568
      %v3711 = vpack.c.bf16 %v3574, %v3570
      %v3712 = vpack.c.bf16 %v3580, %v3576
      %v3713 = vpack.c.bf16 %v3582, %v3578
      %v3714 = vpack.c.bf16 %v3588, %v3584
      %v3715 = vpack.c.bf16 %v3590, %v3586
      %v3716 = vpack.c.bf16 %v3596, %v3592
      %v3717 = vpack.c.bf16 %v3598, %v3594
      %v3718 = vpack.c.bf16 %v3600, %v3600
      %v3719 = vpack.c.bf16 %v3602, %v3602
      %v3721 = vsel %vm530, %v3697, 0
      %v3724 = vsel %vm530, %v3699, 0
      %v3727 = vsel %vm530, %v3701, 0
      %v3730 = vsel %vm530, %v3703, 0
      %v3733 = vsel %vm530, %v3705, 0
      %v3736 = vsel %vm530, %v3707, 0
      %v3739 = vsel %vm530, %v3709, 0
      %v3742 = vsel %vm530, %v3711, 0
      %v3745 = vsel %vm530, %v3713, 0
      %v3748 = vsel %vm530, %v3715, 0
      %v3751 = vsel %vm530, %v3717, 0
      %v3754 = vsel %vm530, %v3719, 0
      %3756 = vmatprep.subr.bf16.mxu0 0
      %3757 = vmatpush1.bf16.msra.mxu0 %v600
      %3758 = vmatprep.subr.bf16.mxu0 0
      %3759 = vmatpush1.bf16.msra.mxu0 %v601
      %3760 = vmatprep.subr.bf16.mxu0 0
      %3761 = vmatpush1.bf16.msra.mxu0 %v602
      %3762 = vmatprep.subr.bf16.mxu0 0
      %3763 = vmatpush1.bf16.msra.mxu0 %v603
      %3764 = vmatprep.subr.bf16.mxu0 0
      %3765 = vmatpush1.bf16.msra.mxu0 %v604
      %3766 = vmatprep.subr.bf16.mxu0 0
      %3767 = vmatpush1.bf16.msra.mxu0 %v605
      %3768 = vmatprep.subr.bf16.mxu0 0
      %3769 = vmatpush1.bf16.msra.mxu0 %v606
      %3770 = vmatprep.subr.bf16.mxu0 0
      %3771 = vmatpush1.bf16.msra.mxu0 %v607
      %3772 = vmatprep.subr.bf16.mxu0 0
      %3773 = vmatpush1.bf16.msra.mxu0 %v608
      %3774 = vmatprep.subr.bf16.mxu0 0
      %3775 = vmatpush1.bf16.msra.mxu0 %v609
      %3776 = vmatprep.subr.bf16.mxu0 0
      %3777 = vmatpush1.bf16.msra.mxu0 %v610
      %3778 = vmatprep.subr.bf16.mxu0 0
      %3779 = vmatpush1.bf16.msra.mxu0 %v1473
      %3780 = vmatprep.subr.bf16.mxu0 0
      %3781 = vmatpush1.bf16.msra.mxu0 0
      %3782 = vmatprep.subr.bf16.mxu0 0
      %3783 = vmatpush1.bf16.msra.mxu0 0
      %3784 = vmatprep.subr.bf16.mxu0 0
      %3785 = vmatpush1.bf16.msra.mxu0 0
      %3786 = vmatprep.subr.bf16.mxu0 0
      %3787 = vmatpush1.bf16.msra.mxu0 0
      %3788 = vmatprep.mubr.bf16.mxu0 %v3721
      %3789 = vmatmul.mubr.bf16.gmra.mrb[0].mxu0 %v3696
      %v3790 = vpop.f32.mrb[0].mxu0
      %v3791 = vadd.f32 0.0, %v3790
      %v3792 = vpop.f32.mrb[0].mxu0
      %v3793 = vpop.f32.mrb[0].mxu0
      %v3794 = vadd.f32 0.0, %v3793
      %v3795 = vpop.f32.mrb[0].mxu0
      %3796 = vmatprep.mubr.bf16.mxu0 %v3724
      %3797 = vmatmul.mubr.bf16.gmra.mrb[0].mxu0 %v3698
      %v3798 = vpop.f32.mrb[0].mxu0
      %v3799 = vadd.f32 0.0, %v3798
      %v3800 = vpop.f32.mrb[0].mxu0
      %v3801 = vpop.f32.mrb[0].mxu0
      %v3802 = vadd.f32 0.0, %v3801
      %v3803 = vpop.f32.mrb[0].mxu0
      %3804 = vmatprep.mubr.bf16.mxu0 %v3727
      %3805 = vmatmul.mubr.bf16.gmra.mrb[0].mxu0 %v3700
      %v3806 = vpop.f32.mrb[0].mxu0
      %v3807 = vadd.f32 0.0, %v3806
      %v3808 = vpop.f32.mrb[0].mxu0
      %v3809 = vpop.f32.mrb[0].mxu0
      %v3810 = vadd.f32 0.0, %v3809
      %v3811 = vpop.f32.mrb[0].mxu0
      %3812 = vmatprep.mubr.bf16.mxu0 %v3730
      %3813 = vmatmul.mubr.bf16.gmra.mrb[0].mxu0 %v3702
      %v3814 = vpop.f32.mrb[0].mxu0
      %v3815 = vadd.f32 0.0, %v3814
      %v3816 = vpop.f32.mrb[0].mxu0
      %v3817 = vpop.f32.mrb[0].mxu0
      %v3818 = vadd.f32 0.0, %v3817
      %v3819 = vpop.f32.mrb[0].mxu0
      %3820 = vmatprep.mubr.bf16.mxu0 %v3733
      %3821 = vmatmul.mubr.bf16.gmra.mrb[0].mxu0 %v3704
      %v3822 = vpop.f32.mrb[0].mxu0
      %v3823 = vadd.f32 0.0, %v3822
      %v3824 = vpop.f32.mrb[0].mxu0
      %v3825 = vpop.f32.mrb[0].mxu0
      %v3826 = vadd.f32 0.0, %v3825
      %v3827 = vpop.f32.mrb[0].mxu0
      %3828 = vmatprep.mubr.bf16.mxu0 %v3736
      %3829 = vmatmul.mubr.bf16.gmra.mrb[0].mxu0 %v3706
      %v3830 = vpop.f32.mrb[0].mxu0
      %v3831 = vadd.f32 0.0, %v3830
      %v3832 = vpop.f32.mrb[0].mxu0
      %v3833 = vpop.f32.mrb[0].mxu0
      %v3834 = vadd.f32 0.0, %v3833
      %v3835 = vpop.f32.mrb[0].mxu0
      %3836 = vmatprep.mubr.bf16.mxu0 %v3739
      %3837 = vmatmul.mubr.bf16.gmra.mrb[0].mxu0 %v3708
      %v3838 = vpop.f32.mrb[0].mxu0
      %v3839 = vadd.f32 0.0, %v3838
      %v3840 = vpop.f32.mrb[0].mxu0
      %v3841 = vpop.f32.mrb[0].mxu0
      %v3842 = vadd.f32 0.0, %v3841
      %v3843 = vpop.f32.mrb[0].mxu0
      %3844 = vmatprep.mubr.bf16.mxu0 %v3742
      %3845 = vmatmul.mubr.bf16.gmra.mrb[0].mxu0 %v3710
      %v3846 = vpop.f32.mrb[0].mxu0
      %v3847 = vadd.f32 0.0, %v3846
      %v3848 = vpop.f32.mrb[0].mxu0
      %v3849 = vpop.f32.mrb[0].mxu0
      %v3850 = vadd.f32 0.0, %v3849
      %v3851 = vpop.f32.mrb[0].mxu0
      %3852 = vmatprep.mubr.bf16.mxu0 %v3745
      %3853 = vmatmul.mubr.bf16.gmra.mrb[0].mxu0 %v3712
      %v3854 = vpop.f32.mrb[0].mxu0
      %v3855 = vadd.f32 0.0, %v3854
      %v3856 = vpop.f32.mrb[0].mxu0
      %v3857 = vpop.f32.mrb[0].mxu0
      %v3858 = vadd.f32 0.0, %v3857
      %v3859 = vpop.f32.mrb[0].mxu0
      %3860 = vmatprep.mubr.bf16.mxu0 %v3748
      %3861 = vmatmul.mubr.bf16.gmra.mrb[0].mxu0 %v3714
      %v3862 = vpop.f32.mrb[0].mxu0
      %v3863 = vadd.f32 0.0, %v3862
      %v3864 = vpop.f32.mrb[0].mxu0
      %v3865 = vpop.f32.mrb[0].mxu0
      %v3866 = vadd.f32 0.0, %v3865
      %v3867 = vpop.f32.mrb[0].mxu0
      %3868 = vmatprep.mubr.bf16.mxu0 %v3751
      %3869 = vmatmul.mubr.bf16.gmra.mrb[0].mxu0 %v3716
      %v3870 = vpop.f32.mrb[0].mxu0
      %v3871 = vadd.f32 0.0, %v3870
      %v3872 = vpop.f32.mrb[0].mxu0
      %v3873 = vpop.f32.mrb[0].mxu0
      %v3874 = vadd.f32 0.0, %v3873
      %v3875 = vpop.f32.mrb[0].mxu0
      %3876 = vmatprep.mubr.bf16.mxu0 %v3754
      %3877 = vmatmul.mubr.bf16.gmra.mrb[0].mxu0 %v3718
      %v3878 = vpop.f32.mrb[0].mxu0
      %v3879 = vadd.f32 0.0, %v3878
      %v3880 = vpop.f32.mrb[0].mxu0
      %v3881 = vpop.f32.mrb[0].mxu0
      %v3882 = vpop.f32.mrb[0].mxu0
      %3883 = vdwg.mxu0
      %v3884 = vrcp.pop %v3606
      %v3885 = vmul.f32 %v3791, %v3884
      %v3886 = vrcp.pop %v3610
      %v3887 = vmul.f32 %v3794, %v3886
      %v3888 = vrcp.pop %v3614
      %v3889 = vmul.f32 %v3799, %v3888
      %v3890 = vrcp.pop %v3618
      %v3891 = vmul.f32 %v3802, %v3890
      %v3892 = vrcp.pop %v3622
      %v3893 = vmul.f32 %v3807, %v3892
      %v3894 = vrcp.pop %v3626
      %v3895 = vmul.f32 %v3810, %v3894
      %v3896 = vrcp.pop %v3630
      %v3897 = vmul.f32 %v3815, %v3896
      %v3898 = vrcp.pop %v3634
      %v3899 = vmul.f32 %v3818, %v3898
      %v3900 = vrcp.pop %v3638
      %v3901 = vmul.f32 %v3823, %v3900
      %v3902 = vrcp.pop %v3642
      %v3903 = vmul.f32 %v3826, %v3902
      %v3904 = vrcp.pop %v3646
      %v3905 = vmul.f32 %v3831, %v3904
      %v3906 = vrcp.pop %v3650
      %v3907 = vmul.f32 %v3834, %v3906
      %v3908 = vrcp.pop %v3654
      %v3909 = vmul.f32 %v3839, %v3908
      %v3910 = vrcp.pop %v3658
      %v3911 = vmul.f32 %v3842, %v3910
      %v3912 = vrcp.pop %v3662
      %v3913 = vmul.f32 %v3847, %v3912
      %v3914 = vrcp.pop %v3666
      %v3915 = vmul.f32 %v3850, %v3914
      %v3916 = vrcp.pop %v3670
      %v3917 = vmul.f32 %v3855, %v3916
      %v3918 = vrcp.pop %v3674
      %v3919 = vmul.f32 %v3858, %v3918
      %v3920 = vrcp.pop %v3678
      %v3921 = vmul.f32 %v3863, %v3920
      %v3922 = vrcp.pop %v3682
      %v3923 = vmul.f32 %v3866, %v3922
      %v3924 = vrcp.pop %v3686
      %v3925 = vmul.f32 %v3871, %v3924
      %v3926 = vrcp.pop %v3690
      %v3927 = vmul.f32 %v3874, %v3926
      %v3928 = vrcp.pop %v3695
      %v3929 = vmul.f32 %v3879, %v3928
      %v3930 = vpack.c.bf16 %v3887, %v3885
      %v3931 = vpack.c.bf16 %v3891, %v3889
      %v3932 = vpack.c.bf16 %v3895, %v3893
      %v3933 = vpack.c.bf16 %v3899, %v3897
      %v3934 = vpack.c.bf16 %v3903, %v3901
      %v3935 = vpack.c.bf16 %v3907, %v3905
      %v3936 = vpack.c.bf16 %v3911, %v3909
      %v3937 = vpack.c.bf16 %v3915, %v3913
      %v3938 = vpack.c.bf16 %v3919, %v3917
      %v3939 = vpack.c.bf16 %v3923, %v3921
      %v3940 = vpack.c.bf16 %v3927, %v3925
      %v3941 = vpack.c.bf16 %v3929, %v3929
      %s3942 = scalar_lea.vmem %s2, 32
      %v3943 = vld [vmem:[%s3942] sm:$0xf]
      %v3944 = vld [vmem:[%s3942 + $0x4] sm:$0xf]
      %v3945 = vld [vmem:[%s3942 + $0x8] sm:$0xf]
      %v3946 = vld [vmem:[%s3942 + $0xc] sm:$0xf]
      %v3951 = vunpack.c.l.b16 %v3943
      %v3952 = vunpack.c.l.b16 %v3944
      %v3953 = vunpack.c.l.b16 %v3945
      %v3954 = vunpack.c.l.b16 %v3946
      %v3955 = vpack.c.b16 %v3952, %v3951
      %v3956 = vpack.c.b16 %v3954, %v3953
      %v3960 = vsel %vm628, %v3930, 0
      %v3963 = vsel %vm628, %v3931, 0
      %v3966 = vsel %vm628, %v3932, 0
      %v3969 = vsel %vm628, %v3933, 0
      %v3972 = vsel %vm628, %v3934, 0
      %v3975 = vsel %vm628, %v3935, 0
      %v3978 = vsel %vm628, %v3936, 0
      %v3981 = vsel %vm628, %v3937, 0
      %v3984 = vsel %vm628, %v3938, 0
      %v3987 = vsel %vm628, %v3939, 0
      %v3990 = vsel %vm628, %v3940, 0
      %v3993 = vsel %vm628, %v3941, 0
      %3995 = vmatprep.subr.bf16.mxu0 0
      %3996 = vmatpush1.bf16.msra.mxu0 %v3955
      %3997 = vmatprep.subr.bf16.mxu0 0
      %3998 = vmatpush1.bf16.msra.mxu0 %v3956
      %3999 = vmatprep.subr.bf16.mxu0 0
      %4000 = vmatpush1.bf16.msra.mxu0 0
      %4001 = vmatprep.subr.bf16.mxu0 0
      %4002 = vmatpush1.bf16.msra.mxu0 0
      %4003 = vmatprep.subr.bf16.mxu0 0
      %4004 = vmatpush1.bf16.msra.mxu0 0
      %4005 = vmatprep.subr.bf16.mxu0 0
      %4006 = vmatpush1.bf16.msra.mxu0 0
      %4007 = vmatprep.subr.bf16.mxu0 0
      %4008 = vmatpush1.bf16.msra.mxu0 0
      %4009 = vmatprep.subr.bf16.mxu0 0
      %4010 = vmatpush1.bf16.msra.mxu0 0
      %4011 = vmatprep.subr.bf16.mxu0 0
      %4012 = vmatpush1.bf16.msra.mxu0 0
      %4013 = vmatprep.subr.bf16.mxu0 0
      %4014 = vmatpush1.bf16.msra.mxu0 0
      %4015 = vmatprep.subr.bf16.mxu0 0
      %4016 = vmatpush1.bf16.msra.mxu0 0
      %4017 = vmatprep.subr.bf16.mxu0 0
      %4018 = vmatpush1.bf16.msra.mxu0 0
      %4019 = vmatprep.subr.bf16.mxu0 0
      %4020 = vmatpush1.bf16.msra.mxu0 0
      %4021 = vmatprep.subr.bf16.mxu0 0
      %4022 = vmatpush1.bf16.msra.mxu0 0
      %4023 = vmatprep.subr.bf16.mxu0 0
      %4024 = vmatpush1.bf16.msra.mxu0 0
      %4025 = vmatprep.subr.bf16.mxu0 0
      %4026 = vmatpush1.bf16.msra.mxu0 0
      %4027 = vmatprep.mubr.bf16.mxu0 0
      %4028 = vmatmul.mubr.bf16.gmra.mrb[0].mxu0 %v3960
      %v4029 = vpop.f32.mrb[0].mxu0
      %v4030 = vadd.f32 0.0, %v4029
      %v4031 = vpop.f32.mrb[0].mxu0
      %v4032 = vpop.f32.mrb[0].mxu0
      %v4033 = vadd.f32 0.0, %v4032
      %v4034 = vpop.f32.mrb[0].mxu0
      %4035 = vmatprep.mubr.bf16.mxu0 0
      %4036 = vmatmul.mubr.bf16.gmra.mrb[0].mxu0 %v3963
      %v4037 = vpop.f32.mrb[0].mxu0
      %v4038 = vadd.f32 0.0, %v4037
      %v4039 = vpop.f32.mrb[0].mxu0
      %v4040 = vpop.f32.mrb[0].mxu0
      %v4041 = vadd.f32 0.0, %v4040
      %v4042 = vpop.f32.mrb[0].mxu0
      %4043 = vmatprep.mubr.bf16.mxu0 0
      %4044 = vmatmul.mubr.bf16.gmra.mrb[0].mxu0 %v3966
      %v4045 = vpop.f32.mrb[0].mxu0
      %v4046 = vadd.f32 0.0, %v4045
      %v4047 = vpop.f32.mrb[0].mxu0
      %v4048 = vpop.f32.mrb[0].mxu0
      %v4049 = vadd.f32 0.0, %v4048
      %v4050 = vpop.f32.mrb[0].mxu0
      %4051 = vmatprep.mubr.bf16.mxu0 0
      %4052 = vmatmul.mubr.bf16.gmra.mrb[0].mxu0 %v3969
      %v4053 = vpop.f32.mrb[0].mxu0
      %v4054 = vadd.f32 0.0, %v4053
      %v4055 = vpop.f32.mrb[0].mxu0
      %v4056 = vpop.f32.mrb[0].mxu0
      %v4057 = vadd.f32 0.0, %v4056
      %v4058 = vpop.f32.mrb[0].mxu0
      %4059 = vmatprep.mubr.bf16.mxu0 0
      %4060 = vmatmul.mubr.bf16.gmra.mrb[0].mxu0 %v3972
      %v4061 = vpop.f32.mrb[0].mxu0
      %v4062 = vadd.f32 0.0, %v4061
      %v4063 = vpop.f32.mrb[0].mxu0
      %v4064 = vpop.f32.mrb[0].mxu0
      %v4065 = vadd.f32 0.0, %v4064
      %v4066 = vpop.f32.mrb[0].mxu0
      %4067 = vmatprep.mubr.bf16.mxu0 0
      %4068 = vmatmul.mubr.bf16.gmra.mrb[0].mxu0 %v3975
      %v4069 = vpop.f32.mrb[0].mxu0
      %v4070 = vadd.f32 0.0, %v4069
      %v4071 = vpop.f32.mrb[0].mxu0
      %v4072 = vpop.f32.mrb[0].mxu0
      %v4073 = vadd.f32 0.0, %v4072
      %v4074 = vpop.f32.mrb[0].mxu0
      %4075 = vmatprep.mubr.bf16.mxu0 0
      %4076 = vmatmul.mubr.bf16.gmra.mrb[0].mxu0 %v3978
      %v4077 = vpop.f32.mrb[0].mxu0
      %v4078 = vadd.f32 0.0, %v4077
      %v4079 = vpop.f32.mrb[0].mxu0
      %v4080 = vpop.f32.mrb[0].mxu0
      %v4081 = vadd.f32 0.0, %v4080
      %v4082 = vpop.f32.mrb[0].mxu0
      %4083 = vmatprep.mubr.bf16.mxu0 0
      %4084 = vmatmul.mubr.bf16.gmra.mrb[0].mxu0 %v3981
      %v4085 = vpop.f32.mrb[0].mxu0
      %v4086 = vadd.f32 0.0, %v4085
      %v4087 = vpop.f32.mrb[0].mxu0
      %v4088 = vpop.f32.mrb[0].mxu0
      %v4089 = vadd.f32 0.0, %v4088
      %v4090 = vpop.f32.mrb[0].mxu0
      %4091 = vmatprep.mubr.bf16.mxu0 0
      %4092 = vmatmul.mubr.bf16.gmra.mrb[0].mxu0 %v3984
      %v4093 = vpop.f32.mrb[0].mxu0
      %v4094 = vadd.f32 0.0, %v4093
      %v4095 = vpop.f32.mrb[0].mxu0
      %v4096 = vpop.f32.mrb[0].mxu0
      %v4097 = vadd.f32 0.0, %v4096
      %v4098 = vpop.f32.mrb[0].mxu0
      %4099 = vmatprep.mubr.bf16.mxu0 0
      %4100 = vmatmul.mubr.bf16.gmra.mrb[0].mxu0 %v3987
      %v4101 = vpop.f32.mrb[0].mxu0
      %v4102 = vadd.f32 0.0, %v4101
      %v4103 = vpop.f32.mrb[0].mxu0
      %v4104 = vpop.f32.mrb[0].mxu0
      %v4105 = vadd.f32 0.0, %v4104
      %v4106 = vpop.f32.mrb[0].mxu0
      %4107 = vmatprep.mubr.bf16.mxu0 0
      %4108 = vmatmul.mubr.bf16.gmra.mrb[0].mxu0 %v3990
      %v4109 = vpop.f32.mrb[0].mxu0
      %v4110 = vadd.f32 0.0, %v4109
      %v4111 = vpop.f32.mrb[0].mxu0
      %v4112 = vpop.f32.mrb[0].mxu0
      %v4113 = vadd.f32 0.0, %v4112
      %v4114 = vpop.f32.mrb[0].mxu0
      %4115 = vmatprep.mubr.bf16.mxu0 0
      %4116 = vmatmul.mubr.bf16.gmra.mrb[0].mxu0 %v3993
      %v4117 = vpop.f32.mrb[0].mxu0
      %v4118 = vadd.f32 0.0, %v4117
      %v4119 = vpop.f32.mrb[0].mxu0
      %v4120 = vpop.f32.mrb[0].mxu0
      %v4121 = vpop.f32.mrb[0].mxu0
      %4122 = vdwg.mxu0
      %v4123 = vadd.f32 %v2889, %v4030
      %v4124 = vadd.f32 %v2892, %v4033
      %v4125 = vadd.f32 %v2897, %v4038
      %v4126 = vadd.f32 %v2900, %v4041
      %v4127 = vadd.f32 %v2905, %v4046
      %v4128 = vadd.f32 %v2908, %v4049
      %v4129 = vadd.f32 %v2913, %v4054
      %v4130 = vadd.f32 %v2916, %v4057
      %v4131 = vadd.f32 %v2921, %v4062
      %v4132 = vadd.f32 %v2924, %v4065
      %v4133 = vadd.f32 %v2929, %v4070
      %v4134 = vadd.f32 %v2932, %v4073
      %v4135 = vadd.f32 %v2937, %v4078
      %v4136 = vadd.f32 %v2940, %v4081
      %v4137 = vadd.f32 %v2945, %v4086
      %v4138 = vadd.f32 %v2948, %v4089
      %v4139 = vadd.f32 %v2953, %v4094
      %v4140 = vadd.f32 %v2956, %v4097
      %v4141 = vadd.f32 %v2961, %v4102
      %v4142 = vadd.f32 %v2964, %v4105
      %v4143 = vadd.f32 %v2969, %v4110
      %v4144 = vadd.f32 %v2972, %v4113
      %v4145 = vadd.f32 %v2977, %v4118
      %s4146 = scalar_lea.vmem %s1, 48
      %v4147 = vld [vmem:[%s4146] sm:$0xf]
      %v4148 = vld [vmem:[%s4146 + $0x4] sm:$0xf]
      %v4149 = vld [vmem:[%s4146 + $0x8] sm:$0xf]
      %v4150 = vld [vmem:[%s4146 + $0xc] sm:$0xf]
      %v4155 = vunpack.c.l.b16 %v4147
      %v4156 = vunpack.c.l.b16 %v4148
      %v4157 = vunpack.c.l.b16 %v4149
      %v4158 = vunpack.c.l.b16 %v4150
      %v4159 = vpack.c.b16 %v4156, %v4155
      %v4160 = vpack.c.b16 %v4158, %v4157
      %4163 = vmatprep.subr.bf16.mxu0 0
      %4164 = vmatpush1.bf16.msra.mxu0 %v4159
      %4165 = vmatprep.subr.bf16.mxu0 0
      %4166 = vmatpush1.bf16.msra.mxu0 %v4160
      %4167 = vmatprep.subr.bf16.mxu0 0
      %4168 = vmatpush1.bf16.msra.mxu0 0
      %4169 = vmatprep.subr.bf16.mxu0 0
      %4170 = vmatpush1.bf16.msra.mxu0 0
      %4171 = vmatprep.subr.bf16.mxu0 0
      %4172 = vmatpush1.bf16.msra.mxu0 0
      %4173 = vmatprep.subr.bf16.mxu0 0
      %4174 = vmatpush1.bf16.msra.mxu0 0
      %4175 = vmatprep.subr.bf16.mxu0 0
      %4176 = vmatpush1.bf16.msra.mxu0 0
      %4177 = vmatprep.subr.bf16.mxu0 0
      %4178 = vmatpush1.bf16.msra.mxu0 0
      %4179 = vmatprep.subr.bf16.mxu0 0
      %4180 = vmatpush1.bf16.msra.mxu0 0
      %4181 = vmatprep.subr.bf16.mxu0 0
      %4182 = vmatpush1.bf16.msra.mxu0 0
      %4183 = vmatprep.subr.bf16.mxu0 0
      %4184 = vmatpush1.bf16.msra.mxu0 0
      %4185 = vmatprep.subr.bf16.mxu0 0
      %4186 = vmatpush1.bf16.msra.mxu0 0
      %4187 = vmatprep.subr.bf16.mxu0 0
      %4188 = vmatpush1.bf16.msra.mxu0 0
      %4189 = vmatprep.subr.bf16.mxu0 0
      %4190 = vmatpush1.bf16.msra.mxu0 0
      %4191 = vmatprep.subr.bf16.mxu0 0
      %4192 = vmatpush1.bf16.msra.mxu0 0
      %4193 = vmatprep.subr.bf16.mxu0 0
      %4194 = vmatpush1.bf16.msra.mxu0 0
      %4195 = vmatprep.mubr.bf16.mxu0 0
      %4196 = vmatmul.mubr.bf16.gmra.mrb[0].mxu0 %v630
      %v4197 = vpop.f32.mrb[0].mxu0
      %v4198 = vadd.f32 0.0, %v4197
      %v4199 = vpop.f32.mrb[0].mxu0
      %v4200 = vpop.f32.mrb[0].mxu0
      %v4201 = vadd.f32 0.0, %v4200
      %v4202 = vpop.f32.mrb[0].mxu0
      %4203 = vmatprep.mubr.bf16.mxu0 0
      %4204 = vmatmul.mubr.bf16.gmra.mrb[0].mxu0 %v633
      %v4205 = vpop.f32.mrb[0].mxu0
      %v4206 = vadd.f32 0.0, %v4205
      %v4207 = vpop.f32.mrb[0].mxu0
      %v4208 = vpop.f32.mrb[0].mxu0
      %v4209 = vadd.f32 0.0, %v4208
      %v4210 = vpop.f32.mrb[0].mxu0
      %4211 = vmatprep.mubr.bf16.mxu0 0
      %4212 = vmatmul.mubr.bf16.gmra.mrb[0].mxu0 %v636
      %v4213 = vpop.f32.mrb[0].mxu0
      %v4214 = vadd.f32 0.0, %v4213
      %v4215 = vpop.f32.mrb[0].mxu0
      %v4216 = vpop.f32.mrb[0].mxu0
      %v4217 = vadd.f32 0.0, %v4216
      %v4218 = vpop.f32.mrb[0].mxu0
      %4219 = vmatprep.mubr.bf16.mxu0 0
      %4220 = vmatmul.mubr.bf16.gmra.mrb[0].mxu0 %v639
      %v4221 = vpop.f32.mrb[0].mxu0
      %v4222 = vadd.f32 0.0, %v4221
      %v4223 = vpop.f32.mrb[0].mxu0
      %v4224 = vpop.f32.mrb[0].mxu0
      %v4225 = vadd.f32 0.0, %v4224
      %v4226 = vpop.f32.mrb[0].mxu0
      %4227 = vmatprep.mubr.bf16.mxu0 0
      %4228 = vmatmul.mubr.bf16.gmra.mrb[0].mxu0 %v642
      %v4229 = vpop.f32.mrb[0].mxu0
      %v4230 = vadd.f32 0.0, %v4229
      %v4231 = vpop.f32.mrb[0].mxu0
      %v4232 = vpop.f32.mrb[0].mxu0
      %v4233 = vadd.f32 0.0, %v4232
      %v4234 = vpop.f32.mrb[0].mxu0
      %4235 = vmatprep.mubr.bf16.mxu0 0
      %4236 = vmatmul.mubr.bf16.gmra.mrb[0].mxu0 %v645
      %v4237 = vpop.f32.mrb[0].mxu0
      %v4238 = vadd.f32 0.0, %v4237
      %v4239 = vpop.f32.mrb[0].mxu0
      %v4240 = vpop.f32.mrb[0].mxu0
      %v4241 = vadd.f32 0.0, %v4240
      %v4242 = vpop.f32.mrb[0].mxu0
      %4243 = vmatprep.mubr.bf16.mxu0 0
      %4244 = vmatmul.mubr.bf16.gmra.mrb[0].mxu0 %v648
      %v4245 = vpop.f32.mrb[0].mxu0
      %v4246 = vadd.f32 0.0, %v4245
      %v4247 = vpop.f32.mrb[0].mxu0
      %v4248 = vpop.f32.mrb[0].mxu0
      %v4249 = vadd.f32 0.0, %v4248
      %v4250 = vpop.f32.mrb[0].mxu0
      %4251 = vmatprep.mubr.bf16.mxu0 0
      %4252 = vmatmul.mubr.bf16.gmra.mrb[0].mxu0 %v651
      %v4253 = vpop.f32.mrb[0].mxu0
      %v4254 = vadd.f32 0.0, %v4253
      %v4255 = vpop.f32.mrb[0].mxu0
      %v4256 = vpop.f32.mrb[0].mxu0
      %v4257 = vadd.f32 0.0, %v4256
      %v4258 = vpop.f32.mrb[0].mxu0
      %4259 = vmatprep.mubr.bf16.mxu0 0
      %4260 = vmatmul.mubr.bf16.gmra.mrb[0].mxu0 %v654
      %v4261 = vpop.f32.mrb[0].mxu0
      %v4262 = vadd.f32 0.0, %v4261
      %v4263 = vpop.f32.mrb[0].mxu0
      %v4264 = vpop.f32.mrb[0].mxu0
      %v4265 = vadd.f32 0.0, %v4264
      %v4266 = vpop.f32.mrb[0].mxu0
      %4267 = vmatprep.mubr.bf16.mxu0 0
      %4268 = vmatmul.mubr.bf16.gmra.mrb[0].mxu0 %v657
      %v4269 = vpop.f32.mrb[0].mxu0
      %v4270 = vadd.f32 0.0, %v4269
      %v4271 = vpop.f32.mrb[0].mxu0
      %v4272 = vpop.f32.mrb[0].mxu0
      %v4273 = vadd.f32 0.0, %v4272
      %v4274 = vpop.f32.mrb[0].mxu0
      %4275 = vmatprep.mubr.bf16.mxu0 0
      %4276 = vmatmul.mubr.bf16.gmra.mrb[0].mxu0 %v660
      %v4277 = vpop.f32.mrb[0].mxu0
      %v4278 = vadd.f32 0.0, %v4277
      %v4279 = vpop.f32.mrb[0].mxu0
      %v4280 = vpop.f32.mrb[0].mxu0
      %v4281 = vadd.f32 0.0, %v4280
      %v4282 = vpop.f32.mrb[0].mxu0
      %4283 = vmatprep.mubr.bf16.mxu0 0
      %4284 = vmatmul.mubr.bf16.gmra.mrb[0].mxu0 %v663
      %v4285 = vpop.f32.mrb[0].mxu0
      %v4286 = vadd.f32 0.0, %v4285
      %v4287 = vpop.f32.mrb[0].mxu0
      %v4288 = vpop.f32.mrb[0].mxu0
      %v4289 = vpop.f32.mrb[0].mxu0
      %4290 = vdwg.mxu0
      %v4291 = vpack.c.bf16 %v4201, %v4198
      %v4292 = vpack.c.bf16 %v4209, %v4206
      %v4293 = vpack.c.bf16 %v4217, %v4214
      %v4294 = vpack.c.bf16 %v4225, %v4222
      %v4295 = vpack.c.bf16 %v4233, %v4230
      %v4296 = vpack.c.bf16 %v4241, %v4238
      %v4297 = vpack.c.bf16 %v4249, %v4246
      %v4298 = vpack.c.bf16 %v4257, %v4254
      %v4299 = vpack.c.bf16 %v4265, %v4262
      %v4300 = vpack.c.bf16 %v4273, %v4270
      %v4301 = vpack.c.bf16 %v4281, %v4278
      %v4302 = vpack.c.bf16 %v4286, %v4286
      %v4304 = vsel %vm628, %v4291, 0
      %v4307 = vsel %vm628, %v4292, 0
      %v4310 = vsel %vm628, %v4293, 0
      %v4313 = vsel %vm628, %v4294, 0
      %v4316 = vsel %vm628, %v4295, 0
      %v4319 = vsel %vm628, %v4296, 0
      %v4322 = vsel %vm628, %v4297, 0
      %v4325 = vsel %vm628, %v4298, 0
      %v4328 = vsel %vm628, %v4299, 0
      %v4331 = vsel %vm628, %v4300, 0
      %v4334 = vsel %vm628, %v4301, 0
      %v4337 = vsel %vm628, %v4302, 0
      %4339 = vmatprep.subr.bf16.mxu0 0
      %4340 = vmatpush1.bf16.xpose.msra.mxu0 %v630
      %4341 = vmatprep.subr.bf16.mxu0 0
      %4342 = vmatpush1.bf16.xpose.msra.mxu0 %v633
      %4343 = vmatprep.subr.bf16.mxu0 0
      %4344 = vmatpush1.bf16.xpose.msra.mxu0 %v636
      %4345 = vmatprep.subr.bf16.mxu0 0
      %4346 = vmatpush1.bf16.xpose.msra.mxu0 %v639
      %4347 = vmatprep.subr.bf16.mxu0 0
      %4348 = vmatpush1.bf16.xpose.msra.mxu0 %v642
      %4349 = vmatprep.subr.bf16.mxu0 0
      %4350 = vmatpush1.bf16.xpose.msra.mxu0 %v645
      %4351 = vmatprep.subr.bf16.mxu0 0
      %4352 = vmatpush1.bf16.xpose.msra.mxu0 %v648
      %4353 = vmatprep.subr.bf16.mxu0 0
      %4354 = vmatpush1.bf16.xpose.msra.mxu0 %v651
      %4355 = vmatprep.subr.bf16.mxu0 0
      %4356 = vmatpush1.bf16.xpose.msra.mxu0 %v654
      %4357 = vmatprep.subr.bf16.mxu0 0
      %4358 = vmatpush1.bf16.xpose.msra.mxu0 %v657
      %4359 = vmatprep.subr.bf16.mxu0 0
      %4360 = vmatpush1.bf16.xpose.msra.mxu0 %v660
      %4361 = vmatprep.subr.bf16.mxu0 0
      %4362 = vmatpush1.bf16.xpose.msra.mxu0 %v663
      %4363 = vmatprep.subr.bf16.mxu0 0
      %4364 = vmatpush1.bf16.xpose.msra.mxu0 0
      %4365 = vmatprep.subr.bf16.mxu0 0
      %4366 = vmatpush1.bf16.xpose.msra.mxu0 0
      %4367 = vmatprep.subr.bf16.mxu0 0
      %4368 = vmatpush1.bf16.xpose.msra.mxu0 0
      %4369 = vmatprep.subr.bf16.mxu0 0
      %4370 = vmatpush1.bf16.xpose.msra.mxu0 0
      %4371 = vmatprep.mubr.bf16.mxu0 0
      %4372 = vmatmul.mubr.bf16.gmra.mrb[0].mxu0 %v4304
      %v4373 = vpop.f32.mrb[0].mxu0
      %v4374 = vadd.f32 0.0, %v4373
      %v4375 = vpop.f32.mrb[0].mxu0
      %v4376 = vadd.f32 0.0, %v4375
      %v4377 = vpop.f32.mrb[0].mxu0
      %v4378 = vadd.f32 0.0, %v4377
      %v4379 = vpop.f32.mrb[0].mxu0
      %v4380 = vadd.f32 0.0, %v4379
      %4381 = vmatprep.mubr.bf16.mxu0 0
      %4382 = vmatmul.mubr.bf16.gmra.mrb[0].mxu0 %v4307
      %v4383 = vpop.f32.mrb[0].mxu0
      %v4384 = vadd.f32 0.0, %v4383
      %v4385 = vpop.f32.mrb[0].mxu0
      %v4386 = vadd.f32 0.0, %v4385
      %v4387 = vpop.f32.mrb[0].mxu0
      %v4388 = vadd.f32 0.0, %v4387
      %v4389 = vpop.f32.mrb[0].mxu0
      %v4390 = vadd.f32 0.0, %v4389
      %4391 = vmatprep.mubr.bf16.mxu0 0
      %4392 = vmatmul.mubr.bf16.gmra.mrb[0].mxu0 %v4310
      %v4393 = vpop.f32.mrb[0].mxu0
      %v4394 = vadd.f32 0.0, %v4393
      %v4395 = vpop.f32.mrb[0].mxu0
      %v4396 = vadd.f32 0.0, %v4395
      %v4397 = vpop.f32.mrb[0].mxu0
      %v4398 = vadd.f32 0.0, %v4397
      %v4399 = vpop.f32.mrb[0].mxu0
      %v4400 = vadd.f32 0.0, %v4399
      %4401 = vmatprep.mubr.bf16.mxu0 0
      %4402 = vmatmul.mubr.bf16.gmra.mrb[0].mxu0 %v4313
      %v4403 = vpop.f32.mrb[0].mxu0
      %v4404 = vadd.f32 0.0, %v4403
      %v4405 = vpop.f32.mrb[0].mxu0
      %v4406 = vadd.f32 0.0, %v4405
      %v4407 = vpop.f32.mrb[0].mxu0
      %v4408 = vadd.f32 0.0, %v4407
      %v4409 = vpop.f32.mrb[0].mxu0
      %v4410 = vadd.f32 0.0, %v4409
      %4411 = vmatprep.mubr.bf16.mxu0 0
      %4412 = vmatmul.mubr.bf16.gmra.mrb[0].mxu0 %v4316
      %v4413 = vpop.f32.mrb[0].mxu0
      %v4414 = vadd.f32 0.0, %v4413
      %v4415 = vpop.f32.mrb[0].mxu0
      %v4416 = vadd.f32 0.0, %v4415
      %v4417 = vpop.f32.mrb[0].mxu0
      %v4418 = vadd.f32 0.0, %v4417
      %v4419 = vpop.f32.mrb[0].mxu0
      %v4420 = vadd.f32 0.0, %v4419
      %4421 = vmatprep.mubr.bf16.mxu0 0
      %4422 = vmatmul.mubr.bf16.gmra.mrb[0].mxu0 %v4319
      %v4423 = vpop.f32.mrb[0].mxu0
      %v4424 = vadd.f32 0.0, %v4423
      %v4425 = vpop.f32.mrb[0].mxu0
      %v4426 = vadd.f32 0.0, %v4425
      %v4427 = vpop.f32.mrb[0].mxu0
      %v4428 = vadd.f32 0.0, %v4427
      %v4429 = vpop.f32.mrb[0].mxu0
      %v4430 = vadd.f32 0.0, %v4429
      %4431 = vmatprep.mubr.bf16.mxu0 0
      %4432 = vmatmul.mubr.bf16.gmra.mrb[0].mxu0 %v4322
      %v4433 = vpop.f32.mrb[0].mxu0
      %v4434 = vadd.f32 0.0, %v4433
      %v4435 = vpop.f32.mrb[0].mxu0
      %v4436 = vadd.f32 0.0, %v4435
      %v4437 = vpop.f32.mrb[0].mxu0
      %v4438 = vadd.f32 0.0, %v4437
      %v4439 = vpop.f32.mrb[0].mxu0
      %v4440 = vadd.f32 0.0, %v4439
      %4441 = vmatprep.mubr.bf16.mxu0 0
      %4442 = vmatmul.mubr.bf16.gmra.mrb[0].mxu0 %v4325
      %v4443 = vpop.f32.mrb[0].mxu0
      %v4444 = vadd.f32 0.0, %v4443
      %v4445 = vpop.f32.mrb[0].mxu0
      %v4446 = vadd.f32 0.0, %v4445
      %v4447 = vpop.f32.mrb[0].mxu0
      %v4448 = vadd.f32 0.0, %v4447
      %v4449 = vpop.f32.mrb[0].mxu0
      %v4450 = vadd.f32 0.0, %v4449
      %4451 = vmatprep.mubr.bf16.mxu0 0
      %4452 = vmatmul.mubr.bf16.gmra.mrb[0].mxu0 %v4328
      %v4453 = vpop.f32.mrb[0].mxu0
      %v4454 = vadd.f32 0.0, %v4453
      %v4455 = vpop.f32.mrb[0].mxu0
      %v4456 = vadd.f32 0.0, %v4455
      %v4457 = vpop.f32.mrb[0].mxu0
      %v4458 = vadd.f32 0.0, %v4457
      %v4459 = vpop.f32.mrb[0].mxu0
      %v4460 = vadd.f32 0.0, %v4459
      %4461 = vmatprep.mubr.bf16.mxu0 0
      %4462 = vmatmul.mubr.bf16.gmra.mrb[0].mxu0 %v4331
      %v4463 = vpop.f32.mrb[0].mxu0
      %v4464 = vadd.f32 0.0, %v4463
      %v4465 = vpop.f32.mrb[0].mxu0
      %v4466 = vadd.f32 0.0, %v4465
      %v4467 = vpop.f32.mrb[0].mxu0
      %v4468 = vadd.f32 0.0, %v4467
      %v4469 = vpop.f32.mrb[0].mxu0
      %v4470 = vadd.f32 0.0, %v4469
      %4471 = vmatprep.mubr.bf16.mxu0 0
      %4472 = vmatmul.mubr.bf16.gmra.mrb[0].mxu0 %v4334
      %v4473 = vpop.f32.mrb[0].mxu0
      %v4474 = vadd.f32 0.0, %v4473
      %v4475 = vpop.f32.mrb[0].mxu0
      %v4476 = vadd.f32 0.0, %v4475
      %v4477 = vpop.f32.mrb[0].mxu0
      %v4478 = vadd.f32 0.0, %v4477
      %v4479 = vpop.f32.mrb[0].mxu0
      %v4480 = vadd.f32 0.0, %v4479
      %4481 = vmatprep.mubr.bf16.mxu0 0
      %4482 = vmatmul.mubr.bf16.gmra.mrb[0].mxu0 %v4337
      %v4483 = vpop.f32.mrb[0].mxu0
      %v4484 = vadd.f32 0.0, %v4483
      %v4485 = vpop.f32.mrb[0].mxu0
      %v4486 = vadd.f32 0.0, %v4485
      %v4487 = vpop.f32.mrb[0].mxu0
      %v4488 = vpop.f32.mrb[0].mxu0
      %4489 = vdwg.mxu0
      %v4490 = vmul.f32 %v4374, %v992
      %v4491 = vmul.f32 %v4376, %v993
      %v4492 = vmul.f32 %v4378, %v994
      %v4493 = vmul.f32 %v4380, %v995
      %v4494 = vmul.f32 %v4384, %v996
      %v4495 = vmul.f32 %v4386, %v997
      %v4496 = vmul.f32 %v4388, %v998
      %v4497 = vmul.f32 %v4390, %v999
      %v4498 = vmul.f32 %v4394, %v1000
      %v4499 = vmul.f32 %v4396, %v1001
      %v4500 = vmul.f32 %v4398, %v1002
      %v4501 = vmul.f32 %v4400, %v1003
      %v4502 = vmul.f32 %v4404, %v1004
      %v4503 = vmul.f32 %v4406, %v1005
      %v4504 = vmul.f32 %v4408, %v1006
      %v4505 = vmul.f32 %v4410, %v1007
      %v4506 = vmul.f32 %v4414, %v1008
      %v4507 = vmul.f32 %v4416, %v1009
      %v4508 = vmul.f32 %v4418, %v1010
      %v4509 = vmul.f32 %v4420, %v1011
      %v4510 = vmul.f32 %v4424, %v1012
      %v4511 = vmul.f32 %v4426, %v1013
      %v4512 = vmul.f32 %v4428, %v1014
      %v4513 = vmul.f32 %v4430, %v1015
      %v4514 = vmul.f32 %v4434, %v1016
      %v4515 = vmul.f32 %v4436, %v1017
      %v4516 = vmul.f32 %v4438, %v1018
      %v4517 = vmul.f32 %v4440, %v1019
      %v4518 = vmul.f32 %v4444, %v1020
      %v4519 = vmul.f32 %v4446, %v1021
      %v4520 = vmul.f32 %v4448, %v1022
      %v4521 = vmul.f32 %v4450, %v1023
      %v4522 = vmul.f32 %v4454, %v1024
      %v4523 = vmul.f32 %v4456, %v1025
      %v4524 = vmul.f32 %v4458, %v1026
      %v4525 = vmul.f32 %v4460, %v1027
      %v4526 = vmul.f32 %v4464, %v1028
      %v4527 = vmul.f32 %v4466, %v1029
      %v4528 = vmul.f32 %v4468, %v1030
      %v4529 = vmul.f32 %v4470, %v1031
      %v4530 = vmul.f32 %v4474, %v1032
      %v4531 = vmul.f32 %v4476, %v1033
      %v4532 = vmul.f32 %v4478, %v1034
      %v4533 = vmul.f32 %v4480, %v1035
      %v4534 = vmul.f32 %v4484, %v1036
      %v4535 = vmul.f32 %v4486, %v1037
      %v4536 = vsel %vm530, %v4491, -inf
      %v4537 = vmax.f32 %v4490, %v4536
      %4538 = vmax.xlane.f32.xlu0 %v4537
      %v4539 = vpop.xlane.xlu0 %4538
      %v4540 = vsel %vm530, %v4493, -inf
      %v4541 = vmax.f32 %v4492, %v4540
      %4542 = vmax.xlane.f32.xlu0 %v4541
      %v4543 = vpop.xlane.xlu0 %4542
      %v4544 = vsel %vm530, %v4495, -inf
      %v4545 = vmax.f32 %v4494, %v4544
      %4546 = vmax.xlane.f32.xlu0 %v4545
      %v4547 = vpop.xlane.xlu0 %4546
      %v4548 = vsel %vm530, %v4497, -inf
      %v4549 = vmax.f32 %v4496, %v4548
      %4550 = vmax.xlane.f32.xlu0 %v4549
      %v4551 = vpop.xlane.xlu0 %4550
      %v4552 = vsel %vm530, %v4499, -inf
      %v4553 = vmax.f32 %v4498, %v4552
      %4554 = vmax.xlane.f32.xlu0 %v4553
      %v4555 = vpop.xlane.xlu0 %4554
      %v4556 = vsel %vm530, %v4501, -inf
      %v4557 = vmax.f32 %v4500, %v4556
      %4558 = vmax.xlane.f32.xlu0 %v4557
      %v4559 = vpop.xlane.xlu0 %4558
      %v4560 = vsel %vm530, %v4503, -inf
      %v4561 = vmax.f32 %v4502, %v4560
      %4562 = vmax.xlane.f32.xlu0 %v4561
      %v4563 = vpop.xlane.xlu0 %4562
      %v4564 = vsel %vm530, %v4505, -inf
      %v4565 = vmax.f32 %v4504, %v4564
      %4566 = vmax.xlane.f32.xlu0 %v4565
      %v4567 = vpop.xlane.xlu0 %4566
      %v4568 = vsel %vm530, %v4507, -inf
      %v4569 = vmax.f32 %v4506, %v4568
      %4570 = vmax.xlane.f32.xlu0 %v4569
      %v4571 = vpop.xlane.xlu0 %4570
      %v4572 = vsel %vm530, %v4509, -inf
      %v4573 = vmax.f32 %v4508, %v4572
      %4574 = vmax.xlane.f32.xlu0 %v4573
      %v4575 = vpop.xlane.xlu0 %4574
      %v4576 = vsel %vm530, %v4511, -inf
      %v4577 = vmax.f32 %v4510, %v4576
      %4578 = vmax.xlane.f32.xlu0 %v4577
      %v4579 = vpop.xlane.xlu0 %4578
      %v4580 = vsel %vm530, %v4513, -inf
      %v4581 = vmax.f32 %v4512, %v4580
      %4582 = vmax.xlane.f32.xlu0 %v4581
      %v4583 = vpop.xlane.xlu0 %4582
      %v4584 = vsel %vm530, %v4515, -inf
      %v4585 = vmax.f32 %v4514, %v4584
      %4586 = vmax.xlane.f32.xlu0 %v4585
      %v4587 = vpop.xlane.xlu0 %4586
      %v4588 = vsel %vm530, %v4517, -inf
      %v4589 = vmax.f32 %v4516, %v4588
      %4590 = vmax.xlane.f32.xlu0 %v4589
      %v4591 = vpop.xlane.xlu0 %4590
      %v4592 = vsel %vm530, %v4519, -inf
      %v4593 = vmax.f32 %v4518, %v4592
      %4594 = vmax.xlane.f32.xlu0 %v4593
      %v4595 = vpop.xlane.xlu0 %4594
      %v4596 = vsel %vm530, %v4521, -inf
      %v4597 = vmax.f32 %v4520, %v4596
      %4598 = vmax.xlane.f32.xlu0 %v4597
      %v4599 = vpop.xlane.xlu0 %4598
      %v4600 = vsel %vm530, %v4523, -inf
      %v4601 = vmax.f32 %v4522, %v4600
      %4602 = vmax.xlane.f32.xlu0 %v4601
      %v4603 = vpop.xlane.xlu0 %4602
      %v4604 = vsel %vm530, %v4525, -inf
      %v4605 = vmax.f32 %v4524, %v4604
      %4606 = vmax.xlane.f32.xlu0 %v4605
      %v4607 = vpop.xlane.xlu0 %4606
      %v4608 = vsel %vm530, %v4527, -inf
      %v4609 = vmax.f32 %v4526, %v4608
      %4610 = vmax.xlane.f32.xlu0 %v4609
      %v4611 = vpop.xlane.xlu0 %4610
      %v4612 = vsel %vm530, %v4529, -inf
      %v4613 = vmax.f32 %v4528, %v4612
      %4614 = vmax.xlane.f32.xlu0 %v4613
      %v4615 = vpop.xlane.xlu0 %4614
      %v4616 = vsel %vm530, %v4531, -inf
      %v4617 = vmax.f32 %v4530, %v4616
      %4618 = vmax.xlane.f32.xlu0 %v4617
      %v4619 = vpop.xlane.xlu0 %4618
      %v4620 = vsel %vm530, %v4533, -inf
      %v4621 = vmax.f32 %v4532, %v4620
      %4622 = vmax.xlane.f32.xlu0 %v4621
      %v4623 = vpop.xlane.xlu0 %4622
      %v4624 = vsel %vm1172, %v4534, -inf
      %v4625 = vsel %vm575, %v4535, -inf
      %v4626 = vmax.f32 %v4624, %v4625
      %4627 = vmax.xlane.f32.xlu0 %v4626
      %v4628 = vpop.xlane.xlu0 %4627
      %v4629 = vsub.f32 %v4490, %v4539
      %v4630 = vsub.f32 %v4491, %v4539
      %v4631 = vsub.f32 %v4492, %v4543
      %v4632 = vsub.f32 %v4493, %v4543
      %v4633 = vsub.f32 %v4494, %v4547
      %v4634 = vsub.f32 %v4495, %v4547
      %v4635 = vsub.f32 %v4496, %v4551
      %v4636 = vsub.f32 %v4497, %v4551
      %v4637 = vsub.f32 %v4498, %v4555
      %v4638 = vsub.f32 %v4499, %v4555
      %v4639 = vsub.f32 %v4500, %v4559
      %v4640 = vsub.f32 %v4501, %v4559
      %v4641 = vsub.f32 %v4502, %v4563
      %v4642 = vsub.f32 %v4503, %v4563
      %v4643 = vsub.f32 %v4504, %v4567
      %v4644 = vsub.f32 %v4505, %v4567
      %v4645 = vsub.f32 %v4506, %v4571
      %v4646 = vsub.f32 %v4507, %v4571
      %v4647 = vsub.f32 %v4508, %v4575
      %v4648 = vsub.f32 %v4509, %v4575
      %v4649 = vsub.f32 %v4510, %v4579
      %v4650 = vsub.f32 %v4511, %v4579
      %v4651 = vsub.f32 %v4512, %v4583
      %v4652 = vsub.f32 %v4513, %v4583
      %v4653 = vsub.f32 %v4514, %v4587
      %v4654 = vsub.f32 %v4515, %v4587
      %v4655 = vsub.f32 %v4516, %v4591
      %v4656 = vsub.f32 %v4517, %v4591
      %v4657 = vsub.f32 %v4518, %v4595
      %v4658 = vsub.f32 %v4519, %v4595
      %v4659 = vsub.f32 %v4520, %v4599
      %v4660 = vsub.f32 %v4521, %v4599
      %v4661 = vsub.f32 %v4522, %v4603
      %v4662 = vsub.f32 %v4523, %v4603
      %v4663 = vsub.f32 %v4524, %v4607
      %v4664 = vsub.f32 %v4525, %v4607
      %v4665 = vsub.f32 %v4526, %v4611
      %v4666 = vsub.f32 %v4527, %v4611
      %v4667 = vsub.f32 %v4528, %v4615
      %v4668 = vsub.f32 %v4529, %v4615
      %v4669 = vsub.f32 %v4530, %v4619
      %v4670 = vsub.f32 %v4531, %v4619
      %v4671 = vsub.f32 %v4532, %v4623
      %v4672 = vsub.f32 %v4533, %v4623
      %v4673 = vsub.f32 %v4534, %v4628
      %v4674 = vsub.f32 %v4535, %v4628
      %v4675 = vmul.f32 %v4629, 1.442695
      %v4676 = vpow.pop %v4675
      %v4677 = vmul.f32 %v4630, 1.442695
      %v4678 = vpow.pop %v4677
      %v4679 = vmul.f32 %v4631, 1.442695
      %v4680 = vpow.pop %v4679
      %v4681 = vmul.f32 %v4632, 1.442695
      %v4682 = vpow.pop %v4681
      %v4683 = vmul.f32 %v4633, 1.442695
      %v4684 = vpow.pop %v4683
      %v4685 = vmul.f32 %v4634, 1.442695
      %v4686 = vpow.pop %v4685
      %v4687 = vmul.f32 %v4635, 1.442695
      %v4688 = vpow.pop %v4687
      %v4689 = vmul.f32 %v4636, 1.442695
      %v4690 = vpow.pop %v4689
      %v4691 = vmul.f32 %v4637, 1.442695
      %v4692 = vpow.pop %v4691
      %v4693 = vmul.f32 %v4638, 1.442695
      %v4694 = vpow.pop %v4693
      %v4695 = vmul.f32 %v4639, 1.442695
      %v4696 = vpow.pop %v4695
      %v4697 = vmul.f32 %v4640, 1.442695
      %v4698 = vpow.pop %v4697
      %v4699 = vmul.f32 %v4641, 1.442695
      %v4700 = vpow.pop %v4699
      %v4701 = vmul.f32 %v4642, 1.442695
      %v4702 = vpow.pop %v4701
      %v4703 = vmul.f32 %v4643, 1.442695
      %v4704 = vpow.pop %v4703
      %v4705 = vmul.f32 %v4644, 1.442695
      %v4706 = vpow.pop %v4705
      %v4707 = vmul.f32 %v4645, 1.442695
      %v4708 = vpow.pop %v4707
      %v4709 = vmul.f32 %v4646, 1.442695
      %v4710 = vpow.pop %v4709
      %v4711 = vmul.f32 %v4647, 1.442695
      %v4712 = vpow.pop %v4711
      %v4713 = vmul.f32 %v4648, 1.442695
      %v4714 = vpow.pop %v4713
      %v4715 = vmul.f32 %v4649, 1.442695
      %v4716 = vpow.pop %v4715
      %v4717 = vmul.f32 %v4650, 1.442695
      %v4718 = vpow.pop %v4717
      %v4719 = vmul.f32 %v4651, 1.442695
      %v4720 = vpow.pop %v4719
      %v4721 = vmul.f32 %v4652, 1.442695
      %v4722 = vpow.pop %v4721
      %v4723 = vmul.f32 %v4653, 1.442695
      %v4724 = vpow.pop %v4723
      %v4725 = vmul.f32 %v4654, 1.442695
      %v4726 = vpow.pop %v4725
      %v4727 = vmul.f32 %v4655, 1.442695
      %v4728 = vpow.pop %v4727
      %v4729 = vmul.f32 %v4656, 1.442695
      %v4730 = vpow.pop %v4729
      %v4731 = vmul.f32 %v4657, 1.442695
      %v4732 = vpow.pop %v4731
      %v4733 = vmul.f32 %v4658, 1.442695
      %v4734 = vpow.pop %v4733
      %v4735 = vmul.f32 %v4659, 1.442695
      %v4736 = vpow.pop %v4735
      %v4737 = vmul.f32 %v4660, 1.442695
      %v4738 = vpow.pop %v4737
      %v4739 = vmul.f32 %v4661, 1.442695
      %v4740 = vpow.pop %v4739
      %v4741 = vmul.f32 %v4662, 1.442695
      %v4742 = vpow.pop %v4741
      %v4743 = vmul.f32 %v4663, 1.442695
      %v4744 = vpow.pop %v4743
      %v4745 = vmul.f32 %v4664, 1.442695
      %v4746 = vpow.pop %v4745
      %v4747 = vmul.f32 %v4665, 1.442695
      %v4748 = vpow.pop %v4747
      %v4749 = vmul.f32 %v4666, 1.442695
      %v4750 = vpow.pop %v4749
      %v4751 = vmul.f32 %v4667, 1.442695
      %v4752 = vpow.pop %v4751
      %v4753 = vmul.f32 %v4668, 1.442695
      %v4754 = vpow.pop %v4753
      %v4755 = vmul.f32 %v4669, 1.442695
      %v4756 = vpow.pop %v4755
      %v4757 = vmul.f32 %v4670, 1.442695
      %v4758 = vpow.pop %v4757
      %v4759 = vmul.f32 %v4671, 1.442695
      %v4760 = vpow.pop %v4759
      %v4761 = vmul.f32 %v4672, 1.442695
      %v4762 = vpow.pop %v4761
      %v4763 = vmul.f32 %v4673, 1.442695
      %v4764 = vpow.pop %v4763
      %v4765 = vmul.f32 %v4674, 1.442695
      %v4766 = vpow.pop %v4765
      %v4767 = vsel %vm530, %v4678, 0.0
      %v4768 = vadd.f32 %v4676, %v4767
      %4769 = vadd.xlane.f32.xlu0 %v4768
      %v4770 = vpop.xlane.xlu0 %4769
      %v4771 = vsel %vm530, %v4682, 0.0
      %v4772 = vadd.f32 %v4680, %v4771
      %4773 = vadd.xlane.f32.xlu0 %v4772
      %v4774 = vpop.xlane.xlu0 %4773
      %v4775 = vsel %vm530, %v4686, 0.0
      %v4776 = vadd.f32 %v4684, %v4775
      %4777 = vadd.xlane.f32.xlu0 %v4776
      %v4778 = vpop.xlane.xlu0 %4777
      %v4779 = vsel %vm530, %v4690, 0.0
      %v4780 = vadd.f32 %v4688, %v4779
      %4781 = vadd.xlane.f32.xlu0 %v4780
      %v4782 = vpop.xlane.xlu0 %4781
      %v4783 = vsel %vm530, %v4694, 0.0
      %v4784 = vadd.f32 %v4692, %v4783
      %4785 = vadd.xlane.f32.xlu0 %v4784
      %v4786 = vpop.xlane.xlu0 %4785
      %v4787 = vsel %vm530, %v4698, 0.0
      %v4788 = vadd.f32 %v4696, %v4787
      %4789 = vadd.xlane.f32.xlu0 %v4788
      %v4790 = vpop.xlane.xlu0 %4789
      %v4791 = vsel %vm530, %v4702, 0.0
      %v4792 = vadd.f32 %v4700, %v4791
      %4793 = vadd.xlane.f32.xlu0 %v4792
      %v4794 = vpop.xlane.xlu0 %4793
      %v4795 = vsel %vm530, %v4706, 0.0
      %v4796 = vadd.f32 %v4704, %v4795
      %4797 = vadd.xlane.f32.xlu0 %v4796
      %v4798 = vpop.xlane.xlu0 %4797
      %v4799 = vsel %vm530, %v4710, 0.0
      %v4800 = vadd.f32 %v4708, %v4799
      %4801 = vadd.xlane.f32.xlu0 %v4800
      %v4802 = vpop.xlane.xlu0 %4801
      %v4803 = vsel %vm530, %v4714, 0.0
      %v4804 = vadd.f32 %v4712, %v4803
      %4805 = vadd.xlane.f32.xlu0 %v4804
      %v4806 = vpop.xlane.xlu0 %4805
      %v4807 = vsel %vm530, %v4718, 0.0
      %v4808 = vadd.f32 %v4716, %v4807
      %4809 = vadd.xlane.f32.xlu0 %v4808
      %v4810 = vpop.xlane.xlu0 %4809
      %v4811 = vsel %vm530, %v4722, 0.0
      %v4812 = vadd.f32 %v4720, %v4811
      %4813 = vadd.xlane.f32.xlu0 %v4812
      %v4814 = vpop.xlane.xlu0 %4813
      %v4815 = vsel %vm530, %v4726, 0.0
      %v4816 = vadd.f32 %v4724, %v4815
      %4817 = vadd.xlane.f32.xlu0 %v4816
      %v4818 = vpop.xlane.xlu0 %4817
      %v4819 = vsel %vm530, %v4730, 0.0
      %v4820 = vadd.f32 %v4728, %v4819
      %4821 = vadd.xlane.f32.xlu0 %v4820
      %v4822 = vpop.xlane.xlu0 %4821
      %v4823 = vsel %vm530, %v4734, 0.0
      %v4824 = vadd.f32 %v4732, %v4823
      %4825 = vadd.xlane.f32.xlu0 %v4824
      %v4826 = vpop.xlane.xlu0 %4825
      %v4827 = vsel %vm530, %v4738, 0.0
      %v4828 = vadd.f32 %v4736, %v4827
      %4829 = vadd.xlane.f32.xlu0 %v4828
      %v4830 = vpop.xlane.xlu0 %4829
      %v4831 = vsel %vm530, %v4742, 0.0
      %v4832 = vadd.f32 %v4740, %v4831
      %4833 = vadd.xlane.f32.xlu0 %v4832
      %v4834 = vpop.xlane.xlu0 %4833
      %v4835 = vsel %vm530, %v4746, 0.0
      %v4836 = vadd.f32 %v4744, %v4835
      %4837 = vadd.xlane.f32.xlu0 %v4836
      %v4838 = vpop.xlane.xlu0 %4837
      %v4839 = vsel %vm530, %v4750, 0.0
      %v4840 = vadd.f32 %v4748, %v4839
      %4841 = vadd.xlane.f32.xlu0 %v4840
      %v4842 = vpop.xlane.xlu0 %4841
      %v4843 = vsel %vm530, %v4754, 0.0
      %v4844 = vadd.f32 %v4752, %v4843
      %4845 = vadd.xlane.f32.xlu0 %v4844
      %v4846 = vpop.xlane.xlu0 %4845
      %v4847 = vsel %vm530, %v4758, 0.0
      %v4848 = vadd.f32 %v4756, %v4847
      %4849 = vadd.xlane.f32.xlu0 %v4848
      %v4850 = vpop.xlane.xlu0 %4849
      %v4851 = vsel %vm530, %v4762, 0.0
      %v4852 = vadd.f32 %v4760, %v4851
      %4853 = vadd.xlane.f32.xlu0 %v4852
      %v4854 = vpop.xlane.xlu0 %4853
      %v4855 = vsel %vm1172, %v4764, 0.0
      %v4856 = vsel %vm575, %v4766, 0.0
      %v4857 = vadd.f32 %v4855, %v4856
      %4858 = vadd.xlane.f32.xlu0 %v4857
      %v4859 = vpop.xlane.xlu0 %4858
      %v4860 = vpack.c.bf16 %v4680, %v4676
      %v4861 = vpack.c.bf16 %v4682, %v4678
      %v4862 = vpack.c.bf16 %v4688, %v4684
      %v4863 = vpack.c.bf16 %v4690, %v4686
      %v4864 = vpack.c.bf16 %v4696, %v4692
      %v4865 = vpack.c.bf16 %v4698, %v4694
      %v4866 = vpack.c.bf16 %v4704, %v4700
      %v4867 = vpack.c.bf16 %v4706, %v4702
      %v4868 = vpack.c.bf16 %v4712, %v4708
      %v4869 = vpack.c.bf16 %v4714, %v4710
      %v4870 = vpack.c.bf16 %v4720, %v4716
      %v4871 = vpack.c.bf16 %v4722, %v4718
      %v4872 = vpack.c.bf16 %v4728, %v4724
      %v4873 = vpack.c.bf16 %v4730, %v4726
      %v4874 = vpack.c.bf16 %v4736, %v4732
      %v4875 = vpack.c.bf16 %v4738, %v4734
      %v4876 = vpack.c.bf16 %v4744, %v4740
      %v4877 = vpack.c.bf16 %v4746, %v4742
      %v4878 = vpack.c.bf16 %v4752, %v4748
      %v4879 = vpack.c.bf16 %v4754, %v4750
      %v4880 = vpack.c.bf16 %v4760, %v4756
      %v4881 = vpack.c.bf16 %v4762, %v4758
      %v4882 = vpack.c.bf16 %v4764, %v4764
      %v4883 = vpack.c.bf16 %v4766, %v4766
      %v4885 = vsel %vm530, %v4861, 0
      %v4888 = vsel %vm530, %v4863, 0
      %v4891 = vsel %vm530, %v4865, 0
      %v4894 = vsel %vm530, %v4867, 0
      %v4897 = vsel %vm530, %v4869, 0
      %v4900 = vsel %vm530, %v4871, 0
      %v4903 = vsel %vm530, %v4873, 0
      %v4906 = vsel %vm530, %v4875, 0
      %v4909 = vsel %vm530, %v4877, 0
      %v4912 = vsel %vm530, %v4879, 0
      %v4915 = vsel %vm530, %v4881, 0
      %v4918 = vsel %vm530, %v4883, 0
      %4920 = vmatprep.subr.bf16.mxu0 0
      %4921 = vmatpush1.bf16.msra.mxu0 %v600
      %4922 = vmatprep.subr.bf16.mxu0 0
      %4923 = vmatpush1.bf16.msra.mxu0 %v601
      %4924 = vmatprep.subr.bf16.mxu0 0
      %4925 = vmatpush1.bf16.msra.mxu0 %v602
      %4926 = vmatprep.subr.bf16.mxu0 0
      %4927 = vmatpush1.bf16.msra.mxu0 %v603
      %4928 = vmatprep.subr.bf16.mxu0 0
      %4929 = vmatpush1.bf16.msra.mxu0 %v604
      %4930 = vmatprep.subr.bf16.mxu0 0
      %4931 = vmatpush1.bf16.msra.mxu0 %v605
      %4932 = vmatprep.subr.bf16.mxu0 0
      %4933 = vmatpush1.bf16.msra.mxu0 %v606
      %4934 = vmatprep.subr.bf16.mxu0 0
      %4935 = vmatpush1.bf16.msra.mxu0 %v607
      %4936 = vmatprep.subr.bf16.mxu0 0
      %4937 = vmatpush1.bf16.msra.mxu0 %v608
      %4938 = vmatprep.subr.bf16.mxu0 0
      %4939 = vmatpush1.bf16.msra.mxu0 %v609
      %4940 = vmatprep.subr.bf16.mxu0 0
      %4941 = vmatpush1.bf16.msra.mxu0 %v610
      %4942 = vmatprep.subr.bf16.mxu0 0
      %4943 = vmatpush1.bf16.msra.mxu0 %v1473
      %4944 = vmatprep.subr.bf16.mxu0 0
      %4945 = vmatpush1.bf16.msra.mxu0 0
      %4946 = vmatprep.subr.bf16.mxu0 0
      %4947 = vmatpush1.bf16.msra.mxu0 0
      %4948 = vmatprep.subr.bf16.mxu0 0
      %4949 = vmatpush1.bf16.msra.mxu0 0
      %4950 = vmatprep.subr.bf16.mxu0 0
      %4951 = vmatpush1.bf16.msra.mxu0 0
      %4952 = vmatprep.mubr.bf16.mxu0 %v4885
      %4953 = vmatmul.mubr.bf16.gmra.mrb[0].mxu0 %v4860
      %v4954 = vpop.f32.mrb[0].mxu0
      %v4955 = vadd.f32 0.0, %v4954
      %v4956 = vpop.f32.mrb[0].mxu0
      %v4957 = vpop.f32.mrb[0].mxu0
      %v4958 = vadd.f32 0.0, %v4957
      %v4959 = vpop.f32.mrb[0].mxu0
      %4960 = vmatprep.mubr.bf16.mxu0 %v4888
      %4961 = vmatmul.mubr.bf16.gmra.mrb[0].mxu0 %v4862
      %v4962 = vpop.f32.mrb[0].mxu0
      %v4963 = vadd.f32 0.0, %v4962
      %v4964 = vpop.f32.mrb[0].mxu0
      %v4965 = vpop.f32.mrb[0].mxu0
      %v4966 = vadd.f32 0.0, %v4965
      %v4967 = vpop.f32.mrb[0].mxu0
      %4968 = vmatprep.mubr.bf16.mxu0 %v4891
      %4969 = vmatmul.mubr.bf16.gmra.mrb[0].mxu0 %v4864
      %v4970 = vpop.f32.mrb[0].mxu0
      %v4971 = vadd.f32 0.0, %v4970
      %v4972 = vpop.f32.mrb[0].mxu0
      %v4973 = vpop.f32.mrb[0].mxu0
      %v4974 = vadd.f32 0.0, %v4973
      %v4975 = vpop.f32.mrb[0].mxu0
      %4976 = vmatprep.mubr.bf16.mxu0 %v4894
      %4977 = vmatmul.mubr.bf16.gmra.mrb[0].mxu0 %v4866
      %v4978 = vpop.f32.mrb[0].mxu0
      %v4979 = vadd.f32 0.0, %v4978
      %v4980 = vpop.f32.mrb[0].mxu0
      %v4981 = vpop.f32.mrb[0].mxu0
      %v4982 = vadd.f32 0.0, %v4981
      %v4983 = vpop.f32.mrb[0].mxu0
      %4984 = vmatprep.mubr.bf16.mxu0 %v4897
      %4985 = vmatmul.mubr.bf16.gmra.mrb[0].mxu0 %v4868
      %v4986 = vpop.f32.mrb[0].mxu0
      %v4987 = vadd.f32 0.0, %v4986
      %v4988 = vpop.f32.mrb[0].mxu0
      %v4989 = vpop.f32.mrb[0].mxu0
      %v4990 = vadd.f32 0.0, %v4989
      %v4991 = vpop.f32.mrb[0].mxu0
      %4992 = vmatprep.mubr.bf16.mxu0 %v4900
      %4993 = vmatmul.mubr.bf16.gmra.mrb[0].mxu0 %v4870
      %v4994 = vpop.f32.mrb[0].mxu0
      %v4995 = vadd.f32 0.0, %v4994
      %v4996 = vpop.f32.mrb[0].mxu0
      %v4997 = vpop.f32.mrb[0].mxu0
      %v4998 = vadd.f32 0.0, %v4997
      %v4999 = vpop.f32.mrb[0].mxu0
      %5000 = vmatprep.mubr.bf16.mxu0 %v4903
      %5001 = vmatmul.mubr.bf16.gmra.mrb[0].mxu0 %v4872
      %v5002 = vpop.f32.mrb[0].mxu0
      %v5003 = vadd.f32 0.0, %v5002
      %v5004 = vpop.f32.mrb[0].mxu0
      %v5005 = vpop.f32.mrb[0].mxu0
      %v5006 = vadd.f32 0.0, %v5005
      %v5007 = vpop.f32.mrb[0].mxu0
      %5008 = vmatprep.mubr.bf16.mxu0 %v4906
      %5009 = vmatmul.mubr.bf16.gmra.mrb[0].mxu0 %v4874
      %v5010 = vpop.f32.mrb[0].mxu0
      %v5011 = vadd.f32 0.0, %v5010
      %v5012 = vpop.f32.mrb[0].mxu0
      %v5013 = vpop.f32.mrb[0].mxu0
      %v5014 = vadd.f32 0.0, %v5013
      %v5015 = vpop.f32.mrb[0].mxu0
      %5016 = vmatprep.mubr.bf16.mxu0 %v4909
      %5017 = vmatmul.mubr.bf16.gmra.mrb[0].mxu0 %v4876
      %v5018 = vpop.f32.mrb[0].mxu0
      %v5019 = vadd.f32 0.0, %v5018
      %v5020 = vpop.f32.mrb[0].mxu0
      %v5021 = vpop.f32.mrb[0].mxu0
      %v5022 = vadd.f32 0.0, %v5021
      %v5023 = vpop.f32.mrb[0].mxu0
      %5024 = vmatprep.mubr.bf16.mxu0 %v4912
      %5025 = vmatmul.mubr.bf16.gmra.mrb[0].mxu0 %v4878
      %v5026 = vpop.f32.mrb[0].mxu0
      %v5027 = vadd.f32 0.0, %v5026
      %v5028 = vpop.f32.mrb[0].mxu0
      %v5029 = vpop.f32.mrb[0].mxu0
      %v5030 = vadd.f32 0.0, %v5029
      %v5031 = vpop.f32.mrb[0].mxu0
      %5032 = vmatprep.mubr.bf16.mxu0 %v4915
      %5033 = vmatmul.mubr.bf16.gmra.mrb[0].mxu0 %v4880
      %v5034 = vpop.f32.mrb[0].mxu0
      %v5035 = vadd.f32 0.0, %v5034
      %v5036 = vpop.f32.mrb[0].mxu0
      %v5037 = vpop.f32.mrb[0].mxu0
      %v5038 = vadd.f32 0.0, %v5037
      %v5039 = vpop.f32.mrb[0].mxu0
      %5040 = vmatprep.mubr.bf16.mxu0 %v4918
      %5041 = vmatmul.mubr.bf16.gmra.mrb[0].mxu0 %v4882
      %v5042 = vpop.f32.mrb[0].mxu0
      %v5043 = vadd.f32 0.0, %v5042
      %v5044 = vpop.f32.mrb[0].mxu0
      %v5045 = vpop.f32.mrb[0].mxu0
      %v5046 = vpop.f32.mrb[0].mxu0
      %5047 = vdwg.mxu0
      %v5048 = vrcp.pop %v4770
      %v5049 = vmul.f32 %v4955, %v5048
      %v5050 = vrcp.pop %v4774
      %v5051 = vmul.f32 %v4958, %v5050
      %v5052 = vrcp.pop %v4778
      %v5053 = vmul.f32 %v4963, %v5052
      %v5054 = vrcp.pop %v4782
      %v5055 = vmul.f32 %v4966, %v5054
      %v5056 = vrcp.pop %v4786
      %v5057 = vmul.f32 %v4971, %v5056
      %v5058 = vrcp.pop %v4790
      %v5059 = vmul.f32 %v4974, %v5058
      %v5060 = vrcp.pop %v4794
      %v5061 = vmul.f32 %v4979, %v5060
      %v5062 = vrcp.pop %v4798
      %v5063 = vmul.f32 %v4982, %v5062
      %v5064 = vrcp.pop %v4802
      %v5065 = vmul.f32 %v4987, %v5064
      %v5066 = vrcp.pop %v4806
      %v5067 = vmul.f32 %v4990, %v5066
      %v5068 = vrcp.pop %v4810
      %v5069 = vmul.f32 %v4995, %v5068
      %v5070 = vrcp.pop %v4814
      %v5071 = vmul.f32 %v4998, %v5070
      %v5072 = vrcp.pop %v4818
      %v5073 = vmul.f32 %v5003, %v5072
      %v5074 = vrcp.pop %v4822
      %v5075 = vmul.f32 %v5006, %v5074
      %v5076 = vrcp.pop %v4826
      %v5077 = vmul.f32 %v5011, %v5076
      %v5078 = vrcp.pop %v4830
      %v5079 = vmul.f32 %v5014, %v5078
      %v5080 = vrcp.pop %v4834
      %v5081 = vmul.f32 %v5019, %v5080
      %v5082 = vrcp.pop %v4838
      %v5083 = vmul.f32 %v5022, %v5082
      %v5084 = vrcp.pop %v4842
      %v5085 = vmul.f32 %v5027, %v5084
      %v5086 = vrcp.pop %v4846
      %v5087 = vmul.f32 %v5030, %v5086
      %v5088 = vrcp.pop %v4850
      %v5089 = vmul.f32 %v5035, %v5088
      %v5090 = vrcp.pop %v4854
      %v5091 = vmul.f32 %v5038, %v5090
      %v5092 = vrcp.pop %v4859
      %v5093 = vmul.f32 %v5043, %v5092
      %v5094 = vpack.c.bf16 %v5051, %v5049
      %v5095 = vpack.c.bf16 %v5055, %v5053
      %v5096 = vpack.c.bf16 %v5059, %v5057
      %v5097 = vpack.c.bf16 %v5063, %v5061
      %v5098 = vpack.c.bf16 %v5067, %v5065
      %v5099 = vpack.c.bf16 %v5071, %v5069
      %v5100 = vpack.c.bf16 %v5075, %v5073
      %v5101 = vpack.c.bf16 %v5079, %v5077
      %v5102 = vpack.c.bf16 %v5083, %v5081
      %v5103 = vpack.c.bf16 %v5087, %v5085
      %v5104 = vpack.c.bf16 %v5091, %v5089
      %v5105 = vpack.c.bf16 %v5093, %v5093
      %s5106 = scalar_lea.vmem %s2, 48
      %v5107 = vld [vmem:[%s5106] sm:$0xf]
      %v5108 = vld [vmem:[%s5106 + $0x4] sm:$0xf]
      %v5109 = vld [vmem:[%s5106 + $0x8] sm:$0xf]
      %v5110 = vld [vmem:[%s5106 + $0xc] sm:$0xf]
      %v5115 = vunpack.c.l.b16 %v5107
      %v5116 = vunpack.c.l.b16 %v5108
      %v5117 = vunpack.c.l.b16 %v5109
      %v5118 = vunpack.c.l.b16 %v5110
      %v5119 = vpack.c.b16 %v5116, %v5115
      %v5120 = vpack.c.b16 %v5118, %v5117
      %v5124 = vsel %vm628, %v5094, 0
      %v5127 = vsel %vm628, %v5095, 0
      %v5130 = vsel %vm628, %v5096, 0
      %v5133 = vsel %vm628, %v5097, 0
      %v5136 = vsel %vm628, %v5098, 0
      %v5139 = vsel %vm628, %v5099, 0
      %v5142 = vsel %vm628, %v5100, 0
      %v5145 = vsel %vm628, %v5101, 0
      %v5148 = vsel %vm628, %v5102, 0
      %v5151 = vsel %vm628, %v5103, 0
      %v5154 = vsel %vm628, %v5104, 0
      %v5157 = vsel %vm628, %v5105, 0
      %5159 = vmatprep.subr.bf16.mxu0 0
      %5160 = vmatpush1.bf16.msra.mxu0 %v5119
      %5161 = vmatprep.subr.bf16.mxu0 0
      %5162 = vmatpush1.bf16.msra.mxu0 %v5120
      %5163 = vmatprep.subr.bf16.mxu0 0
      %5164 = vmatpush1.bf16.msra.mxu0 0
      %5165 = vmatprep.subr.bf16.mxu0 0
      %5166 = vmatpush1.bf16.msra.mxu0 0
      %5167 = vmatprep.subr.bf16.mxu0 0
      %5168 = vmatpush1.bf16.msra.mxu0 0
      %5169 = vmatprep.subr.bf16.mxu0 0
      %5170 = vmatpush1.bf16.msra.mxu0 0
      %5171 = vmatprep.subr.bf16.mxu0 0
      %5172 = vmatpush1.bf16.msra.mxu0 0
      %5173 = vmatprep.subr.bf16.mxu0 0
      %5174 = vmatpush1.bf16.msra.mxu0 0
      %5175 = vmatprep.subr.bf16.mxu0 0
      %5176 = vmatpush1.bf16.msra.mxu0 0
      %5177 = vmatprep.subr.bf16.mxu0 0
      %5178 = vmatpush1.bf16.msra.mxu0 0
      %5179 = vmatprep.subr.bf16.mxu0 0
      %5180 = vmatpush1.bf16.msra.mxu0 0
      %5181 = vmatprep.subr.bf16.mxu0 0
      %5182 = vmatpush1.bf16.msra.mxu0 0
      %5183 = vmatprep.subr.bf16.mxu0 0
      %5184 = vmatpush1.bf16.msra.mxu0 0
      %5185 = vmatprep.subr.bf16.mxu0 0
      %5186 = vmatpush1.bf16.msra.mxu0 0
      %5187 = vmatprep.subr.bf16.mxu0 0
      %5188 = vmatpush1.bf16.msra.mxu0 0
      %5189 = vmatprep.subr.bf16.mxu0 0
      %5190 = vmatpush1.bf16.msra.mxu0 0
      %5191 = vmatprep.mubr.bf16.mxu0 0
      %5192 = vmatmul.mubr.bf16.gmra.mrb[0].mxu0 %v5124
      %v5193 = vpop.f32.mrb[0].mxu0
      %v5194 = vadd.f32 0.0, %v5193
      %v5195 = vpop.f32.mrb[0].mxu0
      %v5196 = vpop.f32.mrb[0].mxu0
      %v5197 = vadd.f32 0.0, %v5196
      %v5198 = vpop.f32.mrb[0].mxu0
      %5199 = vmatprep.mubr.bf16.mxu0 0
      %5200 = vmatmul.mubr.bf16.gmra.mrb[0].mxu0 %v5127
      %v5201 = vpop.f32.mrb[0].mxu0
      %v5202 = vadd.f32 0.0, %v5201
      %v5203 = vpop.f32.mrb[0].mxu0
      %v5204 = vpop.f32.mrb[0].mxu0
      %v5205 = vadd.f32 0.0, %v5204
      %v5206 = vpop.f32.mrb[0].mxu0
      %5207 = vmatprep.mubr.bf16.mxu0 0
      %5208 = vmatmul.mubr.bf16.gmra.mrb[0].mxu0 %v5130
      %v5209 = vpop.f32.mrb[0].mxu0
      %v5210 = vadd.f32 0.0, %v5209
      %v5211 = vpop.f32.mrb[0].mxu0
      %v5212 = vpop.f32.mrb[0].mxu0
      %v5213 = vadd.f32 0.0, %v5212
      %v5214 = vpop.f32.mrb[0].mxu0
      %5215 = vmatprep.mubr.bf16.mxu0 0
      %5216 = vmatmul.mubr.bf16.gmra.mrb[0].mxu0 %v5133
      %v5217 = vpop.f32.mrb[0].mxu0
      %v5218 = vadd.f32 0.0, %v5217
      %v5219 = vpop.f32.mrb[0].mxu0
      %v5220 = vpop.f32.mrb[0].mxu0
      %v5221 = vadd.f32 0.0, %v5220
      %v5222 = vpop.f32.mrb[0].mxu0
      %5223 = vmatprep.mubr.bf16.mxu0 0
      %5224 = vmatmul.mubr.bf16.gmra.mrb[0].mxu0 %v5136
      %v5225 = vpop.f32.mrb[0].mxu0
      %v5226 = vadd.f32 0.0, %v5225
      %v5227 = vpop.f32.mrb[0].mxu0
      %v5228 = vpop.f32.mrb[0].mxu0
      %v5229 = vadd.f32 0.0, %v5228
      %v5230 = vpop.f32.mrb[0].mxu0
      %5231 = vmatprep.mubr.bf16.mxu0 0
      %5232 = vmatmul.mubr.bf16.gmra.mrb[0].mxu0 %v5139
      %v5233 = vpop.f32.mrb[0].mxu0
      %v5234 = vadd.f32 0.0, %v5233
      %v5235 = vpop.f32.mrb[0].mxu0
      %v5236 = vpop.f32.mrb[0].mxu0
      %v5237 = vadd.f32 0.0, %v5236
      %v5238 = vpop.f32.mrb[0].mxu0
      %5239 = vmatprep.mubr.bf16.mxu0 0
      %5240 = vmatmul.mubr.bf16.gmra.mrb[0].mxu0 %v5142
      %v5241 = vpop.f32.mrb[0].mxu0
      %v5242 = vadd.f32 0.0, %v5241
      %v5243 = vpop.f32.mrb[0].mxu0
      %v5244 = vpop.f32.mrb[0].mxu0
      %v5245 = vadd.f32 0.0, %v5244
      %v5246 = vpop.f32.mrb[0].mxu0
      %5247 = vmatprep.mubr.bf16.mxu0 0
      %5248 = vmatmul.mubr.bf16.gmra.mrb[0].mxu0 %v5145
      %v5249 = vpop.f32.mrb[0].mxu0
      %v5250 = vadd.f32 0.0, %v5249
      %v5251 = vpop.f32.mrb[0].mxu0
      %v5252 = vpop.f32.mrb[0].mxu0
      %v5253 = vadd.f32 0.0, %v5252
      %v5254 = vpop.f32.mrb[0].mxu0
      %5255 = vmatprep.mubr.bf16.mxu0 0
      %5256 = vmatmul.mubr.bf16.gmra.mrb[0].mxu0 %v5148
      %v5257 = vpop.f32.mrb[0].mxu0
      %v5258 = vadd.f32 0.0, %v5257
      %v5259 = vpop.f32.mrb[0].mxu0
      %v5260 = vpop.f32.mrb[0].mxu0
      %v5261 = vadd.f32 0.0, %v5260
      %v5262 = vpop.f32.mrb[0].mxu0
      %5263 = vmatprep.mubr.bf16.mxu0 0
      %5264 = vmatmul.mubr.bf16.gmra.mrb[0].mxu0 %v5151
      %v5265 = vpop.f32.mrb[0].mxu0
      %v5266 = vadd.f32 0.0, %v5265
      %v5267 = vpop.f32.mrb[0].mxu0
      %v5268 = vpop.f32.mrb[0].mxu0
      %v5269 = vadd.f32 0.0, %v5268
      %v5270 = vpop.f32.mrb[0].mxu0
      %5271 = vmatprep.mubr.bf16.mxu0 0
      %5272 = vmatmul.mubr.bf16.gmra.mrb[0].mxu0 %v5154
      %v5273 = vpop.f32.mrb[0].mxu0
      %v5274 = vadd.f32 0.0, %v5273
      %v5275 = vpop.f32.mrb[0].mxu0
      %v5276 = vpop.f32.mrb[0].mxu0
      %v5277 = vadd.f32 0.0, %v5276
      %v5278 = vpop.f32.mrb[0].mxu0
      %5279 = vmatprep.mubr.bf16.mxu0 0
      %5280 = vmatmul.mubr.bf16.gmra.mrb[0].mxu0 %v5157
      %v5281 = vpop.f32.mrb[0].mxu0
      %v5282 = vadd.f32 0.0, %v5281
      %v5283 = vpop.f32.mrb[0].mxu0
      %v5284 = vpop.f32.mrb[0].mxu0
      %v5285 = vpop.f32.mrb[0].mxu0
      %5286 = vdwg.mxu0
      %v5287 = vadd.f32 %v4123, %v5194
      %v5288 = vadd.f32 %v4124, %v5197
      %v5289 = vadd.f32 %v4125, %v5202
      %v5290 = vadd.f32 %v4126, %v5205
      %v5291 = vadd.f32 %v4127, %v5210
      %v5292 = vadd.f32 %v4128, %v5213
      %v5293 = vadd.f32 %v4129, %v5218
      %v5294 = vadd.f32 %v4130, %v5221
      %v5295 = vadd.f32 %v4131, %v5226
      %v5296 = vadd.f32 %v4132, %v5229
      %v5297 = vadd.f32 %v4133, %v5234
      %v5298 = vadd.f32 %v4134, %v5237
      %v5299 = vadd.f32 %v4135, %v5242
      %v5300 = vadd.f32 %v4136, %v5245
      %v5301 = vadd.f32 %v4137, %v5250
      %v5302 = vadd.f32 %v4138, %v5253
      %v5303 = vadd.f32 %v4139, %v5258
      %v5304 = vadd.f32 %v4140, %v5261
      %v5305 = vadd.f32 %v4141, %v5266
      %v5306 = vadd.f32 %v4142, %v5269
      %v5307 = vadd.f32 %v4143, %v5274
      %v5308 = vadd.f32 %v4144, %v5277
      %v5309 = vadd.f32 %v4145, %v5282
      %v5310 = vsel %vm628, %v5287, 0.0
      %5311 = vadd.xlane.f32.xlu0 %v5310
      %v5312 = vpop.xlane.xlu0 %5311
      %v5313 = vsel %vm628, %v5288, 0.0
      %5314 = vadd.xlane.f32.xlu0 %v5313
      %v5315 = vpop.xlane.xlu0 %5314
      %v5316 = vsel %vm628, %v5289, 0.0
      %5317 = vadd.xlane.f32.xlu0 %v5316
      %v5318 = vpop.xlane.xlu0 %5317
      %v5319 = vsel %vm628, %v5290, 0.0
      %5320 = vadd.xlane.f32.xlu0 %v5319
      %v5321 = vpop.xlane.xlu0 %5320
      %v5322 = vsel %vm628, %v5291, 0.0
      %5323 = vadd.xlane.f32.xlu0 %v5322
      %v5324 = vpop.xlane.xlu0 %5323
      %v5325 = vsel %vm628, %v5292, 0.0
      %5326 = vadd.xlane.f32.xlu0 %v5325
      %v5327 = vpop.xlane.xlu0 %5326
      %v5328 = vsel %vm628, %v5293, 0.0
      %5329 = vadd.xlane.f32.xlu0 %v5328
      %v5330 = vpop.xlane.xlu0 %5329
      %v5331 = vsel %vm628, %v5294, 0.0
      %5332 = vadd.xlane.f32.xlu0 %v5331
      %v5333 = vpop.xlane.xlu0 %5332
      %v5334 = vsel %vm628, %v5295, 0.0
      %5335 = vadd.xlane.f32.xlu0 %v5334
      %v5336 = vpop.xlane.xlu0 %5335
      %v5337 = vsel %vm628, %v5296, 0.0
      %5338 = vadd.xlane.f32.xlu0 %v5337
      %v5339 = vpop.xlane.xlu0 %5338
      %v5340 = vsel %vm628, %v5297, 0.0
      %5341 = vadd.xlane.f32.xlu0 %v5340
      %v5342 = vpop.xlane.xlu0 %5341
      %v5343 = vsel %vm628, %v5298, 0.0
      %5344 = vadd.xlane.f32.xlu0 %v5343
      %v5345 = vpop.xlane.xlu0 %5344
      %v5346 = vsel %vm628, %v5299, 0.0
      %5347 = vadd.xlane.f32.xlu0 %v5346
      %v5348 = vpop.xlane.xlu0 %5347
      %v5349 = vsel %vm628, %v5300, 0.0
      %5350 = vadd.xlane.f32.xlu0 %v5349
      %v5351 = vpop.xlane.xlu0 %5350
      %v5352 = vsel %vm628, %v5301, 0.0
      %5353 = vadd.xlane.f32.xlu0 %v5352
      %v5354 = vpop.xlane.xlu0 %5353
      %v5355 = vsel %vm628, %v5302, 0.0
      %5356 = vadd.xlane.f32.xlu0 %v5355
      %v5357 = vpop.xlane.xlu0 %5356
      %v5358 = vsel %vm628, %v5303, 0.0
      %5359 = vadd.xlane.f32.xlu0 %v5358
      %v5360 = vpop.xlane.xlu0 %5359
      %v5361 = vsel %vm628, %v5304, 0.0
      %5362 = vadd.xlane.f32.xlu0 %v5361
      %v5363 = vpop.xlane.xlu0 %5362
      %v5364 = vsel %vm628, %v5305, 0.0
      %5365 = vadd.xlane.f32.xlu0 %v5364
      %v5366 = vpop.xlane.xlu0 %5365
      %v5367 = vsel %vm628, %v5306, 0.0
      %5368 = vadd.xlane.f32.xlu0 %v5367
      %v5369 = vpop.xlane.xlu0 %5368
      %v5370 = vsel %vm628, %v5307, 0.0
      %5371 = vadd.xlane.f32.xlu0 %v5370
      %v5372 = vpop.xlane.xlu0 %5371
      %v5373 = vsel %vm628, %v5308, 0.0
      %5374 = vadd.xlane.f32.xlu0 %v5373
      %v5375 = vpop.xlane.xlu0 %5374
      %vm5376 = vcmask 256000
      %v5377 = vsel %vm5376, %v5309, 0.0
      %5378 = vadd.xlane.f32.xlu0 %v5377
      %v5379 = vpop.xlane.xlu0 %5378
      %v5380 = vrcp.pop 32.0
      %v5381 = vmul.f32 %v5312, %v5380
      %v5382 = vmul.f32 %v5315, %v5380
      %v5383 = vmul.f32 %v5318, %v5380
      %v5384 = vmul.f32 %v5321, %v5380
      %v5385 = vmul.f32 %v5324, %v5380
      %v5386 = vmul.f32 %v5327, %v5380
      %v5387 = vmul.f32 %v5330, %v5380
      %v5388 = vmul.f32 %v5333, %v5380
      %v5389 = vmul.f32 %v5336, %v5380
      %v5390 = vmul.f32 %v5339, %v5380
      %v5391 = vmul.f32 %v5342, %v5380
      %v5392 = vmul.f32 %v5345, %v5380
      %v5393 = vmul.f32 %v5348, %v5380
      %v5394 = vmul.f32 %v5351, %v5380
      %v5395 = vmul.f32 %v5354, %v5380
      %v5396 = vmul.f32 %v5357, %v5380
      %v5397 = vmul.f32 %v5360, %v5380
      %v5398 = vmul.f32 %v5363, %v5380
      %v5399 = vmul.f32 %v5366, %v5380
      %v5400 = vmul.f32 %v5369, %v5380
      %v5401 = vmul.f32 %v5372, %v5380
      %v5402 = vmul.f32 %v5375, %v5380
      %v5403 = vmul.f32 %v5379, %v5380
      %v5404 = vsub.f32 %v5287, %v5381
      %v5405 = vsub.f32 %v5288, %v5382
      %v5406 = vsub.f32 %v5289, %v5383
      %v5407 = vsub.f32 %v5290, %v5384
      %v5408 = vsub.f32 %v5291, %v5385
      %v5409 = vsub.f32 %v5292, %v5386
      %v5410 = vsub.f32 %v5293, %v5387
      %v5411 = vsub.f32 %v5294, %v5388
      %v5412 = vsub.f32 %v5295, %v5389
      %v5413 = vsub.f32 %v5296, %v5390
      %v5414 = vsub.f32 %v5297, %v5391
      %v5415 = vsub.f32 %v5298, %v5392
      %v5416 = vsub.f32 %v5299, %v5393
      %v5417 = vsub.f32 %v5300, %v5394
      %v5418 = vsub.f32 %v5301, %v5395
      %v5419 = vsub.f32 %v5302, %v5396
      %v5420 = vsub.f32 %v5303, %v5397
      %v5421 = vsub.f32 %v5304, %v5398
      %v5422 = vsub.f32 %v5305, %v5399
      %v5423 = vsub.f32 %v5306, %v5400
      %v5424 = vsub.f32 %v5307, %v5401
      %v5425 = vsub.f32 %v5308, %v5402
      %v5426 = vsub.f32 %v5309, %v5403
      %v5427 = vmul.f32 %v5404, %v5404
      %v5428 = vmul.f32 %v5405, %v5405
      %v5429 = vmul.f32 %v5406, %v5406
      %v5430 = vmul.f32 %v5407, %v5407
      %v5431 = vmul.f32 %v5408, %v5408
      %v5432 = vmul.f32 %v5409, %v5409
      %v5433 = vmul.f32 %v5410, %v5410
      %v5434 = vmul.f32 %v5411, %v5411
      %v5435 = vmul.f32 %v5412, %v5412
      %v5436 = vmul.f32 %v5413, %v5413
      %v5437 = vmul.f32 %v5414, %v5414
      %v5438 = vmul.f32 %v5415, %v5415
      %v5439 = vmul.f32 %v5416, %v5416
      %v5440 = vmul.f32 %v5417, %v5417
      %v5441 = vmul.f32 %v5418, %v5418
      %v5442 = vmul.f32 %v5419, %v5419
      %v5443 = vmul.f32 %v5420, %v5420
      %v5444 = vmul.f32 %v5421, %v5421
      %v5445 = vmul.f32 %v5422, %v5422
      %v5446 = vmul.f32 %v5423, %v5423
      %v5447 = vmul.f32 %v5424, %v5424
      %v5448 = vmul.f32 %v5425, %v5425
      %v5449 = vmul.f32 %v5426, %v5426
      %v5450 = vsel %vm628, %v5427, 0.0
      %5451 = vadd.xlane.f32.xlu0 %v5450
      %v5452 = vpop.xlane.xlu0 %5451
      %v5453 = vsel %vm628, %v5428, 0.0
      %5454 = vadd.xlane.f32.xlu0 %v5453
      %v5455 = vpop.xlane.xlu0 %5454
      %v5456 = vsel %vm628, %v5429, 0.0
      %5457 = vadd.xlane.f32.xlu0 %v5456
      %v5458 = vpop.xlane.xlu0 %5457
      %v5459 = vsel %vm628, %v5430, 0.0
      %5460 = vadd.xlane.f32.xlu0 %v5459
      %v5461 = vpop.xlane.xlu0 %5460
      %v5462 = vsel %vm628, %v5431, 0.0
      %5463 = vadd.xlane.f32.xlu0 %v5462
      %v5464 = vpop.xlane.xlu0 %5463
      %v5465 = vsel %vm628, %v5432, 0.0
      %5466 = vadd.xlane.f32.xlu0 %v5465
      %v5467 = vpop.xlane.xlu0 %5466
      %v5468 = vsel %vm628, %v5433, 0.0
      %5469 = vadd.xlane.f32.xlu0 %v5468
      %v5470 = vpop.xlane.xlu0 %5469
      %v5471 = vsel %vm628, %v5434, 0.0
      %5472 = vadd.xlane.f32.xlu0 %v5471
      %v5473 = vpop.xlane.xlu0 %5472
      %v5474 = vsel %vm628, %v5435, 0.0
      %5475 = vadd.xlane.f32.xlu0 %v5474
      %v5476 = vpop.xlane.xlu0 %5475
      %v5477 = vsel %vm628, %v5436, 0.0
      %5478 = vadd.xlane.f32.xlu0 %v5477
      %v5479 = vpop.xlane.xlu0 %5478
      %v5480 = vsel %vm628, %v5437, 0.0
      %5481 = vadd.xlane.f32.xlu0 %v5480
      %v5482 = vpop.xlane.xlu0 %5481
      %v5483 = vsel %vm628, %v5438, 0.0
      %5484 = vadd.xlane.f32.xlu0 %v5483
      %v5485 = vpop.xlane.xlu0 %5484
      %v5486 = vsel %vm628, %v5439, 0.0
      %5487 = vadd.xlane.f32.xlu0 %v5486
      %v5488 = vpop.xlane.xlu0 %5487
      %v5489 = vsel %vm628, %v5440, 0.0
      %5490 = vadd.xlane.f32.xlu0 %v5489
      %v5491 = vpop.xlane.xlu0 %5490
      %v5492 = vsel %vm628, %v5441, 0.0
      %5493 = vadd.xlane.f32.xlu0 %v5492
      %v5494 = vpop.xlane.xlu0 %5493
      %v5495 = vsel %vm628, %v5442, 0.0
      %5496 = vadd.xlane.f32.xlu0 %v5495
      %v5497 = vpop.xlane.xlu0 %5496
      %v5498 = vsel %vm628, %v5443, 0.0
      %5499 = vadd.xlane.f32.xlu0 %v5498
      %v5500 = vpop.xlane.xlu0 %5499
      %v5501 = vsel %vm628, %v5444, 0.0
      %5502 = vadd.xlane.f32.xlu0 %v5501
      %v5503 = vpop.xlane.xlu0 %5502
      %v5504 = vsel %vm628, %v5445, 0.0
      %5505 = vadd.xlane.f32.xlu0 %v5504
      %v5506 = vpop.xlane.xlu0 %5505
      %v5507 = vsel %vm628, %v5446, 0.0
      %5508 = vadd.xlane.f32.xlu0 %v5507
      %v5509 = vpop.xlane.xlu0 %5508
      %v5510 = vsel %vm628, %v5447, 0.0
      %5511 = vadd.xlane.f32.xlu0 %v5510
      %v5512 = vpop.xlane.xlu0 %5511
      %v5513 = vsel %vm628, %v5448, 0.0
      %5514 = vadd.xlane.f32.xlu0 %v5513
      %v5515 = vpop.xlane.xlu0 %5514
      %v5516 = vsel %vm5376, %v5449, 0.0
      %5517 = vadd.xlane.f32.xlu0 %v5516
      %v5518 = vpop.xlane.xlu0 %5517
      %v5519 = vmul.f32 %v5452, %v5380
      %v5520 = vmul.f32 %v5455, %v5380
      %v5521 = vmul.f32 %v5458, %v5380
      %v5522 = vmul.f32 %v5461, %v5380
      %v5523 = vmul.f32 %v5464, %v5380
      %v5524 = vmul.f32 %v5467, %v5380
      %v5525 = vmul.f32 %v5470, %v5380
      %v5526 = vmul.f32 %v5473, %v5380
      %v5527 = vmul.f32 %v5476, %v5380
      %v5528 = vmul.f32 %v5479, %v5380
      %v5529 = vmul.f32 %v5482, %v5380
      %v5530 = vmul.f32 %v5485, %v5380
      %v5531 = vmul.f32 %v5488, %v5380
      %v5532 = vmul.f32 %v5491, %v5380
      %v5533 = vmul.f32 %v5494, %v5380
      %v5534 = vmul.f32 %v5497, %v5380
      %v5535 = vmul.f32 %v5500, %v5380
      %v5536 = vmul.f32 %v5503, %v5380
      %v5537 = vmul.f32 %v5506, %v5380
      %v5538 = vmul.f32 %v5509, %v5380
      %v5539 = vmul.f32 %v5512, %v5380
      %v5540 = vmul.f32 %v5515, %v5380
      %v5541 = vmul.f32 %v5518, %v5380
      %v5542 = vadd.f32 %v5519, 1e-05
      %v5543 = vadd.f32 %v5520, 1e-05
      %v5544 = vadd.f32 %v5521, 1e-05
      %v5545 = vadd.f32 %v5522, 1e-05
      %v5546 = vadd.f32 %v5523, 1e-05
      %v5547 = vadd.f32 %v5524, 1e-05
      %v5548 = vadd.f32 %v5525, 1e-05
      %v5549 = vadd.f32 %v5526, 1e-05
      %v5550 = vadd.f32 %v5527, 1e-05
      %v5551 = vadd.f32 %v5528, 1e-05
      %v5552 = vadd.f32 %v5529, 1e-05
      %v5553 = vadd.f32 %v5530, 1e-05
      %v5554 = vadd.f32 %v5531, 1e-05
      %v5555 = vadd.f32 %v5532, 1e-05
      %v5556 = vadd.f32 %v5533, 1e-05
      %v5557 = vadd.f32 %v5534, 1e-05
      %v5558 = vadd.f32 %v5535, 1e-05
      %v5559 = vadd.f32 %v5536, 1e-05
      %v5560 = vadd.f32 %v5537, 1e-05
      %v5561 = vadd.f32 %v5538, 1e-05
      %v5562 = vadd.f32 %v5539, 1e-05
      %v5563 = vadd.f32 %v5540, 1e-05
      %v5564 = vadd.f32 %v5541, 1e-05
      %v5565 = vrsqrt.pop %v5542
      %v5566 = vrsqrt.pop %v5543
      %v5567 = vrsqrt.pop %v5544
      %v5568 = vrsqrt.pop %v5545
      %v5569 = vrsqrt.pop %v5546
      %v5570 = vrsqrt.pop %v5547
      %v5571 = vrsqrt.pop %v5548
      %v5572 = vrsqrt.pop %v5549
      %v5573 = vrsqrt.pop %v5550
      %v5574 = vrsqrt.pop %v5551
      %v5575 = vrsqrt.pop %v5552
      %v5576 = vrsqrt.pop %v5553
      %v5577 = vrsqrt.pop %v5554
      %v5578 = vrsqrt.pop %v5555
      %v5579 = vrsqrt.pop %v5556
      %v5580 = vrsqrt.pop %v5557
      %v5581 = vrsqrt.pop %v5558
      %v5582 = vrsqrt.pop %v5559
      %v5583 = vrsqrt.pop %v5560
      %v5584 = vrsqrt.pop %v5561
      %v5585 = vrsqrt.pop %v5562
      %v5586 = vrsqrt.pop %v5563
      %v5587 = vrsqrt.pop %v5564
      %v5588 = vmul.f32 %v5404, %v5565
      %v5589 = vmul.f32 %v5405, %v5566
      %v5590 = vmul.f32 %v5406, %v5567
      %v5591 = vmul.f32 %v5407, %v5568
      %v5592 = vmul.f32 %v5408, %v5569
      %v5593 = vmul.f32 %v5409, %v5570
      %v5594 = vmul.f32 %v5410, %v5571
      %v5595 = vmul.f32 %v5411, %v5572
      %v5596 = vmul.f32 %v5412, %v5573
      %v5597 = vmul.f32 %v5413, %v5574
      %v5598 = vmul.f32 %v5414, %v5575
      %v5599 = vmul.f32 %v5415, %v5576
      %v5600 = vmul.f32 %v5416, %v5577
      %v5601 = vmul.f32 %v5417, %v5578
      %v5602 = vmul.f32 %v5418, %v5579
      %v5603 = vmul.f32 %v5419, %v5580
      %v5604 = vmul.f32 %v5420, %v5581
      %v5605 = vmul.f32 %v5421, %v5582
      %v5606 = vmul.f32 %v5422, %v5583
      %v5607 = vmul.f32 %v5423, %v5584
      %v5608 = vmul.f32 %v5424, %v5585
      %v5609 = vmul.f32 %v5425, %v5586
      %v5610 = vmul.f32 %v5426, %v5587
      %v5611 = vld [vmem:[%s3] sm:$0x1]
      %v5613 = vlaneseq
      %v5614 = vshrl.u32 %v5613, 7
      %v5615 = vsub.s32 0, %v5614
      %v5616 = vrot.slane %v5611, %v5615
      %v5618 = vmul.f32 %v5588, %v5616
      %v5619 = vmul.f32 %v5589, %v5616
      %v5620 = vmul.f32 %v5590, %v5616
      %v5621 = vmul.f32 %v5591, %v5616
      %v5622 = vmul.f32 %v5592, %v5616
      %v5623 = vmul.f32 %v5593, %v5616
      %v5624 = vmul.f32 %v5594, %v5616
      %v5625 = vmul.f32 %v5595, %v5616
      %v5626 = vmul.f32 %v5596, %v5616
      %v5627 = vmul.f32 %v5597, %v5616
      %v5628 = vmul.f32 %v5598, %v5616
      %v5629 = vmul.f32 %v5599, %v5616
      %v5630 = vmul.f32 %v5600, %v5616
      %v5631 = vmul.f32 %v5601, %v5616
      %v5632 = vmul.f32 %v5602, %v5616
      %v5633 = vmul.f32 %v5603, %v5616
      %v5634 = vmul.f32 %v5604, %v5616
      %v5635 = vmul.f32 %v5605, %v5616
      %v5636 = vmul.f32 %v5606, %v5616
      %v5637 = vmul.f32 %v5607, %v5616
      %v5638 = vmul.f32 %v5608, %v5616
      %v5639 = vmul.f32 %v5609, %v5616
      %v5640 = vmul.f32 %v5610, %v5616
      %v5641 = vld [vmem:[%s4] sm:$0x1]
      %v5643 = vlaneseq
      %v5644 = vshrl.u32 %v5643, 7
      %v5645 = vsub.s32 0, %v5644
      %v5646 = vrot.slane %v5641, %v5645
      %v5648 = vadd.f32 %v5618, %v5646
      %v5649 = vadd.f32 %v5619, %v5646
      %v5650 = vadd.f32 %v5620, %v5646
      %v5651 = vadd.f32 %v5621, %v5646
      %v5652 = vadd.f32 %v5622, %v5646
      %v5653 = vadd.f32 %v5623, %v5646
      %v5654 = vadd.f32 %v5624, %v5646
      %v5655 = vadd.f32 %v5625, %v5646
      %v5656 = vadd.f32 %v5626, %v5646
      %v5657 = vadd.f32 %v5627, %v5646
      %v5658 = vadd.f32 %v5628, %v5646
      %v5659 = vadd.f32 %v5629, %v5646
      %v5660 = vadd.f32 %v5630, %v5646
      %v5661 = vadd.f32 %v5631, %v5646
      %v5662 = vadd.f32 %v5632, %v5646
      %v5663 = vadd.f32 %v5633, %v5646
      %v5664 = vadd.f32 %v5634, %v5646
      %v5665 = vadd.f32 %v5635, %v5646
      %v5666 = vadd.f32 %v5636, %v5646
      %v5667 = vadd.f32 %v5637, %v5646
      %v5668 = vadd.f32 %v5638, %v5646
      %v5669 = vadd.f32 %v5639, %v5646
      %v5670 = vadd.f32 %v5640, %v5646
      %5671 = vst.msk [vmem:[%s224] sm:$0xff] %vm628, %v5648
      %5672 = vst.msk [vmem:[%s224 + $0x8] sm:$0xff] %vm628, %v5649
      %5673 = vst.msk [vmem:[%s224 + $0x10] sm:$0xff] %vm628, %v5650
      %5674 = vst.msk [vmem:[%s224 + $0x18] sm:$0xff] %vm628, %v5651
      %5675 = vst.msk [vmem:[%s224 + $0x20] sm:$0xff] %vm628, %v5652
      %5676 = vst.msk [vmem:[%s224 + $0x28] sm:$0xff] %vm628, %v5653
      %5677 = vst.msk [vmem:[%s224 + $0x30] sm:$0xff] %vm628, %v5654
      %5678 = vst.msk [vmem:[%s224 + $0x38] sm:$0xff] %vm628, %v5655
      %5679 = vst.msk [vmem:[%s224 + $0x40] sm:$0xff] %vm628, %v5656
      %5680 = vst.msk [vmem:[%s224 + $0x48] sm:$0xff] %vm628, %v5657
      %5681 = vst.msk [vmem:[%s224 + $0x50] sm:$0xff] %vm628, %v5658
      %5682 = vst.msk [vmem:[%s224 + $0x58] sm:$0xff] %vm628, %v5659
      %5683 = vst.msk [vmem:[%s224 + $0x60] sm:$0xff] %vm628, %v5660
      %5684 = vst.msk [vmem:[%s224 + $0x68] sm:$0xff] %vm628, %v5661
      %5685 = vst.msk [vmem:[%s224 + $0x70] sm:$0xff] %vm628, %v5662
      %5686 = vst.msk [vmem:[%s224 + $0x78] sm:$0xff] %vm628, %v5663
      %5687 = vst.msk [vmem:[%s224 + $0x80] sm:$0xff] %vm628, %v5664
      %5688 = vst.msk [vmem:[%s224 + $0x88] sm:$0xff] %vm628, %v5665
      %5689 = vst.msk [vmem:[%s224 + $0x90] sm:$0xff] %vm628, %v5666
      %5690 = vst.msk [vmem:[%s224 + $0x98] sm:$0xff] %vm628, %v5667
      %5691 = vst.msk [vmem:[%s224 + $0xa0] sm:$0xff] %vm628, %v5668
      %5692 = vst.msk [vmem:[%s224 + $0xa8] sm:$0xff] %vm628, %v5669
      %5693 = vst.msk [vmem:[%s224 + $0xb0] sm:$0x7] %vm5376, %v5670
      %p5694 = scmp.lt.s32.totalorder %s16, 1
      %s5695 = scalar_select %p5694, %s16, 1
      %s5696 = smul.addr %s5695, 23
      %s5697 = smul.addr %s5696, 8
      %s5698 = scalar_lea.vmem %s5, %s5697
      // Predicated region
      $region41: #{attention_pallas.1} parent=39 // pred_check
        %p5699 = pneg %p144
      $region42: #{attention_pallas.1} parent=39 // pred_check_branch
        %5701 = sbr.rel (%p5699) target = $region44
      $region43: #{attention_pallas.1} parent=39 // pred_region
        _
      $region44: #{attention_pallas.1} parent=39 // pred_fallthru
        _
    $region40: #{attention_pallas.1} parent=5 // pred_fallthru
      _
    %p5702 = scmp.le.s32.totalorder 2, %s11
    // Predicated region
    $region45: #{attention_pallas.1} parent=5 // pred_check
      %p5703 = pneg %p5702
    $region46: #{attention_pallas.1} parent=5 // pred_check_branch
      %5705 = sbr.rel (%p5703) target = $region48
    $region47: #{attention_pallas.1} parent=5 // pred_region
      %s5706 = ssub.s32 %s11, 2
      // Predicated region
      $region49: #{attention_pallas.1} parent=47 // pred_check
        %p5707 = pneg %p150
      $region50: #{attention_pallas.1} parent=47 // pred_check_branch
        %5709 = sbr.rel (%p5707) target = $region52
      $region51: #{attention_pallas.1} parent=47 // pred_region
        %p5710 = scmp.lt.s32.totalorder %s17, 1
        %s5711 = scalar_select %p5710, %s17, 1
        %s5712 = smul.addr %s5711, 23
        %s5713 = smul.addr %s5712, 8
        %s5714 = scalar_lea.vmem %s5, %s5713
      $region52: #{attention_pallas.1} parent=47 // pred_fallthru
        _
    $region48: #{attention_pallas.1} parent=5 // pred_fallthru
      _
  $region6: #{attention_pallas.1} parent=0 // loop_footer
    %s15 = sadd.s32 1, %s11
  $region7: #{attention_pallas.1} parent=0 // loop_footer_branch
    %10 = sbr.rel target = $region3
  $region8: #{attention_pallas.1} parent=0 // loop_exit
    _

</llo_original>
